<compile_context>
chip_gen: v5e
topology: v5e:2x2
jax: 0.10.0
libtpu: 0.0.40
codegen_flags: <defaults>
</compile_context>

<pallas_src>
import functools

import jax
import jax.numpy as jnp
from jax.experimental import pallas as pl
from jax.experimental.pallas import tpu as pltpu


def _reorg_kernel(x_ref, o_ref, *, stride):
    """One (batch, channel-tile, H-tile) grid step.

    x_ref block: (1, CT, TH, s*W)    lane index m = hi*W + w  (the free wrapper
                                     reshape merged the hi phase into lanes).
    o_ref block: (s*s, CT, TH, Wo)   phase-major output slabs.
    """
    s = stride
    _, CT, TH, sW = x_ref.shape
    W = sW // s
    Wo = W // s

    # Static (unrolled) loop over the s*s phases (hi, wi).
    for hi in range(s):
        # Contiguous lane window: all input rows with h % s == hi of this tile.
        xh = x_ref[0, :, :, pl.ds(hi * W, W)]          # (CT, TH, W)
        # Irreducible even/odd W lane deinterleave: split W -> (Wo, s) and move
        # the wi phase to the front (XLU work, overlaps the DMAs in this
        # purely memory-bound kernel).
        xr = xh.reshape(CT, TH, Wo, s)
        xt = jnp.transpose(xr, (3, 0, 1, 2))           # (s, CT, TH, Wo)
        for wi in range(s):
            # Dense slab store: one full (CT, TH, Wo) block per phase.
            o_ref[hi * s + wi, :, :, :] = xt[wi]


def _round_up(x, m):
    return ((x + m - 1) // m) * m


def _vmem_capacity_bytes():
    """Physical VMEM of the current chip (per TensorCore); conservative
    fallback is v7x's 64 MiB (smallest of the supported generations)."""
    try:
        cap = int(pltpu.get_tpu_info().vmem_capacity_bytes)
    except Exception:
        cap = 0
    if cap < 16 * 1024 * 1024:       # missing / nonsensical answer
        cap = 64 * 1024 * 1024
    return cap


def _choose_tiles(B, C, Ho, Wo, s, W, itemsize, budget_bytes):
    """Pick (C_TILE, TH) so the *padded*, double-buffered VMEM footprint fits.

    Padding is what actually occupies VMEM: the second-minor block dim rounds
    up to 8*pack sublanes (pack = elements per 32-bit lane slot) and the minor
    dim rounds up to 128 lanes.  TH must be a multiple of 8*pack or equal Ho
    (dtype-aware block rule); C_TILE only has to divide C because it is not
    one of the two minor block dims.
    """
    pack = max(1, 4 // itemsize)      # f32 -> 1, bf16 -> 2, int8/fp8 -> 4
    sub = 8 * pack
    lane = 128

    def in_bytes(ct, th):             # (1, ct, th, s*W) block, padded
        return ct * _round_up(th, sub) * _round_up(s * W, lane) * itemsize

    def out_bytes(ct, th):            # (s*s, ct, th, Wo) block, padded
        return s * s * ct * _round_up(th, sub) * _round_up(Wo, lane) * itemsize

    def footprint(ct, th):
        # 2x double-buffered input + 2x double-buffered output
        # + ~2 input-blocks + 1 output-block of in-kernel temporaries / spill.
        return 4 * in_bytes(ct, th) + 3 * out_bytes(ct, th)

    th_cands = [d for d in range(1, Ho + 1)
                if Ho % d == 0 and (d % sub == 0 or d == Ho)]
    ct_cands = [d for d in range(1, C + 1) if C % d == 0]
    cfgs = [(ct, th) for ct in ct_cands for th in th_cands]

    feasible = [c for c in cfgs if footprint(*c) <= budget_bytes]
    pool = feasible if feasible else [min(cfgs, key=lambda c: footprint(*c))]

    def steps(c):
        return B * (C // c[0]) * (Ho // c[1])

    def blk(c):
        return in_bytes(*c) + out_bytes(*c)

    # Prefer >= 4 grid steps (software pipelining + v7x megacore sharding) as
    # long as one step still moves a reasonable amount of data; otherwise take
    # the largest block that fits (per-step overhead amortization).
    piped = [c for c in pool if steps(c) >= 4 and blk(c) >= 256 * 1024]
    pool = piped if piped else pool
    ct, th = max(pool, key=lambda c: (blk(c), c[1], c[0]))
    return ct, th, footprint(ct, th)


def reorg(x, stride=2):
    assert x.ndim == 4, "ReOrgLayer expects a 4-D NCHW tensor"
    B, C, H, W = x.shape
    s = stride
    assert H % s == 0, f"stride {s} does not divide H={H}"
    assert W % s == 0, f"stride {s} does not divide W={W}"
    Ho, Wo = H // s, W // s
    itemsize = jnp.dtype(x.dtype).itemsize

    # VMEM sizing from the real chip: ~3/4 of physical VMEM (v7x: 48 of
    # 64 MiB, v5e/v6e: 96 of 128 MiB), so the 16/32 MiB scoped defaults never
    # bind.  Tiles are chosen against 85% of that.
    cap = _vmem_capacity_bytes()
    vmem_limit = min(cap * 3 // 4, 96 * 1024 * 1024)
    budget = vmem_limit * 17 // 20

    CT, TH, fp = _choose_tiles(B, C, Ho, Wo, s, W, itemsize, budget)
    if fp > budget:
        # No legal tiling fits the preferred budget: raise the limit if the
        # chip can actually hold it, otherwise fail loudly (no silent OOM).
        vmem_limit = fp + (4 << 20)
        if vmem_limit > cap:
            raise ValueError(
                f"reorg: smallest legal block needs ~{fp >> 20} MiB of VMEM, "
                f"more than this chip's {cap >> 20} MiB capacity")

    n_ct = C // CT
    n_ht = Ho // TH

    # Free row-major metadata reshape: the s input rows that feed one output
    # row become one contiguous lane span of length s*W:
    #   x2[b, c, io, hi*W + w] == x[b, c, io*s + hi, w]
    x2 = x.reshape(B, C, Ho, s * W)

    total_bytes = 2 * int(x.size) * itemsize   # pure copy: read once, write once

    # Output presented as (B*s*s, C, Ho, Wo): phase-major channel split, so a
    # channel tile is one contiguous block, and the final (B, s*s*C, Ho, Wo)
    # view below is again a free reshape (out-channel = phase*C + c).
    out = pl.pallas_call(
        functools.partial(_reorg_kernel, stride=s),
        out_shape=jax.ShapeDtypeStruct((B * s * s, C, Ho, Wo), x.dtype),
        grid=(B, n_ct, n_ht),
        in_specs=[
            pl.BlockSpec((1, CT, TH, s * W), lambda b, ci, t: (b, ci, t, 0)),
        ],
        out_specs=pl.BlockSpec((s * s, CT, TH, Wo),
                               lambda b, ci, t: (b, ci, t, 0)),
        compiler_params=pltpu.CompilerParams(
            dimension_semantics=("parallel", "parallel", "parallel"),
            vmem_limit_bytes=int(vmem_limit),
        ),
        cost_estimate=pl.CostEstimate(
            flops=0, transcendentals=0, bytes_accessed=total_bytes),
    )(x2)
    return out.reshape(B, C * s * s, Ho, Wo)


def reorg_reference(x, stride=2):
    # Pure-JAX reference replicating the PyTorch forward exactly.
    B, C, H, W = x.shape
    s = stride
    y = x.reshape(B, C, H // s, s, W // s, s)
    y = jnp.transpose(y, (0, 3, 5, 1, 2, 4))
    return y.reshape(B, C * s * s, H // s, W // s)


if __name__ == "__main__":
    key = jax.random.PRNGKey(0)
    B, C, H, W = 2, 4, 16, 16
    x = jax.random.normal(key, (B, C, H, W), dtype=jnp.float32)

    y = reorg(x, stride=2)
    jax.block_until_ready(y)

    y_ref = reorg_reference(x, stride=2)
    assert y.shape == (B, C * 4, H // 2, W // 2)
    assert jnp.array_equal(y, y_ref), "Pallas reorg mismatch vs reference"

    print("KERNEL_OK")
</pallas_src>

<mosaic_0001>
module attributes {stable_mosaic.version = 11 : i64} {
  func.func @_reorg_kernel(%arg0: i32, %arg1: i32, %arg2: i32, %arg3: memref<1x4x8x32xf32, #tpu.memory_space<vmem>>, %arg4: memref<4x4x8x8xf32, #tpu.memory_space<vmem>>) attributes {dimension_semantics = [#tpu.dimension_semantics<parallel>, #tpu.dimension_semantics<parallel>, #tpu.dimension_semantics<parallel>], iteration_bounds = array<i64: 2, 1, 1>, scalar_prefetch = 0 : i64, scratch_operands = 0 : i64, tpu.core_type = #tpu.core_type<tc>, window_params = [{transform_indices = @transform_0, window_bounds = array<i64: 1, 4, 8, 32>}, {transform_indices = @transform_1, window_bounds = array<i64: 4, 4, 8, 8>}]} {
    %c0 = arith.constant 0 : index
    %c0_0 = arith.constant 0 : index
    %c0_1 = arith.constant 0 : index
    %c0_2 = arith.constant 0 : index
    %0 = vector.load %arg3[%c0, %c0_0, %c0_1, %c0_2] : memref<1x4x8x32xf32, #tpu.memory_space<vmem>>, vector<1x4x8x16xf32>
    %1 = vector.shape_cast %0 : vector<1x4x8x16xf32> to vector<4x8x16xf32>
    %2 = vector.shape_cast %1 : vector<4x8x16xf32> to vector<4x8x8x2xf32>
    %3 = tpu.transpose %2, [3, 0, 1, 2] : vector<4x8x8x2xf32> -> vector<2x4x8x8xf32>
    %4 = vector.extract_strided_slice %3 {offsets = [0, 0, 0, 0], sizes = [1, 4, 8, 8], strides = [1, 1, 1, 1]} : vector<2x4x8x8xf32> to vector<1x4x8x8xf32>
    %5 = vector.shape_cast %4 : vector<1x4x8x8xf32> to vector<4x8x8xf32>
    %c0_3 = arith.constant 0 : index
    %c0_4 = arith.constant 0 : index
    %c0_5 = arith.constant 0 : index
    %c0_6 = arith.constant 0 : index
    %6 = vector.load %arg4[%c0_3, %c0_4, %c0_5, %c0_6] : memref<4x4x8x8xf32, #tpu.memory_space<vmem>>, vector<1x4x8x8xf32>
    %7 = vector.shape_cast %6 : vector<1x4x8x8xf32> to vector<4x8x8xf32>
    %8 = vector.shape_cast %5 : vector<4x8x8xf32> to vector<1x4x8x8xf32>
    tpu.vector_store %arg4[%c0_3, %c0_4, %c0_5, %c0_6], %8 {strides = array<i32>} : memref<4x4x8x8xf32, #tpu.memory_space<vmem>>, vector<1x4x8x8xf32>,
    %9 = vector.extract_strided_slice %3 {offsets = [1, 0, 0, 0], sizes = [1, 4, 8, 8], strides = [1, 1, 1, 1]} : vector<2x4x8x8xf32> to vector<1x4x8x8xf32>
    %10 = vector.shape_cast %9 : vector<1x4x8x8xf32> to vector<4x8x8xf32>
    %c1 = arith.constant 1 : index
    %c0_7 = arith.constant 0 : index
    %c0_8 = arith.constant 0 : index
    %c0_9 = arith.constant 0 : index
    %11 = vector.load %arg4[%c1, %c0_7, %c0_8, %c0_9] : memref<4x4x8x8xf32, #tpu.memory_space<vmem>>, vector<1x4x8x8xf32>
    %12 = vector.shape_cast %11 : vector<1x4x8x8xf32> to vector<4x8x8xf32>
    %13 = vector.shape_cast %10 : vector<4x8x8xf32> to vector<1x4x8x8xf32>
    tpu.vector_store %arg4[%c1, %c0_7, %c0_8, %c0_9], %13 {strides = array<i32>} : memref<4x4x8x8xf32, #tpu.memory_space<vmem>>, vector<1x4x8x8xf32>,
    %c0_10 = arith.constant 0 : index
    %c0_11 = arith.constant 0 : index
    %c0_12 = arith.constant 0 : index
    %c16 = arith.constant 16 : index
    %14 = vector.load %arg3[%c0_10, %c0_11, %c0_12, %c16] : memref<1x4x8x32xf32, #tpu.memory_space<vmem>>, vector<1x4x8x16xf32>
    %15 = vector.shape_cast %14 : vector<1x4x8x16xf32> to vector<4x8x16xf32>
    %16 = vector.shape_cast %15 : vector<4x8x16xf32> to vector<4x8x8x2xf32>
    %17 = tpu.transpose %16, [3, 0, 1, 2] : vector<4x8x8x2xf32> -> vector<2x4x8x8xf32>
    %18 = vector.extract_strided_slice %17 {offsets = [0, 0, 0, 0], sizes = [1, 4, 8, 8], strides = [1, 1, 1, 1]} : vector<2x4x8x8xf32> to vector<1x4x8x8xf32>
    %19 = vector.shape_cast %18 : vector<1x4x8x8xf32> to vector<4x8x8xf32>
    %c2 = arith.constant 2 : index
    %c0_13 = arith.constant 0 : index
    %c0_14 = arith.constant 0 : index
    %c0_15 = arith.constant 0 : index
    %20 = vector.load %arg4[%c2, %c0_13, %c0_14, %c0_15] : memref<4x4x8x8xf32, #tpu.memory_space<vmem>>, vector<1x4x8x8xf32>
    %21 = vector.shape_cast %20 : vector<1x4x8x8xf32> to vector<4x8x8xf32>
    %22 = vector.shape_cast %19 : vector<4x8x8xf32> to vector<1x4x8x8xf32>
    tpu.vector_store %arg4[%c2, %c0_13, %c0_14, %c0_15], %22 {strides = array<i32>} : memref<4x4x8x8xf32, #tpu.memory_space<vmem>>, vector<1x4x8x8xf32>,
    %23 = vector.extract_strided_slice %17 {offsets = [1, 0, 0, 0], sizes = [1, 4, 8, 8], strides = [1, 1, 1, 1]} : vector<2x4x8x8xf32> to vector<1x4x8x8xf32>
    %24 = vector.shape_cast %23 : vector<1x4x8x8xf32> to vector<4x8x8xf32>
    %c3 = arith.constant 3 : index
    %c0_16 = arith.constant 0 : index
    %c0_17 = arith.constant 0 : index
    %c0_18 = arith.constant 0 : index
    %25 = vector.load %arg4[%c3, %c0_16, %c0_17, %c0_18] : memref<4x4x8x8xf32, #tpu.memory_space<vmem>>, vector<1x4x8x8xf32>
    %26 = vector.shape_cast %25 : vector<1x4x8x8xf32> to vector<4x8x8xf32>
    %27 = vector.shape_cast %24 : vector<4x8x8xf32> to vector<1x4x8x8xf32>
    tpu.vector_store %arg4[%c3, %c0_16, %c0_17, %c0_18], %27 {strides = array<i32>} : memref<4x4x8x8xf32, #tpu.memory_space<vmem>>, vector<1x4x8x8xf32>,
    return
  }
  func.func @transform_0(%arg0: i32, %arg1: i32, %arg2: i32) -> (i32, i32, i32, i32) {
    %c0_i32 = arith.constant 0 : i32
    %c0_i32_0 = arith.constant 0 : i32
    return %arg0, %arg1, %arg2, %c0_i32 : i32, i32, i32, i32
  }
  func.func @transform_1(%arg0: i32, %arg1: i32, %arg2: i32) -> (i32, i32, i32, i32) {
    %c0_i32 = arith.constant 0 : i32
    %c0_i32_0 = arith.constant 0 : i32
    return %arg0, %arg1, %arg2, %c0_i32 : i32, i32, i32, i32
  }
}

</mosaic_0001>

<llo_original>
// kernel: tpu_custom_call.1
$region0: #{tpu_custom_call.1}
  #allocation0 [shape = 'u32[]', space=smem, size = 0x4, offset = 0x4, fixed_abs, tag = 'smem constant byte address 0x4 - core index']
  #allocation1 [shape = 'u32[72,128]{1,0:T(1,128)}', space=vmem, size = 0x9000, scoped, tag = 'internal scratch']
  %s0 = inlined_call_operand.hbm [shape: f32[2,4,8,32], index: 0, kind: input, shape index: {}]
  %s1 = inlined_call_operand.hbm [shape: f32[8,4,8,8], index: 1, kind: output, shape index: {}]
  %s2 = sld [smem:[#allocation0]]
  $region41: #{tpu_custom_call.1} parent=0
    _
  %s4 = ssub.s32 1, %s2
  %s5 = scalar_select 0, %s4, %s2
  $region1: #{tpu_custom_call.1} parent=0
    #allocation2 [shape = 'u8[32768]{0}', space=vmem, size = 0x8000, scoped, tag = 'input window, operand 0']
    #allocation3 [shape = 's32[2]{0}', space=sflag, size = 0x8, scoped, tag = 'scoped memory for tpu_custom_call.1']
    #allocation4 [shape = 's32[2]{0}', space=sflag, size = 0x8, scoped, tag = 'scoped memory for tpu_custom_call.1']
    #allocation5 [shape = 'u8[131072]{0}', space=vmem, size = 0x20000, scoped, tag = 'output window, operand 0']
    %6 = vsyncpa [#allocation3], 0
    %s7 = scalar_lea.sflag [#allocation3], 1
    %8 = vsyncpa %s7, 0
    %9 = vsyncpa [#allocation4], 0
    %s10 = scalar_lea.sflag [#allocation4], 1
    %11 = vsyncpa %s10, 0
    loop: start=0, step=1, limit=4
    $region2: #{tpu_custom_call.1} parent=1 // loop_pre_header
      _
    $region3: #{tpu_custom_call.1} parent=1 // loop_header
      %s13 = sphi 0, %s17
      %p14 = scmp.ge.s32.totalorder %s13, 4
      %s20 = sphi 0, %s39
      %s21 = sphi 0, %s35
      %s22 = sphi 0, %s31
      %s23 = sphi 0, %s20
      %s24 = sphi 0, %s21
      %s25 = sphi 0, %s22
      %s26 = sphi 0, %s23
      %s27 = sphi 0, %s24
      %s28 = sphi 0, %s25
      %s46 = sphi 0, %s48
      %s49 = sphi 0, %s46
      %s50 = sphi 0, %s49
      %s66 = sphi 0, %s50
      %s76 = sphi 0, %s78
      %s79 = sphi 0, %s76
      %s80 = sphi 0, %s79
      %s96 = sphi 0, %s80
    $region4: #{tpu_custom_call.1} parent=1 // loop_header_branch
      %16 = sbr.rel (%p14) target = $region8
    $region5: #{tpu_custom_call.1} parent=1 // loop_body
      %s18 = ssub.s32 %s13, 1
      %s19 = ssub.s32 %s13, 2
      %s29 = sadd.s32 1, %s22
      %p30 = scmp.ge.s32.totalorder %s29, 1
      %s31 = scalar_select %p30, 0, %s29
      %s32 = sadd.s32 1, %s21
      %s33 = scalar_select %p30, %s32, %s21
      %p34 = scmp.ge.s32.totalorder %s33, 1
      %s35 = scalar_select %p34, 0, %s33
      %s36 = sadd.s32 1, %s20
      %s37 = scalar_select %p34, %s36, %s20
      %p38 = scmp.ge.s32.totalorder %s37, 2
      %s39 = scalar_select %p38, 0, %s37
      %s40 = ssub.s32 %s20, %s39
      %s41 = ssub.s32 %s21, %s35
      %s42 = sor.u32 %s40, %s41
      %s43 = ssub.s32 %s22, %s31
      %s44 = sor.u32 %s42, %s43
      %p45 = scmp.eq.s32.totalorder %s44, 0
      %s47 = sadd.s32 %s46, 1
      %s48 = scalar_select %p45, %s46, %s47
      %p51 = pneg %p45
      %p52 = scmp.eq.s32.totalorder %s13, 1
      %p53 = por %p51, %p52
      %p54 = scmp.ne.s32.totalorder %s46, %s49
      %p55 = scmp.eq.s32.totalorder %s13, 0
      %p56 = por %p54, %p55
      %p57 = scmp.ne.s32.totalorder %s46, %s49
      %p58 = scmp.eq.s32.totalorder %s18, 1
      %p59 = por %p57, %p58
      %p60 = scmp.ne.s32.totalorder %s49, %s50
      %p61 = scmp.eq.s32.totalorder %s18, 0
      %p62 = por %p60, %p61
      %p63 = scmp.ne.s32.totalorder %s49, %s50
      %p64 = scmp.eq.s32.totalorder %s19, 1
      %p65 = por %p63, %p64
      %p67 = scmp.ne.s32.totalorder %s50, %s66
      %p68 = scmp.eq.s32.totalorder %s19, 0
      %p69 = por %p67, %p68
      %s70 = ssub.s32 %s20, %s39
      %s71 = ssub.s32 %s21, %s35
      %s72 = sor.u32 %s70, %s71
      %s73 = ssub.s32 %s22, %s31
      %s74 = sor.u32 %s72, %s73
      %p75 = scmp.eq.s32.totalorder %s74, 0
      %s77 = sadd.s32 %s76, 1
      %s78 = scalar_select %p75, %s76, %s77
      %p81 = pneg %p75
      %p82 = scmp.eq.s32.totalorder %s13, 1
      %p83 = por %p81, %p82
      %p84 = scmp.ne.s32.totalorder %s76, %s79
      %p85 = scmp.eq.s32.totalorder %s13, 0
      %p86 = por %p84, %p85
      %p87 = scmp.ne.s32.totalorder %s76, %s79
      %p88 = scmp.eq.s32.totalorder %s18, 1
      %p89 = por %p87, %p88
      %p90 = scmp.ne.s32.totalorder %s79, %s80
      %p91 = scmp.eq.s32.totalorder %s18, 0
      %p92 = por %p90, %p91
      %p93 = scmp.ne.s32.totalorder %s79, %s80
      %p94 = scmp.eq.s32.totalorder %s19, 1
      %p95 = por %p93, %p94
      %p97 = scmp.ne.s32.totalorder %s80, %s96
      %p98 = scmp.eq.s32.totalorder %s19, 0
      %p99 = por %p97, %p98
      %p100 = scmp.le.s32.totalorder 1, %s13
      %p101 = scmp.lt.s32.totalorder %s13, 3
      %p102 = pnand %p100, %p101
      %p103 = pneg %p102
      // Predicated region
      $region9: #{tpu_custom_call.1} parent=5 // pred_check
        _
      $region10: #{tpu_custom_call.1} parent=5 // pred_check_branch
        %105 = sbr.rel (%p102) target = $region12
      $region11: #{tpu_custom_call.1} parent=5 // pred_region
        %s106 = ssub.s32 %s13, 1
      $region12: #{tpu_custom_call.1} parent=5 // pred_fallthru
        _
      %p107 = scmp.lt.s32.totalorder %s13, 2
      // Predicated region
      $region13: #{tpu_custom_call.1} parent=5 // pred_check
        %p108 = pneg %p107
      $region14: #{tpu_custom_call.1} parent=5 // pred_check_branch
        %110 = sbr.rel (%p108) target = $region16
      $region15: #{tpu_custom_call.1} parent=5 // pred_region
        // Predicated region
        $region17: #{tpu_custom_call.1} parent=15 // pred_check
          %p111 = pneg %p56
        $region18: #{tpu_custom_call.1} parent=15 // pred_check_branch
          %113 = sbr.rel (%p111) target = $region20
        $region19: #{tpu_custom_call.1} parent=15 // pred_region
          %s114 = sand.u32 %s46, 1
          %s115 = scalar_lea.sflag [#allocation3], %s114
          %s116 = sand.u32 %s46, 1
          %s117 = smul.addr %s116, 32
          %s118 = scalar_lea.vmem [#allocation2], %s117
          %s119 = smul.u32 4, %s21
          %121 = vsyncadd %s115, 0
          %s122 = sadd.s32 %s22, %s119
          %s123 = smul.addr %s20, 4
          %s124 = sadd.s32 %s122, %s123
          %s125 = smul.addr %s124, 8
          %s126 = scalar_lea.hbm %s0, %s125
          %s127 = sshll.u32 %s126, 4
          %s128 = int_to_ptr.hbm [resolvable:$true] %s127
          %s129 = sshll.u32 %s118, 4
          %s130 = int_to_ptr.vmem [resolvable:$true] %s129
          %135 = dma.hbm_to_vmem [thread:$0]  %s128, 512, %s130, %s115, 128, 128, 8
        $region20: #{tpu_custom_call.1} parent=15 // pred_fallthru
          _
      $region16: #{tpu_custom_call.1} parent=5 // pred_fallthru
        _
      %p136 = scmp.le.s32.totalorder 1, %s13
      %p137 = scmp.lt.s32.totalorder %s13, 3
      %p138 = pnand %p136, %p137
      %p139 = pneg %p138
      // Predicated region
      $region21: #{tpu_custom_call.1} parent=5 // pred_check
        _
      $region22: #{tpu_custom_call.1} parent=5 // pred_check_branch
        %141 = sbr.rel (%p138) target = $region24
      $region23: #{tpu_custom_call.1} parent=5 // pred_region
        %s142 = ssub.s32 %s13, 1
        %s143 = sand.u32 %s49, 1
        %s144 = scalar_lea.sflag [#allocation3], %s143
        %s145 = sand.u32 %s49, 1
        %s146 = smul.addr %s145, 32
        %s147 = scalar_lea.vmem [#allocation2], %s146
        // Predicated region
        $region25: #{tpu_custom_call.1} parent=23 // pred_check
          %p148 = pneg %p62
        $region26: #{tpu_custom_call.1} parent=23 // pred_check_branch
          %150 = sbr.rel (%p148) target = $region28
        $region27: #{tpu_custom_call.1} parent=23 // pred_region
          %152 = dma.done %s144, 512
        $region28: #{tpu_custom_call.1} parent=23 // pred_fallthru
          _
        %s153 = sand.u32 %s49, 1
        %s154 = scalar_lea.sflag [#allocation3], %s153
        %s155 = sand.u32 %s49, 1
        %s156 = smul.addr %s155, 32
        %s157 = scalar_lea.vmem [#allocation2], %s156
        %p158 = pneg %p62
        %p159 = pneg %p59
        %p160 = pneg %p92
        %p161 = pneg %p89
        %s162 = sand.u32 %s79, 1
        %s163 = scalar_lea.sflag [#allocation4], %s162
        %s164 = sand.u32 %s79, 1
        %s165 = smul.addr %s164, 128
        %s166 = scalar_lea.vmem [#allocation5], %s165
        %s167 = smul.u32 4, %s24
        %s168 = smul.u32 4, %s23
        %s169 = smul.u32 4, %s24
        %v170 = vld [vmem:[%s147] sm:$0xff]
        %v171 = vld [vmem:[%s147 + $0x8] sm:$0xff]
        %v172 = vld [vmem:[%s147 + $0x10] sm:$0xff]
        %v173 = vld [vmem:[%s147 + $0x18] sm:$0xff]
        %178 = vrot.lane.b32.xlu0 %v170, 126
        %v179 = vpop.permute.xlu0 %178
        %180 = vrot.lane.b32.xlu0 %v171, 126
        %v181 = vpop.permute.xlu0 %180
        %182 = vrot.lane.b32.xlu0 %v172, 126
        %v183 = vpop.permute.xlu0 %182
        %184 = vrot.lane.b32.xlu0 %v173, 126
        %v185 = vpop.permute.xlu0 %184
        %190 = vrot.lane.b32.xlu0 %v170, 124
        %v191 = vpop.permute.xlu0 %190
        %192 = vrot.lane.b32.xlu0 %v171, 124
        %v193 = vpop.permute.xlu0 %192
        %194 = vrot.lane.b32.xlu0 %v172, 124
        %v195 = vpop.permute.xlu0 %194
        %196 = vrot.lane.b32.xlu0 %v173, 124
        %v197 = vpop.permute.xlu0 %196
        %202 = vrot.lane.b32.xlu0 %v170, 122
        %v203 = vpop.permute.xlu0 %202
        %204 = vrot.lane.b32.xlu0 %v171, 122
        %v205 = vpop.permute.xlu0 %204
        %206 = vrot.lane.b32.xlu0 %v172, 122
        %v207 = vpop.permute.xlu0 %206
        %208 = vrot.lane.b32.xlu0 %v173, 122
        %v209 = vpop.permute.xlu0 %208
        %214 = vrot.lane.b32.xlu0 %v170, 120
        %v215 = vpop.permute.xlu0 %214
        %216 = vrot.lane.b32.xlu0 %v171, 120
        %v217 = vpop.permute.xlu0 %216
        %218 = vrot.lane.b32.xlu0 %v172, 120
        %v219 = vpop.permute.xlu0 %218
        %220 = vrot.lane.b32.xlu0 %v173, 120
        %v221 = vpop.permute.xlu0 %220
        %226 = vrot.lane.b32.xlu0 %v170, 118
        %v227 = vpop.permute.xlu0 %226
        %228 = vrot.lane.b32.xlu0 %v171, 118
        %v229 = vpop.permute.xlu0 %228
        %230 = vrot.lane.b32.xlu0 %v172, 118
        %v231 = vpop.permute.xlu0 %230
        %232 = vrot.lane.b32.xlu0 %v173, 118
        %v233 = vpop.permute.xlu0 %232
        %238 = vrot.lane.b32.xlu0 %v170, 116
        %v239 = vpop.permute.xlu0 %238
        %240 = vrot.lane.b32.xlu0 %v171, 116
        %v241 = vpop.permute.xlu0 %240
        %242 = vrot.lane.b32.xlu0 %v172, 116
        %v243 = vpop.permute.xlu0 %242
        %244 = vrot.lane.b32.xlu0 %v173, 116
        %v245 = vpop.permute.xlu0 %244
        %250 = vrot.lane.b32.xlu0 %v170, 114
        %v251 = vpop.permute.xlu0 %250
        %252 = vrot.lane.b32.xlu0 %v171, 114
        %v253 = vpop.permute.xlu0 %252
        %254 = vrot.lane.b32.xlu0 %v172, 114
        %v255 = vpop.permute.xlu0 %254
        %256 = vrot.lane.b32.xlu0 %v173, 114
        %v257 = vpop.permute.xlu0 %256
        %v262 = vrot.slane %v191, 4
        %vm263 = vcmask 1047556
        %v264 = vsel %vm263, %v262, %v170
        %v265 = vrot.slane %v170, 4
        %v266 = vsel %vm263, %v191, %v265
        %v268 = vunpack.c.l.s4 1983009808
        %v269 = vunpack.c.0.s8 %v268
        %v270 = vperm.slane %v264, %v269
        %v272 = vunpack.c.l.s4 1983009808
        %v273 = vunpack.c.0.s8 %v272
        %v274 = vperm.slane %v266, %v273
        %v275 = vrot.slane %v203, 4
        %v276 = vsel %vm263, %v275, %v179
        %v277 = vrot.slane %v179, 4
        %v278 = vsel %vm263, %v203, %v277
        %v280 = vunpack.c.l.s4 1983009808
        %v281 = vunpack.c.0.s8 %v280
        %v282 = vperm.slane %v276, %v281
        %v284 = vunpack.c.l.s4 1983009808
        %v285 = vunpack.c.0.s8 %v284
        %v286 = vperm.slane %v278, %v285
        %v287 = vrot.slane %v239, 4
        %v288 = vsel %vm263, %v287, %v215
        %v289 = vrot.slane %v215, 4
        %v290 = vsel %vm263, %v239, %v289
        %v292 = vunpack.c.l.s4 1983009808
        %v293 = vunpack.c.0.s8 %v292
        %v294 = vperm.slane %v288, %v293
        %v296 = vunpack.c.l.s4 1983009808
        %v297 = vunpack.c.0.s8 %v296
        %v298 = vperm.slane %v290, %v297
        %v299 = vrot.slane %v251, 4
        %v300 = vsel %vm263, %v299, %v227
        %v301 = vrot.slane %v227, 4
        %v302 = vsel %vm263, %v251, %v301
        %v304 = vunpack.c.l.s4 1983009808
        %v305 = vunpack.c.0.s8 %v304
        %v306 = vperm.slane %v300, %v305
        %v308 = vunpack.c.l.s4 1983009808
        %v309 = vunpack.c.0.s8 %v308
        %v310 = vperm.slane %v302, %v309
        %v311 = vrot.slane %v282, 4
        %v312 = vsel %vm263, %v311, %v270
        %v313 = vrot.slane %v270, 4
        %v314 = vsel %vm263, %v282, %v313
        %v316 = vunpack.c.l.s4 1934713408
        %v317 = vunpack.c.0.s8 %v316
        %v318 = vperm.slane %v312, %v317
        %v320 = vunpack.c.l.s4 1934713408
        %v321 = vunpack.c.0.s8 %v320
        %v322 = vperm.slane %v314, %v321
        %v323 = vrot.slane %v286, 4
        %v324 = vsel %vm263, %v323, %v274
        %v325 = vrot.slane %v274, 4
        %v326 = vsel %vm263, %v286, %v325
        %v328 = vunpack.c.l.s4 1934713408
        %v329 = vunpack.c.0.s8 %v328
        %v330 = vperm.slane %v324, %v329
        %v332 = vunpack.c.l.s4 1934713408
        %v333 = vunpack.c.0.s8 %v332
        %v334 = vperm.slane %v326, %v333
        %v335 = vrot.slane %v306, 4
        %v336 = vsel %vm263, %v335, %v294
        %v337 = vrot.slane %v294, 4
        %v338 = vsel %vm263, %v306, %v337
        %v340 = vunpack.c.l.s4 1934713408
        %v341 = vunpack.c.0.s8 %v340
        %v342 = vperm.slane %v336, %v341
        %v344 = vunpack.c.l.s4 1934713408
        %v345 = vunpack.c.0.s8 %v344
        %v346 = vperm.slane %v338, %v345
        %v347 = vrot.slane %v310, 4
        %v348 = vsel %vm263, %v347, %v298
        %v349 = vrot.slane %v298, 4
        %v350 = vsel %vm263, %v310, %v349
        %v352 = vunpack.c.l.s4 1934713408
        %v353 = vunpack.c.0.s8 %v352
        %v354 = vperm.slane %v348, %v353
        %v356 = vunpack.c.l.s4 1934713408
        %v357 = vunpack.c.0.s8 %v356
        %v358 = vperm.slane %v350, %v357
        %v359 = vrot.slane %v342, 4
        %v360 = vsel %vm263, %v359, %v318
        %v361 = vrot.slane %v318, 4
        %v362 = vsel %vm263, %v342, %v361
        %v363 = vrot.slane %v346, 4
        %v364 = vsel %vm263, %v363, %v322
        %v365 = vrot.slane %v322, 4
        %v366 = vsel %vm263, %v346, %v365
        %v367 = vrot.slane %v354, 4
        %v368 = vsel %vm263, %v367, %v330
        %v369 = vrot.slane %v330, 4
        %v370 = vsel %vm263, %v354, %v369
        %v371 = vrot.slane %v358, 4
        %v372 = vsel %vm263, %v371, %v334
        %v373 = vrot.slane %v334, 4
        %v374 = vsel %vm263, %v358, %v373
        %v375 = vrot.slane %v193, 4
        %v376 = vsel %vm263, %v375, %v171
        %v377 = vrot.slane %v171, 4
        %v378 = vsel %vm263, %v193, %v377
        %v380 = vunpack.c.l.s4 1983009808
        %v381 = vunpack.c.0.s8 %v380
        %v382 = vperm.slane %v376, %v381
        %v384 = vunpack.c.l.s4 1983009808
        %v385 = vunpack.c.0.s8 %v384
        %v386 = vperm.slane %v378, %v385
        %v387 = vrot.slane %v205, 4
        %v388 = vsel %vm263, %v387, %v181
        %v389 = vrot.slane %v181, 4
        %v390 = vsel %vm263, %v205, %v389
        %v392 = vunpack.c.l.s4 1983009808
        %v393 = vunpack.c.0.s8 %v392
        %v394 = vperm.slane %v388, %v393
        %v396 = vunpack.c.l.s4 1983009808
        %v397 = vunpack.c.0.s8 %v396
        %v398 = vperm.slane %v390, %v397
        %v399 = vrot.slane %v241, 4
        %v400 = vsel %vm263, %v399, %v217
        %v401 = vrot.slane %v217, 4
        %v402 = vsel %vm263, %v241, %v401
        %v404 = vunpack.c.l.s4 1983009808
        %v405 = vunpack.c.0.s8 %v404
        %v406 = vperm.slane %v400, %v405
        %v408 = vunpack.c.l.s4 1983009808
        %v409 = vunpack.c.0.s8 %v408
        %v410 = vperm.slane %v402, %v409
        %v411 = vrot.slane %v253, 4
        %v412 = vsel %vm263, %v411, %v229
        %v413 = vrot.slane %v229, 4
        %v414 = vsel %vm263, %v253, %v413
        %v416 = vunpack.c.l.s4 1983009808
        %v417 = vunpack.c.0.s8 %v416
        %v418 = vperm.slane %v412, %v417
        %v420 = vunpack.c.l.s4 1983009808
        %v421 = vunpack.c.0.s8 %v420
        %v422 = vperm.slane %v414, %v421
        %v423 = vrot.slane %v394, 4
        %v424 = vsel %vm263, %v423, %v382
        %v425 = vrot.slane %v382, 4
        %v426 = vsel %vm263, %v394, %v425
        %v428 = vunpack.c.l.s4 1934713408
        %v429 = vunpack.c.0.s8 %v428
        %v430 = vperm.slane %v424, %v429
        %v432 = vunpack.c.l.s4 1934713408
        %v433 = vunpack.c.0.s8 %v432
        %v434 = vperm.slane %v426, %v433
        %v435 = vrot.slane %v398, 4
        %v436 = vsel %vm263, %v435, %v386
        %v437 = vrot.slane %v386, 4
        %v438 = vsel %vm263, %v398, %v437
        %v440 = vunpack.c.l.s4 1934713408
        %v441 = vunpack.c.0.s8 %v440
        %v442 = vperm.slane %v436, %v441
        %v444 = vunpack.c.l.s4 1934713408
        %v445 = vunpack.c.0.s8 %v444
        %v446 = vperm.slane %v438, %v445
        %v447 = vrot.slane %v418, 4
        %v448 = vsel %vm263, %v447, %v406
        %v449 = vrot.slane %v406, 4
        %v450 = vsel %vm263, %v418, %v449
        %v452 = vunpack.c.l.s4 1934713408
        %v453 = vunpack.c.0.s8 %v452
        %v454 = vperm.slane %v448, %v453
        %v456 = vunpack.c.l.s4 1934713408
        %v457 = vunpack.c.0.s8 %v456
        %v458 = vperm.slane %v450, %v457
        %v459 = vrot.slane %v422, 4
        %v460 = vsel %vm263, %v459, %v410
        %v461 = vrot.slane %v410, 4
        %v462 = vsel %vm263, %v422, %v461
        %v464 = vunpack.c.l.s4 1934713408
        %v465 = vunpack.c.0.s8 %v464
        %v466 = vperm.slane %v460, %v465
        %v468 = vunpack.c.l.s4 1934713408
        %v469 = vunpack.c.0.s8 %v468
        %v470 = vperm.slane %v462, %v469
        %v471 = vrot.slane %v454, 4
        %v472 = vsel %vm263, %v471, %v430
        %v473 = vrot.slane %v430, 4
        %v474 = vsel %vm263, %v454, %v473
        %v475 = vrot.slane %v458, 4
        %v476 = vsel %vm263, %v475, %v434
        %v477 = vrot.slane %v434, 4
        %v478 = vsel %vm263, %v458, %v477
        %v479 = vrot.slane %v466, 4
        %v480 = vsel %vm263, %v479, %v442
        %v481 = vrot.slane %v442, 4
        %v482 = vsel %vm263, %v466, %v481
        %v483 = vrot.slane %v470, 4
        %v484 = vsel %vm263, %v483, %v446
        %v485 = vrot.slane %v446, 4
        %v486 = vsel %vm263, %v470, %v485
        %v487 = vrot.slane %v195, 4
        %v488 = vsel %vm263, %v487, %v172
        %v489 = vrot.slane %v172, 4
        %v490 = vsel %vm263, %v195, %v489
        %v492 = vunpack.c.l.s4 1983009808
        %v493 = vunpack.c.0.s8 %v492
        %v494 = vperm.slane %v488, %v493
        %v496 = vunpack.c.l.s4 1983009808
        %v497 = vunpack.c.0.s8 %v496
        %v498 = vperm.slane %v490, %v497
        %v499 = vrot.slane %v207, 4
        %v500 = vsel %vm263, %v499, %v183
        %v501 = vrot.slane %v183, 4
        %v502 = vsel %vm263, %v207, %v501
        %v504 = vunpack.c.l.s4 1983009808
        %v505 = vunpack.c.0.s8 %v504
        %v506 = vperm.slane %v500, %v505
        %v508 = vunpack.c.l.s4 1983009808
        %v509 = vunpack.c.0.s8 %v508
        %v510 = vperm.slane %v502, %v509
        %v511 = vrot.slane %v243, 4
        %v512 = vsel %vm263, %v511, %v219
        %v513 = vrot.slane %v219, 4
        %v514 = vsel %vm263, %v243, %v513
        %v516 = vunpack.c.l.s4 1983009808
        %v517 = vunpack.c.0.s8 %v516
        %v518 = vperm.slane %v512, %v517
        %v520 = vunpack.c.l.s4 1983009808
        %v521 = vunpack.c.0.s8 %v520
        %v522 = vperm.slane %v514, %v521
        %v523 = vrot.slane %v255, 4
        %v524 = vsel %vm263, %v523, %v231
        %v525 = vrot.slane %v231, 4
        %v526 = vsel %vm263, %v255, %v525
        %v528 = vunpack.c.l.s4 1983009808
        %v529 = vunpack.c.0.s8 %v528
        %v530 = vperm.slane %v524, %v529
        %v532 = vunpack.c.l.s4 1983009808
        %v533 = vunpack.c.0.s8 %v532
        %v534 = vperm.slane %v526, %v533
        %v535 = vrot.slane %v506, 4
        %v536 = vsel %vm263, %v535, %v494
        %v537 = vrot.slane %v494, 4
        %v538 = vsel %vm263, %v506, %v537
        %v540 = vunpack.c.l.s4 1934713408
        %v541 = vunpack.c.0.s8 %v540
        %v542 = vperm.slane %v536, %v541
        %v544 = vunpack.c.l.s4 1934713408
        %v545 = vunpack.c.0.s8 %v544
        %v546 = vperm.slane %v538, %v545
        %v547 = vrot.slane %v510, 4
        %v548 = vsel %vm263, %v547, %v498
        %v549 = vrot.slane %v498, 4
        %v550 = vsel %vm263, %v510, %v549
        %v552 = vunpack.c.l.s4 1934713408
        %v553 = vunpack.c.0.s8 %v552
        %v554 = vperm.slane %v548, %v553
        %v556 = vunpack.c.l.s4 1934713408
        %v557 = vunpack.c.0.s8 %v556
        %v558 = vperm.slane %v550, %v557
        %v559 = vrot.slane %v530, 4
        %v560 = vsel %vm263, %v559, %v518
        %v561 = vrot.slane %v518, 4
        %v562 = vsel %vm263, %v530, %v561
        %v564 = vunpack.c.l.s4 1934713408
        %v565 = vunpack.c.0.s8 %v564
        %v566 = vperm.slane %v560, %v565
        %v568 = vunpack.c.l.s4 1934713408
        %v569 = vunpack.c.0.s8 %v568
        %v570 = vperm.slane %v562, %v569
        %v571 = vrot.slane %v534, 4
        %v572 = vsel %vm263, %v571, %v522
        %v573 = vrot.slane %v522, 4
        %v574 = vsel %vm263, %v534, %v573
        %v576 = vunpack.c.l.s4 1934713408
        %v577 = vunpack.c.0.s8 %v576
        %v578 = vperm.slane %v572, %v577
        %v580 = vunpack.c.l.s4 1934713408
        %v581 = vunpack.c.0.s8 %v580
        %v582 = vperm.slane %v574, %v581
        %v583 = vrot.slane %v566, 4
        %v584 = vsel %vm263, %v583, %v542
        %v585 = vrot.slane %v542, 4
        %v586 = vsel %vm263, %v566, %v585
        %v587 = vrot.slane %v570, 4
        %v588 = vsel %vm263, %v587, %v546
        %v589 = vrot.slane %v546, 4
        %v590 = vsel %vm263, %v570, %v589
        %v591 = vrot.slane %v578, 4
        %v592 = vsel %vm263, %v591, %v554
        %v593 = vrot.slane %v554, 4
        %v594 = vsel %vm263, %v578, %v593
        %v595 = vrot.slane %v582, 4
        %v596 = vsel %vm263, %v595, %v558
        %v597 = vrot.slane %v558, 4
        %v598 = vsel %vm263, %v582, %v597
        %v599 = vrot.slane %v197, 4
        %v600 = vsel %vm263, %v599, %v173
        %v601 = vrot.slane %v173, 4
        %v602 = vsel %vm263, %v197, %v601
        %v604 = vunpack.c.l.s4 1983009808
        %v605 = vunpack.c.0.s8 %v604
        %v606 = vperm.slane %v600, %v605
        %v608 = vunpack.c.l.s4 1983009808
        %v609 = vunpack.c.0.s8 %v608
        %v610 = vperm.slane %v602, %v609
        %v611 = vrot.slane %v209, 4
        %v612 = vsel %vm263, %v611, %v185
        %v613 = vrot.slane %v185, 4
        %v614 = vsel %vm263, %v209, %v613
        %v616 = vunpack.c.l.s4 1983009808
        %v617 = vunpack.c.0.s8 %v616
        %v618 = vperm.slane %v612, %v617
        %v620 = vunpack.c.l.s4 1983009808
        %v621 = vunpack.c.0.s8 %v620
        %v622 = vperm.slane %v614, %v621
        %v623 = vrot.slane %v245, 4
        %v624 = vsel %vm263, %v623, %v221
        %v625 = vrot.slane %v221, 4
        %v626 = vsel %vm263, %v245, %v625
        %v628 = vunpack.c.l.s4 1983009808
        %v629 = vunpack.c.0.s8 %v628
        %v630 = vperm.slane %v624, %v629
        %v632 = vunpack.c.l.s4 1983009808
        %v633 = vunpack.c.0.s8 %v632
        %v634 = vperm.slane %v626, %v633
        %v635 = vrot.slane %v257, 4
        %v636 = vsel %vm263, %v635, %v233
        %v637 = vrot.slane %v233, 4
        %v638 = vsel %vm263, %v257, %v637
        %v640 = vunpack.c.l.s4 1983009808
        %v641 = vunpack.c.0.s8 %v640
        %v642 = vperm.slane %v636, %v641
        %v644 = vunpack.c.l.s4 1983009808
        %v645 = vunpack.c.0.s8 %v644
        %v646 = vperm.slane %v638, %v645
        %v647 = vrot.slane %v618, 4
        %v648 = vsel %vm263, %v647, %v606
        %v649 = vrot.slane %v606, 4
        %v650 = vsel %vm263, %v618, %v649
        %v652 = vunpack.c.l.s4 1934713408
        %v653 = vunpack.c.0.s8 %v652
        %v654 = vperm.slane %v648, %v653
        %v656 = vunpack.c.l.s4 1934713408
        %v657 = vunpack.c.0.s8 %v656
        %v658 = vperm.slane %v650, %v657
        %v659 = vrot.slane %v622, 4
        %v660 = vsel %vm263, %v659, %v610
        %v661 = vrot.slane %v610, 4
        %v662 = vsel %vm263, %v622, %v661
        %v664 = vunpack.c.l.s4 1934713408
        %v665 = vunpack.c.0.s8 %v664
        %v666 = vperm.slane %v660, %v665
        %v668 = vunpack.c.l.s4 1934713408
        %v669 = vunpack.c.0.s8 %v668
        %v670 = vperm.slane %v662, %v669
        %v671 = vrot.slane %v642, 4
        %v672 = vsel %vm263, %v671, %v630
        %v673 = vrot.slane %v630, 4
        %v674 = vsel %vm263, %v642, %v673
        %v676 = vunpack.c.l.s4 1934713408
        %v677 = vunpack.c.0.s8 %v676
        %v678 = vperm.slane %v672, %v677
        %v680 = vunpack.c.l.s4 1934713408
        %v681 = vunpack.c.0.s8 %v680
        %v682 = vperm.slane %v674, %v681
        %v683 = vrot.slane %v646, 4
        %v684 = vsel %vm263, %v683, %v634
        %v685 = vrot.slane %v634, 4
        %v686 = vsel %vm263, %v646, %v685
        %v688 = vunpack.c.l.s4 1934713408
        %v689 = vunpack.c.0.s8 %v688
        %v690 = vperm.slane %v684, %v689
        %v692 = vunpack.c.l.s4 1934713408
        %v693 = vunpack.c.0.s8 %v692
        %v694 = vperm.slane %v686, %v693
        %v695 = vrot.slane %v678, 4
        %v696 = vsel %vm263, %v695, %v654
        %v697 = vrot.slane %v654, 4
        %v698 = vsel %vm263, %v678, %v697
        %v699 = vrot.slane %v682, 4
        %v700 = vsel %vm263, %v699, %v658
        %v701 = vrot.slane %v658, 4
        %v702 = vsel %vm263, %v682, %v701
        %v703 = vrot.slane %v690, 4
        %v704 = vsel %vm263, %v703, %v666
        %v705 = vrot.slane %v666, 4
        %v706 = vsel %vm263, %v690, %v705
        %v707 = vrot.slane %v694, 4
        %v708 = vsel %vm263, %v707, %v670
        %v709 = vrot.slane %v670, 4
        %v710 = vsel %vm263, %v694, %v709
        %711 = vxpose.xlu0.b32.start [1/16] %v360, 128
        %712 = vxpose.xlu0.b32.cont [2/16] 0.0, 128
        %713 = vxpose.xlu0.b32.cont [3/16] 0.0, 128
        %714 = vxpose.xlu0.b32.cont [4/16] 0.0, 128
        %715 = vxpose.xlu0.b32.cont [5/16] 0.0, 128
        %716 = vxpose.xlu0.b32.cont [6/16] 0.0, 128
        %717 = vxpose.xlu0.b32.cont [7/16] 0.0, 128
        %718 = vxpose.xlu0.b32.cont [8/16] 0.0, 128
        %719 = vxpose.xlu0.b32.cont [9/16] 0.0, 128
        %720 = vxpose.xlu0.b32.cont [10/16] 0.0, 128
        %721 = vxpose.xlu0.b32.cont [11/16] 0.0, 128
        %722 = vxpose.xlu0.b32.cont [12/16] 0.0, 128
        %723 = vxpose.xlu0.b32.cont [13/16] 0.0, 128
        %724 = vxpose.xlu0.b32.cont [14/16] 0.0, 128
        %725 = vxpose.xlu0.b32.cont [15/16] 0.0, 128
        %726 = vxpose.xlu0.b32.end [16/16] 0.0, 128
        %v727 = vpop.trf.xlu0
        %v728 = vpop.trf.xlu0
        %v729 = vpop.trf.xlu0
        %v730 = vpop.trf.xlu0
        %v731 = vpop.trf.xlu0
        %v732 = vpop.trf.xlu0
        %v733 = vpop.trf.xlu0
        %v734 = vpop.trf.xlu0
        %v735 = vpop.trf.xlu0
        %v736 = vpop.trf.xlu0
        %v737 = vpop.trf.xlu0
        %v738 = vpop.trf.xlu0
        %v739 = vpop.trf.xlu0
        %v740 = vpop.trf.xlu0
        %v741 = vpop.trf.xlu0
        %v742 = vpop.trf.xlu0
        %743 = vxpose.xlu0.b32.start [1/16] %v362, 128
        %744 = vxpose.xlu0.b32.cont [2/16] 0.0, 128
        %745 = vxpose.xlu0.b32.cont [3/16] 0.0, 128
        %746 = vxpose.xlu0.b32.cont [4/16] 0.0, 128
        %747 = vxpose.xlu0.b32.cont [5/16] 0.0, 128
        %748 = vxpose.xlu0.b32.cont [6/16] 0.0, 128
        %749 = vxpose.xlu0.b32.cont [7/16] 0.0, 128
        %750 = vxpose.xlu0.b32.cont [8/16] 0.0, 128
        %751 = vxpose.xlu0.b32.cont [9/16] 0.0, 128
        %752 = vxpose.xlu0.b32.cont [10/16] 0.0, 128
        %753 = vxpose.xlu0.b32.cont [11/16] 0.0, 128
        %754 = vxpose.xlu0.b32.cont [12/16] 0.0, 128
        %755 = vxpose.xlu0.b32.cont [13/16] 0.0, 128
        %756 = vxpose.xlu0.b32.cont [14/16] 0.0, 128
        %757 = vxpose.xlu0.b32.cont [15/16] 0.0, 128
        %758 = vxpose.xlu0.b32.end [16/16] 0.0, 128
        %v759 = vpop.trf.xlu0
        %v760 = vpop.trf.xlu0
        %v761 = vpop.trf.xlu0
        %v762 = vpop.trf.xlu0
        %v763 = vpop.trf.xlu0
        %v764 = vpop.trf.xlu0
        %v765 = vpop.trf.xlu0
        %v766 = vpop.trf.xlu0
        %v767 = vpop.trf.xlu0
        %v768 = vpop.trf.xlu0
        %v769 = vpop.trf.xlu0
        %v770 = vpop.trf.xlu0
        %v771 = vpop.trf.xlu0
        %v772 = vpop.trf.xlu0
        %v773 = vpop.trf.xlu0
        %v774 = vpop.trf.xlu0
        %775 = vxpose.xlu0.b32.start [1/16] %v364, 128
        %776 = vxpose.xlu0.b32.cont [2/16] 0.0, 128
        %777 = vxpose.xlu0.b32.cont [3/16] 0.0, 128
        %778 = vxpose.xlu0.b32.cont [4/16] 0.0, 128
        %779 = vxpose.xlu0.b32.cont [5/16] 0.0, 128
        %780 = vxpose.xlu0.b32.cont [6/16] 0.0, 128
        %781 = vxpose.xlu0.b32.cont [7/16] 0.0, 128
        %782 = vxpose.xlu0.b32.cont [8/16] 0.0, 128
        %783 = vxpose.xlu0.b32.cont [9/16] 0.0, 128
        %784 = vxpose.xlu0.b32.cont [10/16] 0.0, 128
        %785 = vxpose.xlu0.b32.cont [11/16] 0.0, 128
        %786 = vxpose.xlu0.b32.cont [12/16] 0.0, 128
        %787 = vxpose.xlu0.b32.cont [13/16] 0.0, 128
        %788 = vxpose.xlu0.b32.cont [14/16] 0.0, 128
        %789 = vxpose.xlu0.b32.cont [15/16] 0.0, 128
        %790 = vxpose.xlu0.b32.end [16/16] 0.0, 128
        %v791 = vpop.trf.xlu0
        %v792 = vpop.trf.xlu0
        %v793 = vpop.trf.xlu0
        %v794 = vpop.trf.xlu0
        %v795 = vpop.trf.xlu0
        %v796 = vpop.trf.xlu0
        %v797 = vpop.trf.xlu0
        %v798 = vpop.trf.xlu0
        %v799 = vpop.trf.xlu0
        %v800 = vpop.trf.xlu0
        %v801 = vpop.trf.xlu0
        %v802 = vpop.trf.xlu0
        %v803 = vpop.trf.xlu0
        %v804 = vpop.trf.xlu0
        %v805 = vpop.trf.xlu0
        %v806 = vpop.trf.xlu0
        %807 = vxpose.xlu0.b32.start [1/16] %v366, 128
        %808 = vxpose.xlu0.b32.cont [2/16] 0.0, 128
        %809 = vxpose.xlu0.b32.cont [3/16] 0.0, 128
        %810 = vxpose.xlu0.b32.cont [4/16] 0.0, 128
        %811 = vxpose.xlu0.b32.cont [5/16] 0.0, 128
        %812 = vxpose.xlu0.b32.cont [6/16] 0.0, 128
        %813 = vxpose.xlu0.b32.cont [7/16] 0.0, 128
        %814 = vxpose.xlu0.b32.cont [8/16] 0.0, 128
        %815 = vxpose.xlu0.b32.cont [9/16] 0.0, 128
        %816 = vxpose.xlu0.b32.cont [10/16] 0.0, 128
        %817 = vxpose.xlu0.b32.cont [11/16] 0.0, 128
        %818 = vxpose.xlu0.b32.cont [12/16] 0.0, 128
        %819 = vxpose.xlu0.b32.cont [13/16] 0.0, 128
        %820 = vxpose.xlu0.b32.cont [14/16] 0.0, 128
        %821 = vxpose.xlu0.b32.cont [15/16] 0.0, 128
        %822 = vxpose.xlu0.b32.end [16/16] 0.0, 128
        %v823 = vpop.trf.xlu0
        %v824 = vpop.trf.xlu0
        %v825 = vpop.trf.xlu0
        %v826 = vpop.trf.xlu0
        %v827 = vpop.trf.xlu0
        %v828 = vpop.trf.xlu0
        %v829 = vpop.trf.xlu0
        %v830 = vpop.trf.xlu0
        %v831 = vpop.trf.xlu0
        %v832 = vpop.trf.xlu0
        %v833 = vpop.trf.xlu0
        %v834 = vpop.trf.xlu0
        %v835 = vpop.trf.xlu0
        %v836 = vpop.trf.xlu0
        %v837 = vpop.trf.xlu0
        %v838 = vpop.trf.xlu0
        %839 = vxpose.xlu0.b32.start [1/16] %v368, 128
        %840 = vxpose.xlu0.b32.cont [2/16] 0.0, 128
        %841 = vxpose.xlu0.b32.cont [3/16] 0.0, 128
        %842 = vxpose.xlu0.b32.cont [4/16] 0.0, 128
        %843 = vxpose.xlu0.b32.cont [5/16] 0.0, 128
        %844 = vxpose.xlu0.b32.cont [6/16] 0.0, 128
        %845 = vxpose.xlu0.b32.cont [7/16] 0.0, 128
        %846 = vxpose.xlu0.b32.cont [8/16] 0.0, 128
        %847 = vxpose.xlu0.b32.cont [9/16] 0.0, 128
        %848 = vxpose.xlu0.b32.cont [10/16] 0.0, 128
        %849 = vxpose.xlu0.b32.cont [11/16] 0.0, 128
        %850 = vxpose.xlu0.b32.cont [12/16] 0.0, 128
        %851 = vxpose.xlu0.b32.cont [13/16] 0.0, 128
        %852 = vxpose.xlu0.b32.cont [14/16] 0.0, 128
        %853 = vxpose.xlu0.b32.cont [15/16] 0.0, 128
        %854 = vxpose.xlu0.b32.end [16/16] 0.0, 128
        %v855 = vpop.trf.xlu0
        %v856 = vpop.trf.xlu0
        %v857 = vpop.trf.xlu0
        %v858 = vpop.trf.xlu0
        %v859 = vpop.trf.xlu0
        %v860 = vpop.trf.xlu0
        %v861 = vpop.trf.xlu0
        %v862 = vpop.trf.xlu0
        %v863 = vpop.trf.xlu0
        %v864 = vpop.trf.xlu0
        %v865 = vpop.trf.xlu0
        %v866 = vpop.trf.xlu0
        %v867 = vpop.trf.xlu0
        %v868 = vpop.trf.xlu0
        %v869 = vpop.trf.xlu0
        %v870 = vpop.trf.xlu0
        %871 = vxpose.xlu0.b32.start [1/16] %v370, 128
        %872 = vxpose.xlu0.b32.cont [2/16] 0.0, 128
        %873 = vxpose.xlu0.b32.cont [3/16] 0.0, 128
        %874 = vxpose.xlu0.b32.cont [4/16] 0.0, 128
        %875 = vxpose.xlu0.b32.cont [5/16] 0.0, 128
        %876 = vxpose.xlu0.b32.cont [6/16] 0.0, 128
        %877 = vxpose.xlu0.b32.cont [7/16] 0.0, 128
        %878 = vxpose.xlu0.b32.cont [8/16] 0.0, 128
        %879 = vxpose.xlu0.b32.cont [9/16] 0.0, 128
        %880 = vxpose.xlu0.b32.cont [10/16] 0.0, 128
        %881 = vxpose.xlu0.b32.cont [11/16] 0.0, 128
        %882 = vxpose.xlu0.b32.cont [12/16] 0.0, 128
        %883 = vxpose.xlu0.b32.cont [13/16] 0.0, 128
        %884 = vxpose.xlu0.b32.cont [14/16] 0.0, 128
        %885 = vxpose.xlu0.b32.cont [15/16] 0.0, 128
        %886 = vxpose.xlu0.b32.end [16/16] 0.0, 128
        %v887 = vpop.trf.xlu0
        %v888 = vpop.trf.xlu0
        %v889 = vpop.trf.xlu0
        %v890 = vpop.trf.xlu0
        %v891 = vpop.trf.xlu0
        %v892 = vpop.trf.xlu0
        %v893 = vpop.trf.xlu0
        %v894 = vpop.trf.xlu0
        %v895 = vpop.trf.xlu0
        %v896 = vpop.trf.xlu0
        %v897 = vpop.trf.xlu0
        %v898 = vpop.trf.xlu0
        %v899 = vpop.trf.xlu0
        %v900 = vpop.trf.xlu0
        %v901 = vpop.trf.xlu0
        %v902 = vpop.trf.xlu0
        %903 = vxpose.xlu0.b32.start [1/16] %v372, 128
        %904 = vxpose.xlu0.b32.cont [2/16] 0.0, 128
        %905 = vxpose.xlu0.b32.cont [3/16] 0.0, 128
        %906 = vxpose.xlu0.b32.cont [4/16] 0.0, 128
        %907 = vxpose.xlu0.b32.cont [5/16] 0.0, 128
        %908 = vxpose.xlu0.b32.cont [6/16] 0.0, 128
        %909 = vxpose.xlu0.b32.cont [7/16] 0.0, 128
        %910 = vxpose.xlu0.b32.cont [8/16] 0.0, 128
        %911 = vxpose.xlu0.b32.cont [9/16] 0.0, 128
        %912 = vxpose.xlu0.b32.cont [10/16] 0.0, 128
        %913 = vxpose.xlu0.b32.cont [11/16] 0.0, 128
        %914 = vxpose.xlu0.b32.cont [12/16] 0.0, 128
        %915 = vxpose.xlu0.b32.cont [13/16] 0.0, 128
        %916 = vxpose.xlu0.b32.cont [14/16] 0.0, 128
        %917 = vxpose.xlu0.b32.cont [15/16] 0.0, 128
        %918 = vxpose.xlu0.b32.end [16/16] 0.0, 128
        %v919 = vpop.trf.xlu0
        %v920 = vpop.trf.xlu0
        %v921 = vpop.trf.xlu0
        %v922 = vpop.trf.xlu0
        %v923 = vpop.trf.xlu0
        %v924 = vpop.trf.xlu0
        %v925 = vpop.trf.xlu0
        %v926 = vpop.trf.xlu0
        %v927 = vpop.trf.xlu0
        %v928 = vpop.trf.xlu0
        %v929 = vpop.trf.xlu0
        %v930 = vpop.trf.xlu0
        %v931 = vpop.trf.xlu0
        %v932 = vpop.trf.xlu0
        %v933 = vpop.trf.xlu0
        %v934 = vpop.trf.xlu0
        %935 = vxpose.xlu0.b32.start [1/16] %v374, 128
        %936 = vxpose.xlu0.b32.cont [2/16] 0.0, 128
        %937 = vxpose.xlu0.b32.cont [3/16] 0.0, 128
        %938 = vxpose.xlu0.b32.cont [4/16] 0.0, 128
        %939 = vxpose.xlu0.b32.cont [5/16] 0.0, 128
        %940 = vxpose.xlu0.b32.cont [6/16] 0.0, 128
        %941 = vxpose.xlu0.b32.cont [7/16] 0.0, 128
        %942 = vxpose.xlu0.b32.cont [8/16] 0.0, 128
        %943 = vxpose.xlu0.b32.cont [9/16] 0.0, 128
        %944 = vxpose.xlu0.b32.cont [10/16] 0.0, 128
        %945 = vxpose.xlu0.b32.cont [11/16] 0.0, 128
        %946 = vxpose.xlu0.b32.cont [12/16] 0.0, 128
        %947 = vxpose.xlu0.b32.cont [13/16] 0.0, 128
        %948 = vxpose.xlu0.b32.cont [14/16] 0.0, 128
        %949 = vxpose.xlu0.b32.cont [15/16] 0.0, 128
        %950 = vxpose.xlu0.b32.end [16/16] 0.0, 128
        %v951 = vpop.trf.xlu0
        %v952 = vpop.trf.xlu0
        %v953 = vpop.trf.xlu0
        %v954 = vpop.trf.xlu0
        %v955 = vpop.trf.xlu0
        %v956 = vpop.trf.xlu0
        %v957 = vpop.trf.xlu0
        %v958 = vpop.trf.xlu0
        %v959 = vpop.trf.xlu0
        %v960 = vpop.trf.xlu0
        %v961 = vpop.trf.xlu0
        %v962 = vpop.trf.xlu0
        %v963 = vpop.trf.xlu0
        %v964 = vpop.trf.xlu0
        %v965 = vpop.trf.xlu0
        %v966 = vpop.trf.xlu0
        %967 = vxpose.xlu0.b32.start [1/16] %v472, 128
        %968 = vxpose.xlu0.b32.cont [2/16] 0.0, 128
        %969 = vxpose.xlu0.b32.cont [3/16] 0.0, 128
        %970 = vxpose.xlu0.b32.cont [4/16] 0.0, 128
        %971 = vxpose.xlu0.b32.cont [5/16] 0.0, 128
        %972 = vxpose.xlu0.b32.cont [6/16] 0.0, 128
        %973 = vxpose.xlu0.b32.cont [7/16] 0.0, 128
        %974 = vxpose.xlu0.b32.cont [8/16] 0.0, 128
        %975 = vxpose.xlu0.b32.cont [9/16] 0.0, 128
        %976 = vxpose.xlu0.b32.cont [10/16] 0.0, 128
        %977 = vxpose.xlu0.b32.cont [11/16] 0.0, 128
        %978 = vxpose.xlu0.b32.cont [12/16] 0.0, 128
        %979 = vxpose.xlu0.b32.cont [13/16] 0.0, 128
        %980 = vxpose.xlu0.b32.cont [14/16] 0.0, 128
        %981 = vxpose.xlu0.b32.cont [15/16] 0.0, 128
        %982 = vxpose.xlu0.b32.end [16/16] 0.0, 128
        %v983 = vpop.trf.xlu0
        %v984 = vpop.trf.xlu0
        %v985 = vpop.trf.xlu0
        %v986 = vpop.trf.xlu0
        %v987 = vpop.trf.xlu0
        %v988 = vpop.trf.xlu0
        %v989 = vpop.trf.xlu0
        %v990 = vpop.trf.xlu0
        %v991 = vpop.trf.xlu0
        %v992 = vpop.trf.xlu0
        %v993 = vpop.trf.xlu0
        %v994 = vpop.trf.xlu0
        %v995 = vpop.trf.xlu0
        %v996 = vpop.trf.xlu0
        %v997 = vpop.trf.xlu0
        %v998 = vpop.trf.xlu0
        %999 = vxpose.xlu0.b32.start [1/16] %v474, 128
        %1000 = vxpose.xlu0.b32.cont [2/16] 0.0, 128
        %1001 = vxpose.xlu0.b32.cont [3/16] 0.0, 128
        %1002 = vxpose.xlu0.b32.cont [4/16] 0.0, 128
        %1003 = vxpose.xlu0.b32.cont [5/16] 0.0, 128
        %1004 = vxpose.xlu0.b32.cont [6/16] 0.0, 128
        %1005 = vxpose.xlu0.b32.cont [7/16] 0.0, 128
        %1006 = vxpose.xlu0.b32.cont [8/16] 0.0, 128
        %1007 = vxpose.xlu0.b32.cont [9/16] 0.0, 128
        %1008 = vxpose.xlu0.b32.cont [10/16] 0.0, 128
        %1009 = vxpose.xlu0.b32.cont [11/16] 0.0, 128
        %1010 = vxpose.xlu0.b32.cont [12/16] 0.0, 128
        %1011 = vxpose.xlu0.b32.cont [13/16] 0.0, 128
        %1012 = vxpose.xlu0.b32.cont [14/16] 0.0, 128
        %1013 = vxpose.xlu0.b32.cont [15/16] 0.0, 128
        %1014 = vxpose.xlu0.b32.end [16/16] 0.0, 128
        %v1015 = vpop.trf.xlu0
        %v1016 = vpop.trf.xlu0
        %v1017 = vpop.trf.xlu0
        %v1018 = vpop.trf.xlu0
        %v1019 = vpop.trf.xlu0
        %v1020 = vpop.trf.xlu0
        %v1021 = vpop.trf.xlu0
        %v1022 = vpop.trf.xlu0
        %v1023 = vpop.trf.xlu0
        %v1024 = vpop.trf.xlu0
        %v1025 = vpop.trf.xlu0
        %v1026 = vpop.trf.xlu0
        %v1027 = vpop.trf.xlu0
        %v1028 = vpop.trf.xlu0
        %v1029 = vpop.trf.xlu0
        %v1030 = vpop.trf.xlu0
        %1031 = vxpose.xlu0.b32.start [1/16] %v476, 128
        %1032 = vxpose.xlu0.b32.cont [2/16] 0.0, 128
        %1033 = vxpose.xlu0.b32.cont [3/16] 0.0, 128
        %1034 = vxpose.xlu0.b32.cont [4/16] 0.0, 128
        %1035 = vxpose.xlu0.b32.cont [5/16] 0.0, 128
        %1036 = vxpose.xlu0.b32.cont [6/16] 0.0, 128
        %1037 = vxpose.xlu0.b32.cont [7/16] 0.0, 128
        %1038 = vxpose.xlu0.b32.cont [8/16] 0.0, 128
        %1039 = vxpose.xlu0.b32.cont [9/16] 0.0, 128
        %1040 = vxpose.xlu0.b32.cont [10/16] 0.0, 128
        %1041 = vxpose.xlu0.b32.cont [11/16] 0.0, 128
        %1042 = vxpose.xlu0.b32.cont [12/16] 0.0, 128
        %1043 = vxpose.xlu0.b32.cont [13/16] 0.0, 128
        %1044 = vxpose.xlu0.b32.cont [14/16] 0.0, 128
        %1045 = vxpose.xlu0.b32.cont [15/16] 0.0, 128
        %1046 = vxpose.xlu0.b32.end [16/16] 0.0, 128
        %v1047 = vpop.trf.xlu0
        %v1048 = vpop.trf.xlu0
        %v1049 = vpop.trf.xlu0
        %v1050 = vpop.trf.xlu0
        %v1051 = vpop.trf.xlu0
        %v1052 = vpop.trf.xlu0
        %v1053 = vpop.trf.xlu0
        %v1054 = vpop.trf.xlu0
        %v1055 = vpop.trf.xlu0
        %v1056 = vpop.trf.xlu0
        %v1057 = vpop.trf.xlu0
        %v1058 = vpop.trf.xlu0
        %v1059 = vpop.trf.xlu0
        %v1060 = vpop.trf.xlu0
        %v1061 = vpop.trf.xlu0
        %v1062 = vpop.trf.xlu0
        %1063 = vxpose.xlu0.b32.start [1/16] %v478, 128
        %1064 = vxpose.xlu0.b32.cont [2/16] 0.0, 128
        %1065 = vxpose.xlu0.b32.cont [3/16] 0.0, 128
        %1066 = vxpose.xlu0.b32.cont [4/16] 0.0, 128
        %1067 = vxpose.xlu0.b32.cont [5/16] 0.0, 128
        %1068 = vxpose.xlu0.b32.cont [6/16] 0.0, 128
        %1069 = vxpose.xlu0.b32.cont [7/16] 0.0, 128
        %1070 = vxpose.xlu0.b32.cont [8/16] 0.0, 128
        %1071 = vxpose.xlu0.b32.cont [9/16] 0.0, 128
        %1072 = vxpose.xlu0.b32.cont [10/16] 0.0, 128
        %1073 = vxpose.xlu0.b32.cont [11/16] 0.0, 128
        %1074 = vxpose.xlu0.b32.cont [12/16] 0.0, 128
        %1075 = vxpose.xlu0.b32.cont [13/16] 0.0, 128
        %1076 = vxpose.xlu0.b32.cont [14/16] 0.0, 128
        %1077 = vxpose.xlu0.b32.cont [15/16] 0.0, 128
        %1078 = vxpose.xlu0.b32.end [16/16] 0.0, 128
        %v1079 = vpop.trf.xlu0
        %v1080 = vpop.trf.xlu0
        %v1081 = vpop.trf.xlu0
        %v1082 = vpop.trf.xlu0
        %v1083 = vpop.trf.xlu0
        %v1084 = vpop.trf.xlu0
        %v1085 = vpop.trf.xlu0
        %v1086 = vpop.trf.xlu0
        %v1087 = vpop.trf.xlu0
        %v1088 = vpop.trf.xlu0
        %v1089 = vpop.trf.xlu0
        %v1090 = vpop.trf.xlu0
        %v1091 = vpop.trf.xlu0
        %v1092 = vpop.trf.xlu0
        %v1093 = vpop.trf.xlu0
        %v1094 = vpop.trf.xlu0
        %1095 = vxpose.xlu0.b32.start [1/16] %v480, 128
        %1096 = vxpose.xlu0.b32.cont [2/16] 0.0, 128
        %1097 = vxpose.xlu0.b32.cont [3/16] 0.0, 128
        %1098 = vxpose.xlu0.b32.cont [4/16] 0.0, 128
        %1099 = vxpose.xlu0.b32.cont [5/16] 0.0, 128
        %1100 = vxpose.xlu0.b32.cont [6/16] 0.0, 128
        %1101 = vxpose.xlu0.b32.cont [7/16] 0.0, 128
        %1102 = vxpose.xlu0.b32.cont [8/16] 0.0, 128
        %1103 = vxpose.xlu0.b32.cont [9/16] 0.0, 128
        %1104 = vxpose.xlu0.b32.cont [10/16] 0.0, 128
        %1105 = vxpose.xlu0.b32.cont [11/16] 0.0, 128
        %1106 = vxpose.xlu0.b32.cont [12/16] 0.0, 128
        %1107 = vxpose.xlu0.b32.cont [13/16] 0.0, 128
        %1108 = vxpose.xlu0.b32.cont [14/16] 0.0, 128
        %1109 = vxpose.xlu0.b32.cont [15/16] 0.0, 128
        %1110 = vxpose.xlu0.b32.end [16/16] 0.0, 128
        %v1111 = vpop.trf.xlu0
        %v1112 = vpop.trf.xlu0
        %v1113 = vpop.trf.xlu0
        %v1114 = vpop.trf.xlu0
        %v1115 = vpop.trf.xlu0
        %v1116 = vpop.trf.xlu0
        %v1117 = vpop.trf.xlu0
        %v1118 = vpop.trf.xlu0
        %v1119 = vpop.trf.xlu0
        %v1120 = vpop.trf.xlu0
        %v1121 = vpop.trf.xlu0
        %v1122 = vpop.trf.xlu0
        %v1123 = vpop.trf.xlu0
        %v1124 = vpop.trf.xlu0
        %v1125 = vpop.trf.xlu0
        %v1126 = vpop.trf.xlu0
        %1127 = vxpose.xlu0.b32.start [1/16] %v482, 128
        %1128 = vxpose.xlu0.b32.cont [2/16] 0.0, 128
        %1129 = vxpose.xlu0.b32.cont [3/16] 0.0, 128
        %1130 = vxpose.xlu0.b32.cont [4/16] 0.0, 128
        %1131 = vxpose.xlu0.b32.cont [5/16] 0.0, 128
        %1132 = vxpose.xlu0.b32.cont [6/16] 0.0, 128
        %1133 = vxpose.xlu0.b32.cont [7/16] 0.0, 128
        %1134 = vxpose.xlu0.b32.cont [8/16] 0.0, 128
        %1135 = vxpose.xlu0.b32.cont [9/16] 0.0, 128
        %1136 = vxpose.xlu0.b32.cont [10/16] 0.0, 128
        %1137 = vxpose.xlu0.b32.cont [11/16] 0.0, 128
        %1138 = vxpose.xlu0.b32.cont [12/16] 0.0, 128
        %1139 = vxpose.xlu0.b32.cont [13/16] 0.0, 128
        %1140 = vxpose.xlu0.b32.cont [14/16] 0.0, 128
        %1141 = vxpose.xlu0.b32.cont [15/16] 0.0, 128
        %1142 = vxpose.xlu0.b32.end [16/16] 0.0, 128
        %v1143 = vpop.trf.xlu0
        %v1144 = vpop.trf.xlu0
        %v1145 = vpop.trf.xlu0
        %v1146 = vpop.trf.xlu0
        %v1147 = vpop.trf.xlu0
        %v1148 = vpop.trf.xlu0
        %v1149 = vpop.trf.xlu0
        %v1150 = vpop.trf.xlu0
        %v1151 = vpop.trf.xlu0
        %v1152 = vpop.trf.xlu0
        %v1153 = vpop.trf.xlu0
        %v1154 = vpop.trf.xlu0
        %v1155 = vpop.trf.xlu0
        %v1156 = vpop.trf.xlu0
        %v1157 = vpop.trf.xlu0
        %v1158 = vpop.trf.xlu0
        %1159 = vxpose.xlu0.b32.start [1/16] %v484, 128
        %1160 = vxpose.xlu0.b32.cont [2/16] 0.0, 128
        %1161 = vxpose.xlu0.b32.cont [3/16] 0.0, 128
        %1162 = vxpose.xlu0.b32.cont [4/16] 0.0, 128
        %1163 = vxpose.xlu0.b32.cont [5/16] 0.0, 128
        %1164 = vxpose.xlu0.b32.cont [6/16] 0.0, 128
        %1165 = vxpose.xlu0.b32.cont [7/16] 0.0, 128
        %1166 = vxpose.xlu0.b32.cont [8/16] 0.0, 128
        %1167 = vxpose.xlu0.b32.cont [9/16] 0.0, 128
        %1168 = vxpose.xlu0.b32.cont [10/16] 0.0, 128
        %1169 = vxpose.xlu0.b32.cont [11/16] 0.0, 128
        %1170 = vxpose.xlu0.b32.cont [12/16] 0.0, 128
        %1171 = vxpose.xlu0.b32.cont [13/16] 0.0, 128
        %1172 = vxpose.xlu0.b32.cont [14/16] 0.0, 128
        %1173 = vxpose.xlu0.b32.cont [15/16] 0.0, 128
        %1174 = vxpose.xlu0.b32.end [16/16] 0.0, 128
        %v1175 = vpop.trf.xlu0
        %v1176 = vpop.trf.xlu0
        %v1177 = vpop.trf.xlu0
        %v1178 = vpop.trf.xlu0
        %v1179 = vpop.trf.xlu0
        %v1180 = vpop.trf.xlu0
        %v1181 = vpop.trf.xlu0
        %v1182 = vpop.trf.xlu0
        %v1183 = vpop.trf.xlu0
        %v1184 = vpop.trf.xlu0
        %v1185 = vpop.trf.xlu0
        %v1186 = vpop.trf.xlu0
        %v1187 = vpop.trf.xlu0
        %v1188 = vpop.trf.xlu0
        %v1189 = vpop.trf.xlu0
        %v1190 = vpop.trf.xlu0
        %1191 = vxpose.xlu0.b32.start [1/16] %v486, 128
        %1192 = vxpose.xlu0.b32.cont [2/16] 0.0, 128
        %1193 = vxpose.xlu0.b32.cont [3/16] 0.0, 128
        %1194 = vxpose.xlu0.b32.cont [4/16] 0.0, 128
        %1195 = vxpose.xlu0.b32.cont [5/16] 0.0, 128
        %1196 = vxpose.xlu0.b32.cont [6/16] 0.0, 128
        %1197 = vxpose.xlu0.b32.cont [7/16] 0.0, 128
        %1198 = vxpose.xlu0.b32.cont [8/16] 0.0, 128
        %1199 = vxpose.xlu0.b32.cont [9/16] 0.0, 128
        %1200 = vxpose.xlu0.b32.cont [10/16] 0.0, 128
        %1201 = vxpose.xlu0.b32.cont [11/16] 0.0, 128
        %1202 = vxpose.xlu0.b32.cont [12/16] 0.0, 128
        %1203 = vxpose.xlu0.b32.cont [13/16] 0.0, 128
        %1204 = vxpose.xlu0.b32.cont [14/16] 0.0, 128
        %1205 = vxpose.xlu0.b32.cont [15/16] 0.0, 128
        %1206 = vxpose.xlu0.b32.end [16/16] 0.0, 128
        %v1207 = vpop.trf.xlu0
        %v1208 = vpop.trf.xlu0
        %v1209 = vpop.trf.xlu0
        %v1210 = vpop.trf.xlu0
        %v1211 = vpop.trf.xlu0
        %v1212 = vpop.trf.xlu0
        %v1213 = vpop.trf.xlu0
        %v1214 = vpop.trf.xlu0
        %v1215 = vpop.trf.xlu0
        %v1216 = vpop.trf.xlu0
        %v1217 = vpop.trf.xlu0
        %v1218 = vpop.trf.xlu0
        %v1219 = vpop.trf.xlu0
        %v1220 = vpop.trf.xlu0
        %v1221 = vpop.trf.xlu0
        %v1222 = vpop.trf.xlu0
        %1223 = vxpose.xlu0.b32.start [1/16] %v584, 128
        %1224 = vxpose.xlu0.b32.cont [2/16] 0.0, 128
        %1225 = vxpose.xlu0.b32.cont [3/16] 0.0, 128
        %1226 = vxpose.xlu0.b32.cont [4/16] 0.0, 128
        %1227 = vxpose.xlu0.b32.cont [5/16] 0.0, 128
        %1228 = vxpose.xlu0.b32.cont [6/16] 0.0, 128
        %1229 = vxpose.xlu0.b32.cont [7/16] 0.0, 128
        %1230 = vxpose.xlu0.b32.cont [8/16] 0.0, 128
        %1231 = vxpose.xlu0.b32.cont [9/16] 0.0, 128
        %1232 = vxpose.xlu0.b32.cont [10/16] 0.0, 128
        %1233 = vxpose.xlu0.b32.cont [11/16] 0.0, 128
        %1234 = vxpose.xlu0.b32.cont [12/16] 0.0, 128
        %1235 = vxpose.xlu0.b32.cont [13/16] 0.0, 128
        %1236 = vxpose.xlu0.b32.cont [14/16] 0.0, 128
        %1237 = vxpose.xlu0.b32.cont [15/16] 0.0, 128
        %1238 = vxpose.xlu0.b32.end [16/16] 0.0, 128
        %v1239 = vpop.trf.xlu0
        %v1240 = vpop.trf.xlu0
        %v1241 = vpop.trf.xlu0
        %v1242 = vpop.trf.xlu0
        %v1243 = vpop.trf.xlu0
        %v1244 = vpop.trf.xlu0
        %v1245 = vpop.trf.xlu0
        %v1246 = vpop.trf.xlu0
        %v1247 = vpop.trf.xlu0
        %v1248 = vpop.trf.xlu0
        %v1249 = vpop.trf.xlu0
        %v1250 = vpop.trf.xlu0
        %v1251 = vpop.trf.xlu0
        %v1252 = vpop.trf.xlu0
        %v1253 = vpop.trf.xlu0
        %v1254 = vpop.trf.xlu0
        %1255 = vxpose.xlu0.b32.start [1/16] %v586, 128
        %1256 = vxpose.xlu0.b32.cont [2/16] 0.0, 128
        %1257 = vxpose.xlu0.b32.cont [3/16] 0.0, 128
        %1258 = vxpose.xlu0.b32.cont [4/16] 0.0, 128
        %1259 = vxpose.xlu0.b32.cont [5/16] 0.0, 128
        %1260 = vxpose.xlu0.b32.cont [6/16] 0.0, 128
        %1261 = vxpose.xlu0.b32.cont [7/16] 0.0, 128
        %1262 = vxpose.xlu0.b32.cont [8/16] 0.0, 128
        %1263 = vxpose.xlu0.b32.cont [9/16] 0.0, 128
        %1264 = vxpose.xlu0.b32.cont [10/16] 0.0, 128
        %1265 = vxpose.xlu0.b32.cont [11/16] 0.0, 128
        %1266 = vxpose.xlu0.b32.cont [12/16] 0.0, 128
        %1267 = vxpose.xlu0.b32.cont [13/16] 0.0, 128
        %1268 = vxpose.xlu0.b32.cont [14/16] 0.0, 128
        %1269 = vxpose.xlu0.b32.cont [15/16] 0.0, 128
        %1270 = vxpose.xlu0.b32.end [16/16] 0.0, 128
        %v1271 = vpop.trf.xlu0
        %v1272 = vpop.trf.xlu0
        %v1273 = vpop.trf.xlu0
        %v1274 = vpop.trf.xlu0
        %v1275 = vpop.trf.xlu0
        %v1276 = vpop.trf.xlu0
        %v1277 = vpop.trf.xlu0
        %v1278 = vpop.trf.xlu0
        %v1279 = vpop.trf.xlu0
        %v1280 = vpop.trf.xlu0
        %v1281 = vpop.trf.xlu0
        %v1282 = vpop.trf.xlu0
        %v1283 = vpop.trf.xlu0
        %v1284 = vpop.trf.xlu0
        %v1285 = vpop.trf.xlu0
        %v1286 = vpop.trf.xlu0
        %1287 = vxpose.xlu0.b32.start [1/16] %v588, 128
        %1288 = vxpose.xlu0.b32.cont [2/16] 0.0, 128
        %1289 = vxpose.xlu0.b32.cont [3/16] 0.0, 128
        %1290 = vxpose.xlu0.b32.cont [4/16] 0.0, 128
        %1291 = vxpose.xlu0.b32.cont [5/16] 0.0, 128
        %1292 = vxpose.xlu0.b32.cont [6/16] 0.0, 128
        %1293 = vxpose.xlu0.b32.cont [7/16] 0.0, 128
        %1294 = vxpose.xlu0.b32.cont [8/16] 0.0, 128
        %1295 = vxpose.xlu0.b32.cont [9/16] 0.0, 128
        %1296 = vxpose.xlu0.b32.cont [10/16] 0.0, 128
        %1297 = vxpose.xlu0.b32.cont [11/16] 0.0, 128
        %1298 = vxpose.xlu0.b32.cont [12/16] 0.0, 128
        %1299 = vxpose.xlu0.b32.cont [13/16] 0.0, 128
        %1300 = vxpose.xlu0.b32.cont [14/16] 0.0, 128
        %1301 = vxpose.xlu0.b32.cont [15/16] 0.0, 128
        %1302 = vxpose.xlu0.b32.end [16/16] 0.0, 128
        %v1303 = vpop.trf.xlu0
        %v1304 = vpop.trf.xlu0
        %v1305 = vpop.trf.xlu0
        %v1306 = vpop.trf.xlu0
        %v1307 = vpop.trf.xlu0
        %v1308 = vpop.trf.xlu0
        %v1309 = vpop.trf.xlu0
        %v1310 = vpop.trf.xlu0
        %v1311 = vpop.trf.xlu0
        %v1312 = vpop.trf.xlu0
        %v1313 = vpop.trf.xlu0
        %v1314 = vpop.trf.xlu0
        %v1315 = vpop.trf.xlu0
        %v1316 = vpop.trf.xlu0
        %v1317 = vpop.trf.xlu0
        %v1318 = vpop.trf.xlu0
        %1319 = vxpose.xlu0.b32.start [1/16] %v590, 128
        %1320 = vxpose.xlu0.b32.cont [2/16] 0.0, 128
        %1321 = vxpose.xlu0.b32.cont [3/16] 0.0, 128
        %1322 = vxpose.xlu0.b32.cont [4/16] 0.0, 128
        %1323 = vxpose.xlu0.b32.cont [5/16] 0.0, 128
        %1324 = vxpose.xlu0.b32.cont [6/16] 0.0, 128
        %1325 = vxpose.xlu0.b32.cont [7/16] 0.0, 128
        %1326 = vxpose.xlu0.b32.cont [8/16] 0.0, 128
        %1327 = vxpose.xlu0.b32.cont [9/16] 0.0, 128
        %1328 = vxpose.xlu0.b32.cont [10/16] 0.0, 128
        %1329 = vxpose.xlu0.b32.cont [11/16] 0.0, 128
        %1330 = vxpose.xlu0.b32.cont [12/16] 0.0, 128
        %1331 = vxpose.xlu0.b32.cont [13/16] 0.0, 128
        %1332 = vxpose.xlu0.b32.cont [14/16] 0.0, 128
        %1333 = vxpose.xlu0.b32.cont [15/16] 0.0, 128
        %1334 = vxpose.xlu0.b32.end [16/16] 0.0, 128
        %v1335 = vpop.trf.xlu0
        %v1336 = vpop.trf.xlu0
        %v1337 = vpop.trf.xlu0
        %v1338 = vpop.trf.xlu0
        %v1339 = vpop.trf.xlu0
        %v1340 = vpop.trf.xlu0
        %v1341 = vpop.trf.xlu0
        %v1342 = vpop.trf.xlu0
        %v1343 = vpop.trf.xlu0
        %v1344 = vpop.trf.xlu0
        %v1345 = vpop.trf.xlu0
        %v1346 = vpop.trf.xlu0
        %v1347 = vpop.trf.xlu0
        %v1348 = vpop.trf.xlu0
        %v1349 = vpop.trf.xlu0
        %v1350 = vpop.trf.xlu0
        %1351 = vxpose.xlu0.b32.start [1/16] %v592, 128
        %1352 = vxpose.xlu0.b32.cont [2/16] 0.0, 128
        %1353 = vxpose.xlu0.b32.cont [3/16] 0.0, 128
        %1354 = vxpose.xlu0.b32.cont [4/16] 0.0, 128
        %1355 = vxpose.xlu0.b32.cont [5/16] 0.0, 128
        %1356 = vxpose.xlu0.b32.cont [6/16] 0.0, 128
        %1357 = vxpose.xlu0.b32.cont [7/16] 0.0, 128
        %1358 = vxpose.xlu0.b32.cont [8/16] 0.0, 128
        %1359 = vxpose.xlu0.b32.cont [9/16] 0.0, 128
        %1360 = vxpose.xlu0.b32.cont [10/16] 0.0, 128
        %1361 = vxpose.xlu0.b32.cont [11/16] 0.0, 128
        %1362 = vxpose.xlu0.b32.cont [12/16] 0.0, 128
        %1363 = vxpose.xlu0.b32.cont [13/16] 0.0, 128
        %1364 = vxpose.xlu0.b32.cont [14/16] 0.0, 128
        %1365 = vxpose.xlu0.b32.cont [15/16] 0.0, 128
        %1366 = vxpose.xlu0.b32.end [16/16] 0.0, 128
        %v1367 = vpop.trf.xlu0
        %v1368 = vpop.trf.xlu0
        %v1369 = vpop.trf.xlu0
        %v1370 = vpop.trf.xlu0
        %v1371 = vpop.trf.xlu0
        %v1372 = vpop.trf.xlu0
        %v1373 = vpop.trf.xlu0
        %v1374 = vpop.trf.xlu0
        %v1375 = vpop.trf.xlu0
        %v1376 = vpop.trf.xlu0
        %v1377 = vpop.trf.xlu0
        %v1378 = vpop.trf.xlu0
        %v1379 = vpop.trf.xlu0
        %v1380 = vpop.trf.xlu0
        %v1381 = vpop.trf.xlu0
        %v1382 = vpop.trf.xlu0
        %1383 = vxpose.xlu0.b32.start [1/16] %v594, 128
        %1384 = vxpose.xlu0.b32.cont [2/16] 0.0, 128
        %1385 = vxpose.xlu0.b32.cont [3/16] 0.0, 128
        %1386 = vxpose.xlu0.b32.cont [4/16] 0.0, 128
        %1387 = vxpose.xlu0.b32.cont [5/16] 0.0, 128
        %1388 = vxpose.xlu0.b32.cont [6/16] 0.0, 128
        %1389 = vxpose.xlu0.b32.cont [7/16] 0.0, 128
        %1390 = vxpose.xlu0.b32.cont [8/16] 0.0, 128
        %1391 = vxpose.xlu0.b32.cont [9/16] 0.0, 128
        %1392 = vxpose.xlu0.b32.cont [10/16] 0.0, 128
        %1393 = vxpose.xlu0.b32.cont [11/16] 0.0, 128
        %1394 = vxpose.xlu0.b32.cont [12/16] 0.0, 128
        %1395 = vxpose.xlu0.b32.cont [13/16] 0.0, 128
        %1396 = vxpose.xlu0.b32.cont [14/16] 0.0, 128
        %1397 = vxpose.xlu0.b32.cont [15/16] 0.0, 128
        %1398 = vxpose.xlu0.b32.end [16/16] 0.0, 128
        %v1399 = vpop.trf.xlu0
        %v1400 = vpop.trf.xlu0
        %v1401 = vpop.trf.xlu0
        %v1402 = vpop.trf.xlu0
        %v1403 = vpop.trf.xlu0
        %v1404 = vpop.trf.xlu0
        %v1405 = vpop.trf.xlu0
        %v1406 = vpop.trf.xlu0
        %v1407 = vpop.trf.xlu0
        %v1408 = vpop.trf.xlu0
        %v1409 = vpop.trf.xlu0
        %v1410 = vpop.trf.xlu0
        %v1411 = vpop.trf.xlu0
        %v1412 = vpop.trf.xlu0
        %v1413 = vpop.trf.xlu0
        %v1414 = vpop.trf.xlu0
        %1415 = vxpose.xlu0.b32.start [1/16] %v596, 128
        %1416 = vxpose.xlu0.b32.cont [2/16] 0.0, 128
        %1417 = vxpose.xlu0.b32.cont [3/16] 0.0, 128
        %1418 = vxpose.xlu0.b32.cont [4/16] 0.0, 128
        %1419 = vxpose.xlu0.b32.cont [5/16] 0.0, 128
        %1420 = vxpose.xlu0.b32.cont [6/16] 0.0, 128
        %1421 = vxpose.xlu0.b32.cont [7/16] 0.0, 128
        %1422 = vxpose.xlu0.b32.cont [8/16] 0.0, 128
        %1423 = vxpose.xlu0.b32.cont [9/16] 0.0, 128
        %1424 = vxpose.xlu0.b32.cont [10/16] 0.0, 128
        %1425 = vxpose.xlu0.b32.cont [11/16] 0.0, 128
        %1426 = vxpose.xlu0.b32.cont [12/16] 0.0, 128
        %1427 = vxpose.xlu0.b32.cont [13/16] 0.0, 128
        %1428 = vxpose.xlu0.b32.cont [14/16] 0.0, 128
        %1429 = vxpose.xlu0.b32.cont [15/16] 0.0, 128
        %1430 = vxpose.xlu0.b32.end [16/16] 0.0, 128
        %v1431 = vpop.trf.xlu0
        %v1432 = vpop.trf.xlu0
        %v1433 = vpop.trf.xlu0
        %v1434 = vpop.trf.xlu0
        %v1435 = vpop.trf.xlu0
        %v1436 = vpop.trf.xlu0
        %v1437 = vpop.trf.xlu0
        %v1438 = vpop.trf.xlu0
        %v1439 = vpop.trf.xlu0
        %v1440 = vpop.trf.xlu0
        %v1441 = vpop.trf.xlu0
        %v1442 = vpop.trf.xlu0
        %v1443 = vpop.trf.xlu0
        %v1444 = vpop.trf.xlu0
        %v1445 = vpop.trf.xlu0
        %v1446 = vpop.trf.xlu0
        %1447 = vxpose.xlu0.b32.start [1/16] %v598, 128
        %1448 = vxpose.xlu0.b32.cont [2/16] 0.0, 128
        %1449 = vxpose.xlu0.b32.cont [3/16] 0.0, 128
        %1450 = vxpose.xlu0.b32.cont [4/16] 0.0, 128
        %1451 = vxpose.xlu0.b32.cont [5/16] 0.0, 128
        %1452 = vxpose.xlu0.b32.cont [6/16] 0.0, 128
        %1453 = vxpose.xlu0.b32.cont [7/16] 0.0, 128
        %1454 = vxpose.xlu0.b32.cont [8/16] 0.0, 128
        %1455 = vxpose.xlu0.b32.cont [9/16] 0.0, 128
        %1456 = vxpose.xlu0.b32.cont [10/16] 0.0, 128
        %1457 = vxpose.xlu0.b32.cont [11/16] 0.0, 128
        %1458 = vxpose.xlu0.b32.cont [12/16] 0.0, 128
        %1459 = vxpose.xlu0.b32.cont [13/16] 0.0, 128
        %1460 = vxpose.xlu0.b32.cont [14/16] 0.0, 128
        %1461 = vxpose.xlu0.b32.cont [15/16] 0.0, 128
        %1462 = vxpose.xlu0.b32.end [16/16] 0.0, 128
        %v1463 = vpop.trf.xlu0
        %v1464 = vpop.trf.xlu0
        %v1465 = vpop.trf.xlu0
        %v1466 = vpop.trf.xlu0
        %v1467 = vpop.trf.xlu0
        %v1468 = vpop.trf.xlu0
        %v1469 = vpop.trf.xlu0
        %v1470 = vpop.trf.xlu0
        %v1471 = vpop.trf.xlu0
        %v1472 = vpop.trf.xlu0
        %v1473 = vpop.trf.xlu0
        %v1474 = vpop.trf.xlu0
        %v1475 = vpop.trf.xlu0
        %v1476 = vpop.trf.xlu0
        %v1477 = vpop.trf.xlu0
        %v1478 = vpop.trf.xlu0
        %1479 = vxpose.xlu0.b32.start [1/16] %v696, 128
        %1480 = vxpose.xlu0.b32.cont [2/16] 0.0, 128
        %1481 = vxpose.xlu0.b32.cont [3/16] 0.0, 128
        %1482 = vxpose.xlu0.b32.cont [4/16] 0.0, 128
        %1483 = vxpose.xlu0.b32.cont [5/16] 0.0, 128
        %1484 = vxpose.xlu0.b32.cont [6/16] 0.0, 128
        %1485 = vxpose.xlu0.b32.cont [7/16] 0.0, 128
        %1486 = vxpose.xlu0.b32.cont [8/16] 0.0, 128
        %1487 = vxpose.xlu0.b32.cont [9/16] 0.0, 128
        %1488 = vxpose.xlu0.b32.cont [10/16] 0.0, 128
        %1489 = vxpose.xlu0.b32.cont [11/16] 0.0, 128
        %1490 = vxpose.xlu0.b32.cont [12/16] 0.0, 128
        %1491 = vxpose.xlu0.b32.cont [13/16] 0.0, 128
        %1492 = vxpose.xlu0.b32.cont [14/16] 0.0, 128
        %1493 = vxpose.xlu0.b32.cont [15/16] 0.0, 128
        %1494 = vxpose.xlu0.b32.end [16/16] 0.0, 128
        %v1495 = vpop.trf.xlu0
        %v1496 = vpop.trf.xlu0
        %v1497 = vpop.trf.xlu0
        %v1498 = vpop.trf.xlu0
        %v1499 = vpop.trf.xlu0
        %v1500 = vpop.trf.xlu0
        %v1501 = vpop.trf.xlu0
        %v1502 = vpop.trf.xlu0
        %v1503 = vpop.trf.xlu0
        %v1504 = vpop.trf.xlu0
        %v1505 = vpop.trf.xlu0
        %v1506 = vpop.trf.xlu0
        %v1507 = vpop.trf.xlu0
        %v1508 = vpop.trf.xlu0
        %v1509 = vpop.trf.xlu0
        %v1510 = vpop.trf.xlu0
        %1511 = vxpose.xlu0.b32.start [1/16] %v698, 128
        %1512 = vxpose.xlu0.b32.cont [2/16] 0.0, 128
        %1513 = vxpose.xlu0.b32.cont [3/16] 0.0, 128
        %1514 = vxpose.xlu0.b32.cont [4/16] 0.0, 128
        %1515 = vxpose.xlu0.b32.cont [5/16] 0.0, 128
        %1516 = vxpose.xlu0.b32.cont [6/16] 0.0, 128
        %1517 = vxpose.xlu0.b32.cont [7/16] 0.0, 128
        %1518 = vxpose.xlu0.b32.cont [8/16] 0.0, 128
        %1519 = vxpose.xlu0.b32.cont [9/16] 0.0, 128
        %1520 = vxpose.xlu0.b32.cont [10/16] 0.0, 128
        %1521 = vxpose.xlu0.b32.cont [11/16] 0.0, 128
        %1522 = vxpose.xlu0.b32.cont [12/16] 0.0, 128
        %1523 = vxpose.xlu0.b32.cont [13/16] 0.0, 128
        %1524 = vxpose.xlu0.b32.cont [14/16] 0.0, 128
        %1525 = vxpose.xlu0.b32.cont [15/16] 0.0, 128
        %1526 = vxpose.xlu0.b32.end [16/16] 0.0, 128
        %v1527 = vpop.trf.xlu0
        %v1528 = vpop.trf.xlu0
        %v1529 = vpop.trf.xlu0
        %v1530 = vpop.trf.xlu0
        %v1531 = vpop.trf.xlu0
        %v1532 = vpop.trf.xlu0
        %v1533 = vpop.trf.xlu0
        %v1534 = vpop.trf.xlu0
        %v1535 = vpop.trf.xlu0
        %v1536 = vpop.trf.xlu0
        %v1537 = vpop.trf.xlu0
        %v1538 = vpop.trf.xlu0
        %v1539 = vpop.trf.xlu0
        %v1540 = vpop.trf.xlu0
        %v1541 = vpop.trf.xlu0
        %v1542 = vpop.trf.xlu0
        %1543 = vxpose.xlu0.b32.start [1/16] %v700, 128
        %1544 = vxpose.xlu0.b32.cont [2/16] 0.0, 128
        %1545 = vxpose.xlu0.b32.cont [3/16] 0.0, 128
        %1546 = vxpose.xlu0.b32.cont [4/16] 0.0, 128
        %1547 = vxpose.xlu0.b32.cont [5/16] 0.0, 128
        %1548 = vxpose.xlu0.b32.cont [6/16] 0.0, 128
        %1549 = vxpose.xlu0.b32.cont [7/16] 0.0, 128
        %1550 = vxpose.xlu0.b32.cont [8/16] 0.0, 128
        %1551 = vxpose.xlu0.b32.cont [9/16] 0.0, 128
        %1552 = vxpose.xlu0.b32.cont [10/16] 0.0, 128
        %1553 = vxpose.xlu0.b32.cont [11/16] 0.0, 128
        %1554 = vxpose.xlu0.b32.cont [12/16] 0.0, 128
        %1555 = vxpose.xlu0.b32.cont [13/16] 0.0, 128
        %1556 = vxpose.xlu0.b32.cont [14/16] 0.0, 128
        %1557 = vxpose.xlu0.b32.cont [15/16] 0.0, 128
        %1558 = vxpose.xlu0.b32.end [16/16] 0.0, 128
        %v1559 = vpop.trf.xlu0
        %v1560 = vpop.trf.xlu0
        %v1561 = vpop.trf.xlu0
        %v1562 = vpop.trf.xlu0
        %v1563 = vpop.trf.xlu0
        %v1564 = vpop.trf.xlu0
        %v1565 = vpop.trf.xlu0
        %v1566 = vpop.trf.xlu0
        %v1567 = vpop.trf.xlu0
        %v1568 = vpop.trf.xlu0
        %v1569 = vpop.trf.xlu0
        %v1570 = vpop.trf.xlu0
        %v1571 = vpop.trf.xlu0
        %v1572 = vpop.trf.xlu0
        %v1573 = vpop.trf.xlu0
        %v1574 = vpop.trf.xlu0
        %1575 = vxpose.xlu0.b32.start [1/16] %v702, 128
        %1576 = vxpose.xlu0.b32.cont [2/16] 0.0, 128
        %1577 = vxpose.xlu0.b32.cont [3/16] 0.0, 128
        %1578 = vxpose.xlu0.b32.cont [4/16] 0.0, 128
        %1579 = vxpose.xlu0.b32.cont [5/16] 0.0, 128
        %1580 = vxpose.xlu0.b32.cont [6/16] 0.0, 128
        %1581 = vxpose.xlu0.b32.cont [7/16] 0.0, 128
        %1582 = vxpose.xlu0.b32.cont [8/16] 0.0, 128
        %1583 = vxpose.xlu0.b32.cont [9/16] 0.0, 128
        %1584 = vxpose.xlu0.b32.cont [10/16] 0.0, 128
        %1585 = vxpose.xlu0.b32.cont [11/16] 0.0, 128
        %1586 = vxpose.xlu0.b32.cont [12/16] 0.0, 128
        %1587 = vxpose.xlu0.b32.cont [13/16] 0.0, 128
        %1588 = vxpose.xlu0.b32.cont [14/16] 0.0, 128
        %1589 = vxpose.xlu0.b32.cont [15/16] 0.0, 128
        %1590 = vxpose.xlu0.b32.end [16/16] 0.0, 128
        %v1591 = vpop.trf.xlu0
        %v1592 = vpop.trf.xlu0
        %v1593 = vpop.trf.xlu0
        %v1594 = vpop.trf.xlu0
        %v1595 = vpop.trf.xlu0
        %v1596 = vpop.trf.xlu0
        %v1597 = vpop.trf.xlu0
        %v1598 = vpop.trf.xlu0
        %v1599 = vpop.trf.xlu0
        %v1600 = vpop.trf.xlu0
        %v1601 = vpop.trf.xlu0
        %v1602 = vpop.trf.xlu0
        %v1603 = vpop.trf.xlu0
        %v1604 = vpop.trf.xlu0
        %v1605 = vpop.trf.xlu0
        %v1606 = vpop.trf.xlu0
        %1607 = vxpose.xlu0.b32.start [1/16] %v704, 128
        %1608 = vxpose.xlu0.b32.cont [2/16] 0.0, 128
        %1609 = vxpose.xlu0.b32.cont [3/16] 0.0, 128
        %1610 = vxpose.xlu0.b32.cont [4/16] 0.0, 128
        %1611 = vxpose.xlu0.b32.cont [5/16] 0.0, 128
        %1612 = vxpose.xlu0.b32.cont [6/16] 0.0, 128
        %1613 = vxpose.xlu0.b32.cont [7/16] 0.0, 128
        %1614 = vxpose.xlu0.b32.cont [8/16] 0.0, 128
        %1615 = vxpose.xlu0.b32.cont [9/16] 0.0, 128
        %1616 = vxpose.xlu0.b32.cont [10/16] 0.0, 128
        %1617 = vxpose.xlu0.b32.cont [11/16] 0.0, 128
        %1618 = vxpose.xlu0.b32.cont [12/16] 0.0, 128
        %1619 = vxpose.xlu0.b32.cont [13/16] 0.0, 128
        %1620 = vxpose.xlu0.b32.cont [14/16] 0.0, 128
        %1621 = vxpose.xlu0.b32.cont [15/16] 0.0, 128
        %1622 = vxpose.xlu0.b32.end [16/16] 0.0, 128
        %v1623 = vpop.trf.xlu0
        %v1624 = vpop.trf.xlu0
        %v1625 = vpop.trf.xlu0
        %v1626 = vpop.trf.xlu0
        %v1627 = vpop.trf.xlu0
        %v1628 = vpop.trf.xlu0
        %v1629 = vpop.trf.xlu0
        %v1630 = vpop.trf.xlu0
        %v1631 = vpop.trf.xlu0
        %v1632 = vpop.trf.xlu0
        %v1633 = vpop.trf.xlu0
        %v1634 = vpop.trf.xlu0
        %v1635 = vpop.trf.xlu0
        %v1636 = vpop.trf.xlu0
        %v1637 = vpop.trf.xlu0
        %v1638 = vpop.trf.xlu0
        %1639 = vxpose.xlu0.b32.start [1/16] %v706, 128
        %1640 = vxpose.xlu0.b32.cont [2/16] 0.0, 128
        %1641 = vxpose.xlu0.b32.cont [3/16] 0.0, 128
        %1642 = vxpose.xlu0.b32.cont [4/16] 0.0, 128
        %1643 = vxpose.xlu0.b32.cont [5/16] 0.0, 128
        %1644 = vxpose.xlu0.b32.cont [6/16] 0.0, 128
        %1645 = vxpose.xlu0.b32.cont [7/16] 0.0, 128
        %1646 = vxpose.xlu0.b32.cont [8/16] 0.0, 128
        %1647 = vxpose.xlu0.b32.cont [9/16] 0.0, 128
        %1648 = vxpose.xlu0.b32.cont [10/16] 0.0, 128
        %1649 = vxpose.xlu0.b32.cont [11/16] 0.0, 128
        %1650 = vxpose.xlu0.b32.cont [12/16] 0.0, 128
        %1651 = vxpose.xlu0.b32.cont [13/16] 0.0, 128
        %1652 = vxpose.xlu0.b32.cont [14/16] 0.0, 128
        %1653 = vxpose.xlu0.b32.cont [15/16] 0.0, 128
        %1654 = vxpose.xlu0.b32.end [16/16] 0.0, 128
        %v1655 = vpop.trf.xlu0
        %v1656 = vpop.trf.xlu0
        %v1657 = vpop.trf.xlu0
        %v1658 = vpop.trf.xlu0
        %v1659 = vpop.trf.xlu0
        %v1660 = vpop.trf.xlu0
        %v1661 = vpop.trf.xlu0
        %v1662 = vpop.trf.xlu0
        %v1663 = vpop.trf.xlu0
        %v1664 = vpop.trf.xlu0
        %v1665 = vpop.trf.xlu0
        %v1666 = vpop.trf.xlu0
        %v1667 = vpop.trf.xlu0
        %v1668 = vpop.trf.xlu0
        %v1669 = vpop.trf.xlu0
        %v1670 = vpop.trf.xlu0
        %1671 = vxpose.xlu0.b32.start [1/16] %v708, 128
        %1672 = vxpose.xlu0.b32.cont [2/16] 0.0, 128
        %1673 = vxpose.xlu0.b32.cont [3/16] 0.0, 128
        %1674 = vxpose.xlu0.b32.cont [4/16] 0.0, 128
        %1675 = vxpose.xlu0.b32.cont [5/16] 0.0, 128
        %1676 = vxpose.xlu0.b32.cont [6/16] 0.0, 128
        %1677 = vxpose.xlu0.b32.cont [7/16] 0.0, 128
        %1678 = vxpose.xlu0.b32.cont [8/16] 0.0, 128
        %1679 = vxpose.xlu0.b32.cont [9/16] 0.0, 128
        %1680 = vxpose.xlu0.b32.cont [10/16] 0.0, 128
        %1681 = vxpose.xlu0.b32.cont [11/16] 0.0, 128
        %1682 = vxpose.xlu0.b32.cont [12/16] 0.0, 128
        %1683 = vxpose.xlu0.b32.cont [13/16] 0.0, 128
        %1684 = vxpose.xlu0.b32.cont [14/16] 0.0, 128
        %1685 = vxpose.xlu0.b32.cont [15/16] 0.0, 128
        %1686 = vxpose.xlu0.b32.end [16/16] 0.0, 128
        %v1687 = vpop.trf.xlu0
        %v1688 = vpop.trf.xlu0
        %v1689 = vpop.trf.xlu0
        %v1690 = vpop.trf.xlu0
        %v1691 = vpop.trf.xlu0
        %v1692 = vpop.trf.xlu0
        %v1693 = vpop.trf.xlu0
        %v1694 = vpop.trf.xlu0
        %v1695 = vpop.trf.xlu0
        %v1696 = vpop.trf.xlu0
        %v1697 = vpop.trf.xlu0
        %v1698 = vpop.trf.xlu0
        %v1699 = vpop.trf.xlu0
        %v1700 = vpop.trf.xlu0
        %v1701 = vpop.trf.xlu0
        %v1702 = vpop.trf.xlu0
        %1703 = vxpose.xlu0.b32.start [1/16] %v710, 128
        %1704 = vxpose.xlu0.b32.cont [2/16] 0.0, 128
        %1705 = vxpose.xlu0.b32.cont [3/16] 0.0, 128
        %1706 = vxpose.xlu0.b32.cont [4/16] 0.0, 128
        %1707 = vxpose.xlu0.b32.cont [5/16] 0.0, 128
        %1708 = vxpose.xlu0.b32.cont [6/16] 0.0, 128
        %1709 = vxpose.xlu0.b32.cont [7/16] 0.0, 128
        %1710 = vxpose.xlu0.b32.cont [8/16] 0.0, 128
        %1711 = vxpose.xlu0.b32.cont [9/16] 0.0, 128
        %1712 = vxpose.xlu0.b32.cont [10/16] 0.0, 128
        %1713 = vxpose.xlu0.b32.cont [11/16] 0.0, 128
        %1714 = vxpose.xlu0.b32.cont [12/16] 0.0, 128
        %1715 = vxpose.xlu0.b32.cont [13/16] 0.0, 128
        %1716 = vxpose.xlu0.b32.cont [14/16] 0.0, 128
        %1717 = vxpose.xlu0.b32.cont [15/16] 0.0, 128
        %1718 = vxpose.xlu0.b32.end [16/16] 0.0, 128
        %v1719 = vpop.trf.xlu0
        %v1720 = vpop.trf.xlu0
        %v1721 = vpop.trf.xlu0
        %v1722 = vpop.trf.xlu0
        %v1723 = vpop.trf.xlu0
        %v1724 = vpop.trf.xlu0
        %v1725 = vpop.trf.xlu0
        %v1726 = vpop.trf.xlu0
        %v1727 = vpop.trf.xlu0
        %v1728 = vpop.trf.xlu0
        %v1729 = vpop.trf.xlu0
        %v1730 = vpop.trf.xlu0
        %v1731 = vpop.trf.xlu0
        %v1732 = vpop.trf.xlu0
        %v1733 = vpop.trf.xlu0
        %v1734 = vpop.trf.xlu0
        %v1735 = vrot.slane %v791, 4
        %v1736 = vsel %vm263, %v1735, %v727
        %v1738 = vunpack.c.l.s4 1983009808
        %v1739 = vunpack.c.0.s8 %v1738
        %v1740 = vperm.slane %v1736, %v1739
        %v1741 = vrot.slane %v823, 4
        %v1742 = vsel %vm263, %v1741, %v759
        %v1744 = vunpack.c.l.s4 1983009808
        %v1745 = vunpack.c.0.s8 %v1744
        %v1746 = vperm.slane %v1742, %v1745
        %v1747 = vrot.slane %v919, 4
        %v1748 = vsel %vm263, %v1747, %v855
        %v1750 = vunpack.c.l.s4 1983009808
        %v1751 = vunpack.c.0.s8 %v1750
        %v1752 = vperm.slane %v1748, %v1751
        %v1753 = vrot.slane %v951, 4
        %v1754 = vsel %vm263, %v1753, %v887
        %v1756 = vunpack.c.l.s4 1983009808
        %v1757 = vunpack.c.0.s8 %v1756
        %v1758 = vperm.slane %v1754, %v1757
        %v1759 = vrot.slane %v1746, 4
        %v1760 = vsel %vm263, %v1759, %v1740
        %v1762 = vunpack.c.l.s4 1934713408
        %v1763 = vunpack.c.0.s8 %v1762
        %v1764 = vperm.slane %v1760, %v1763
        %v1765 = vrot.slane %v1758, 4
        %v1766 = vsel %vm263, %v1765, %v1752
        %v1768 = vunpack.c.l.s4 1934713408
        %v1769 = vunpack.c.0.s8 %v1768
        %v1770 = vperm.slane %v1766, %v1769
        %v1771 = vrot.slane %v1770, 4
        %v1772 = vsel %vm263, %v1771, %v1764
        %v1773 = vrot.slane %v1764, 4
        %v1774 = vsel %vm263, %v1770, %v1773
        %v1775 = vrot.slane %v1047, 4
        %v1776 = vsel %vm263, %v1775, %v983
        %v1778 = vunpack.c.l.s4 1983009808
        %v1779 = vunpack.c.0.s8 %v1778
        %v1780 = vperm.slane %v1776, %v1779
        %v1781 = vrot.slane %v1079, 4
        %v1782 = vsel %vm263, %v1781, %v1015
        %v1784 = vunpack.c.l.s4 1983009808
        %v1785 = vunpack.c.0.s8 %v1784
        %v1786 = vperm.slane %v1782, %v1785
        %v1787 = vrot.slane %v1175, 4
        %v1788 = vsel %vm263, %v1787, %v1111
        %v1790 = vunpack.c.l.s4 1983009808
        %v1791 = vunpack.c.0.s8 %v1790
        %v1792 = vperm.slane %v1788, %v1791
        %v1793 = vrot.slane %v1207, 4
        %v1794 = vsel %vm263, %v1793, %v1143
        %v1796 = vunpack.c.l.s4 1983009808
        %v1797 = vunpack.c.0.s8 %v1796
        %v1798 = vperm.slane %v1794, %v1797
        %v1799 = vrot.slane %v1786, 4
        %v1800 = vsel %vm263, %v1799, %v1780
        %v1802 = vunpack.c.l.s4 1934713408
        %v1803 = vunpack.c.0.s8 %v1802
        %v1804 = vperm.slane %v1800, %v1803
        %v1805 = vrot.slane %v1798, 4
        %v1806 = vsel %vm263, %v1805, %v1792
        %v1808 = vunpack.c.l.s4 1934713408
        %v1809 = vunpack.c.0.s8 %v1808
        %v1810 = vperm.slane %v1806, %v1809
        %v1811 = vrot.slane %v1810, 4
        %v1812 = vsel %vm263, %v1811, %v1804
        %v1813 = vrot.slane %v1804, 4
        %v1814 = vsel %vm263, %v1810, %v1813
        %v1815 = vrot.slane %v1303, 4
        %v1816 = vsel %vm263, %v1815, %v1239
        %v1818 = vunpack.c.l.s4 1983009808
        %v1819 = vunpack.c.0.s8 %v1818
        %v1820 = vperm.slane %v1816, %v1819
        %v1821 = vrot.slane %v1335, 4
        %v1822 = vsel %vm263, %v1821, %v1271
        %v1824 = vunpack.c.l.s4 1983009808
        %v1825 = vunpack.c.0.s8 %v1824
        %v1826 = vperm.slane %v1822, %v1825
        %v1827 = vrot.slane %v1431, 4
        %v1828 = vsel %vm263, %v1827, %v1367
        %v1830 = vunpack.c.l.s4 1983009808
        %v1831 = vunpack.c.0.s8 %v1830
        %v1832 = vperm.slane %v1828, %v1831
        %v1833 = vrot.slane %v1463, 4
        %v1834 = vsel %vm263, %v1833, %v1399
        %v1836 = vunpack.c.l.s4 1983009808
        %v1837 = vunpack.c.0.s8 %v1836
        %v1838 = vperm.slane %v1834, %v1837
        %v1839 = vrot.slane %v1826, 4
        %v1840 = vsel %vm263, %v1839, %v1820
        %v1842 = vunpack.c.l.s4 1934713408
        %v1843 = vunpack.c.0.s8 %v1842
        %v1844 = vperm.slane %v1840, %v1843
        %v1845 = vrot.slane %v1838, 4
        %v1846 = vsel %vm263, %v1845, %v1832
        %v1848 = vunpack.c.l.s4 1934713408
        %v1849 = vunpack.c.0.s8 %v1848
        %v1850 = vperm.slane %v1846, %v1849
        %v1851 = vrot.slane %v1850, 4
        %v1852 = vsel %vm263, %v1851, %v1844
        %v1853 = vrot.slane %v1844, 4
        %v1854 = vsel %vm263, %v1850, %v1853
        %v1855 = vrot.slane %v1559, 4
        %v1856 = vsel %vm263, %v1855, %v1495
        %v1858 = vunpack.c.l.s4 1983009808
        %v1859 = vunpack.c.0.s8 %v1858
        %v1860 = vperm.slane %v1856, %v1859
        %v1861 = vrot.slane %v1591, 4
        %v1862 = vsel %vm263, %v1861, %v1527
        %v1864 = vunpack.c.l.s4 1983009808
        %v1865 = vunpack.c.0.s8 %v1864
        %v1866 = vperm.slane %v1862, %v1865
        %v1867 = vrot.slane %v1687, 4
        %v1868 = vsel %vm263, %v1867, %v1623
        %v1870 = vunpack.c.l.s4 1983009808
        %v1871 = vunpack.c.0.s8 %v1870
        %v1872 = vperm.slane %v1868, %v1871
        %v1873 = vrot.slane %v1719, 4
        %v1874 = vsel %vm263, %v1873, %v1655
        %v1876 = vunpack.c.l.s4 1983009808
        %v1877 = vunpack.c.0.s8 %v1876
        %v1878 = vperm.slane %v1874, %v1877
        %v1879 = vrot.slane %v1866, 4
        %v1880 = vsel %vm263, %v1879, %v1860
        %v1882 = vunpack.c.l.s4 1934713408
        %v1883 = vunpack.c.0.s8 %v1882
        %v1884 = vperm.slane %v1880, %v1883
        %v1885 = vrot.slane %v1878, 4
        %v1886 = vsel %vm263, %v1885, %v1872
        %v1888 = vunpack.c.l.s4 1934713408
        %v1889 = vunpack.c.0.s8 %v1888
        %v1890 = vperm.slane %v1886, %v1889
        %v1891 = vrot.slane %v1890, 4
        %v1892 = vsel %vm263, %v1891, %v1884
        %v1893 = vrot.slane %v1884, 4
        %v1894 = vsel %vm263, %v1890, %v1893
        %vm1895 = vcmask 64512
        %1896 = vst.msk [vmem:[%s166] sm:$0xff] %vm1895, %v1772
        %1897 = vst.msk [vmem:[%s166 + $0x8] sm:$0xff] %vm1895, %v1812
        %1898 = vst.msk [vmem:[%s166 + $0x10] sm:$0xff] %vm1895, %v1852
        %1899 = vst.msk [vmem:[%s166 + $0x18] sm:$0xff] %vm1895, %v1892
        %s1900 = scalar_lea.vmem %s166, 32 [#allocation5]
        %1901 = vst.msk [vmem:[%s1900] sm:$0xff] %vm1895, %v1774
        %1902 = vst.msk [vmem:[%s1900 + $0x8] sm:$0xff] %vm1895, %v1814
        %1903 = vst.msk [vmem:[%s1900 + $0x10] sm:$0xff] %vm1895, %v1854
        %1904 = vst.msk [vmem:[%s1900 + $0x18] sm:$0xff] %vm1895, %v1894
        %v1905 = vld [vmem:[%s147] sm:$0xff]
        %v1906 = vld [vmem:[%s147 + $0x8] sm:$0xff]
        %v1907 = vld [vmem:[%s147 + $0x10] sm:$0xff]
        %v1908 = vld [vmem:[%s147 + $0x18] sm:$0xff]
        %1913 = vrot.lane.b32.xlu0 %v1905, 126
        %v1914 = vpop.permute.xlu0 %1913
        %1915 = vrot.lane.b32.xlu0 %v1906, 126
        %v1916 = vpop.permute.xlu0 %1915
        %1917 = vrot.lane.b32.xlu0 %v1907, 126
        %v1918 = vpop.permute.xlu0 %1917
        %1919 = vrot.lane.b32.xlu0 %v1908, 126
        %v1920 = vpop.permute.xlu0 %1919
        %1921 = vrot.lane.b32.xlu0 %v1905, 124
        %v1922 = vpop.permute.xlu0 %1921
        %1923 = vrot.lane.b32.xlu0 %v1906, 124
        %v1924 = vpop.permute.xlu0 %1923
        %1925 = vrot.lane.b32.xlu0 %v1907, 124
        %v1926 = vpop.permute.xlu0 %1925
        %1927 = vrot.lane.b32.xlu0 %v1908, 124
        %v1928 = vpop.permute.xlu0 %1927
        %1929 = vrot.lane.b32.xlu0 %v1905, 122
        %v1930 = vpop.permute.xlu0 %1929
        %1931 = vrot.lane.b32.xlu0 %v1906, 122
        %v1932 = vpop.permute.xlu0 %1931
        %1933 = vrot.lane.b32.xlu0 %v1907, 122
        %v1934 = vpop.permute.xlu0 %1933
        %1935 = vrot.lane.b32.xlu0 %v1908, 122
        %v1936 = vpop.permute.xlu0 %1935
        %1937 = vrot.lane.b32.xlu0 %v1905, 120
        %v1938 = vpop.permute.xlu0 %1937
        %1939 = vrot.lane.b32.xlu0 %v1906, 120
        %v1940 = vpop.permute.xlu0 %1939
        %1941 = vrot.lane.b32.xlu0 %v1907, 120
        %v1942 = vpop.permute.xlu0 %1941
        %1943 = vrot.lane.b32.xlu0 %v1908, 120
        %v1944 = vpop.permute.xlu0 %1943
        %1945 = vrot.lane.b32.xlu0 %v1905, 118
        %v1946 = vpop.permute.xlu0 %1945
        %1947 = vrot.lane.b32.xlu0 %v1906, 118
        %v1948 = vpop.permute.xlu0 %1947
        %1949 = vrot.lane.b32.xlu0 %v1907, 118
        %v1950 = vpop.permute.xlu0 %1949
        %1951 = vrot.lane.b32.xlu0 %v1908, 118
        %v1952 = vpop.permute.xlu0 %1951
        %1953 = vrot.lane.b32.xlu0 %v1905, 116
        %v1954 = vpop.permute.xlu0 %1953
        %1955 = vrot.lane.b32.xlu0 %v1906, 116
        %v1956 = vpop.permute.xlu0 %1955
        %1957 = vrot.lane.b32.xlu0 %v1907, 116
        %v1958 = vpop.permute.xlu0 %1957
        %1959 = vrot.lane.b32.xlu0 %v1908, 116
        %v1960 = vpop.permute.xlu0 %1959
        %1961 = vrot.lane.b32.xlu0 %v1905, 114
        %v1962 = vpop.permute.xlu0 %1961
        %1963 = vrot.lane.b32.xlu0 %v1906, 114
        %v1964 = vpop.permute.xlu0 %1963
        %1965 = vrot.lane.b32.xlu0 %v1907, 114
        %v1966 = vpop.permute.xlu0 %1965
        %1967 = vrot.lane.b32.xlu0 %v1908, 114
        %v1968 = vpop.permute.xlu0 %1967
        %1969 = vrot.lane.b32.xlu0 %v1905, 112
        %v1970 = vpop.permute.xlu0 %1969
        %1971 = vrot.lane.b32.xlu0 %v1914, 112
        %v1972 = vpop.permute.xlu0 %1971
        %1973 = vrot.lane.b32.xlu0 %v1922, 112
        %v1974 = vpop.permute.xlu0 %1973
        %1975 = vrot.lane.b32.xlu0 %v1930, 112
        %v1976 = vpop.permute.xlu0 %1975
        %1977 = vrot.lane.b32.xlu0 %v1938, 112
        %v1978 = vpop.permute.xlu0 %1977
        %1979 = vrot.lane.b32.xlu0 %v1946, 112
        %v1980 = vpop.permute.xlu0 %1979
        %1981 = vrot.lane.b32.xlu0 %v1954, 112
        %v1982 = vpop.permute.xlu0 %1981
        %1983 = vrot.lane.b32.xlu0 %v1962, 112
        %v1984 = vpop.permute.xlu0 %1983
        %1985 = vrot.lane.b32.xlu0 %v1906, 112
        %v1986 = vpop.permute.xlu0 %1985
        %1987 = vrot.lane.b32.xlu0 %v1916, 112
        %v1988 = vpop.permute.xlu0 %1987
        %1989 = vrot.lane.b32.xlu0 %v1924, 112
        %v1990 = vpop.permute.xlu0 %1989
        %1991 = vrot.lane.b32.xlu0 %v1932, 112
        %v1992 = vpop.permute.xlu0 %1991
        %1993 = vrot.lane.b32.xlu0 %v1940, 112
        %v1994 = vpop.permute.xlu0 %1993
        %1995 = vrot.lane.b32.xlu0 %v1948, 112
        %v1996 = vpop.permute.xlu0 %1995
        %1997 = vrot.lane.b32.xlu0 %v1956, 112
        %v1998 = vpop.permute.xlu0 %1997
        %1999 = vrot.lane.b32.xlu0 %v1964, 112
        %v2000 = vpop.permute.xlu0 %1999
        %2001 = vrot.lane.b32.xlu0 %v1907, 112
        %v2002 = vpop.permute.xlu0 %2001
        %2003 = vrot.lane.b32.xlu0 %v1918, 112
        %v2004 = vpop.permute.xlu0 %2003
        %2005 = vrot.lane.b32.xlu0 %v1926, 112
        %v2006 = vpop.permute.xlu0 %2005
        %2007 = vrot.lane.b32.xlu0 %v1934, 112
        %v2008 = vpop.permute.xlu0 %2007
        %2009 = vrot.lane.b32.xlu0 %v1942, 112
        %v2010 = vpop.permute.xlu0 %2009
        %2011 = vrot.lane.b32.xlu0 %v1950, 112
        %v2012 = vpop.permute.xlu0 %2011
        %2013 = vrot.lane.b32.xlu0 %v1958, 112
        %v2014 = vpop.permute.xlu0 %2013
        %2015 = vrot.lane.b32.xlu0 %v1966, 112
        %v2016 = vpop.permute.xlu0 %2015
        %2017 = vrot.lane.b32.xlu0 %v1908, 112
        %v2018 = vpop.permute.xlu0 %2017
        %2019 = vrot.lane.b32.xlu0 %v1920, 112
        %v2020 = vpop.permute.xlu0 %2019
        %2021 = vrot.lane.b32.xlu0 %v1928, 112
        %v2022 = vpop.permute.xlu0 %2021
        %2023 = vrot.lane.b32.xlu0 %v1936, 112
        %v2024 = vpop.permute.xlu0 %2023
        %2025 = vrot.lane.b32.xlu0 %v1944, 112
        %v2026 = vpop.permute.xlu0 %2025
        %2027 = vrot.lane.b32.xlu0 %v1952, 112
        %v2028 = vpop.permute.xlu0 %2027
        %2029 = vrot.lane.b32.xlu0 %v1960, 112
        %v2030 = vpop.permute.xlu0 %2029
        %2031 = vrot.lane.b32.xlu0 %v1968, 112
        %v2032 = vpop.permute.xlu0 %2031
        %v2065 = vrot.slane %v1974, 4
        %v2066 = vsel %vm263, %v2065, %v1970
        %v2067 = vrot.slane %v1970, 4
        %v2068 = vsel %vm263, %v1974, %v2067
        %v2070 = vunpack.c.l.s4 1983009808
        %v2071 = vunpack.c.0.s8 %v2070
        %v2072 = vperm.slane %v2066, %v2071
        %v2074 = vunpack.c.l.s4 1983009808
        %v2075 = vunpack.c.0.s8 %v2074
        %v2076 = vperm.slane %v2068, %v2075
        %v2077 = vrot.slane %v1976, 4
        %v2078 = vsel %vm263, %v2077, %v1972
        %v2079 = vrot.slane %v1972, 4
        %v2080 = vsel %vm263, %v1976, %v2079
        %v2082 = vunpack.c.l.s4 1983009808
        %v2083 = vunpack.c.0.s8 %v2082
        %v2084 = vperm.slane %v2078, %v2083
        %v2086 = vunpack.c.l.s4 1983009808
        %v2087 = vunpack.c.0.s8 %v2086
        %v2088 = vperm.slane %v2080, %v2087
        %v2089 = vrot.slane %v1982, 4
        %v2090 = vsel %vm263, %v2089, %v1978
        %v2091 = vrot.slane %v1978, 4
        %v2092 = vsel %vm263, %v1982, %v2091
        %v2094 = vunpack.c.l.s4 1983009808
        %v2095 = vunpack.c.0.s8 %v2094
        %v2096 = vperm.slane %v2090, %v2095
        %v2098 = vunpack.c.l.s4 1983009808
        %v2099 = vunpack.c.0.s8 %v2098
        %v2100 = vperm.slane %v2092, %v2099
        %v2101 = vrot.slane %v1984, 4
        %v2102 = vsel %vm263, %v2101, %v1980
        %v2103 = vrot.slane %v1980, 4
        %v2104 = vsel %vm263, %v1984, %v2103
        %v2106 = vunpack.c.l.s4 1983009808
        %v2107 = vunpack.c.0.s8 %v2106
        %v2108 = vperm.slane %v2102, %v2107
        %v2110 = vunpack.c.l.s4 1983009808
        %v2111 = vunpack.c.0.s8 %v2110
        %v2112 = vperm.slane %v2104, %v2111
        %v2113 = vrot.slane %v2084, 4
        %v2114 = vsel %vm263, %v2113, %v2072
        %v2115 = vrot.slane %v2072, 4
        %v2116 = vsel %vm263, %v2084, %v2115
        %v2118 = vunpack.c.l.s4 1934713408
        %v2119 = vunpack.c.0.s8 %v2118
        %v2120 = vperm.slane %v2114, %v2119
        %v2122 = vunpack.c.l.s4 1934713408
        %v2123 = vunpack.c.0.s8 %v2122
        %v2124 = vperm.slane %v2116, %v2123
        %v2125 = vrot.slane %v2088, 4
        %v2126 = vsel %vm263, %v2125, %v2076
        %v2127 = vrot.slane %v2076, 4
        %v2128 = vsel %vm263, %v2088, %v2127
        %v2130 = vunpack.c.l.s4 1934713408
        %v2131 = vunpack.c.0.s8 %v2130
        %v2132 = vperm.slane %v2126, %v2131
        %v2134 = vunpack.c.l.s4 1934713408
        %v2135 = vunpack.c.0.s8 %v2134
        %v2136 = vperm.slane %v2128, %v2135
        %v2137 = vrot.slane %v2108, 4
        %v2138 = vsel %vm263, %v2137, %v2096
        %v2139 = vrot.slane %v2096, 4
        %v2140 = vsel %vm263, %v2108, %v2139
        %v2142 = vunpack.c.l.s4 1934713408
        %v2143 = vunpack.c.0.s8 %v2142
        %v2144 = vperm.slane %v2138, %v2143
        %v2146 = vunpack.c.l.s4 1934713408
        %v2147 = vunpack.c.0.s8 %v2146
        %v2148 = vperm.slane %v2140, %v2147
        %v2149 = vrot.slane %v2112, 4
        %v2150 = vsel %vm263, %v2149, %v2100
        %v2151 = vrot.slane %v2100, 4
        %v2152 = vsel %vm263, %v2112, %v2151
        %v2154 = vunpack.c.l.s4 1934713408
        %v2155 = vunpack.c.0.s8 %v2154
        %v2156 = vperm.slane %v2150, %v2155
        %v2158 = vunpack.c.l.s4 1934713408
        %v2159 = vunpack.c.0.s8 %v2158
        %v2160 = vperm.slane %v2152, %v2159
        %v2161 = vrot.slane %v2144, 4
        %v2162 = vsel %vm263, %v2161, %v2120
        %v2163 = vrot.slane %v2120, 4
        %v2164 = vsel %vm263, %v2144, %v2163
        %v2165 = vrot.slane %v2148, 4
        %v2166 = vsel %vm263, %v2165, %v2124
        %v2167 = vrot.slane %v2124, 4
        %v2168 = vsel %vm263, %v2148, %v2167
        %v2169 = vrot.slane %v2156, 4
        %v2170 = vsel %vm263, %v2169, %v2132
        %v2171 = vrot.slane %v2132, 4
        %v2172 = vsel %vm263, %v2156, %v2171
        %v2173 = vrot.slane %v2160, 4
        %v2174 = vsel %vm263, %v2173, %v2136
        %v2175 = vrot.slane %v2136, 4
        %v2176 = vsel %vm263, %v2160, %v2175
        %v2177 = vrot.slane %v1990, 4
        %v2178 = vsel %vm263, %v2177, %v1986
        %v2179 = vrot.slane %v1986, 4
        %v2180 = vsel %vm263, %v1990, %v2179
        %v2182 = vunpack.c.l.s4 1983009808
        %v2183 = vunpack.c.0.s8 %v2182
        %v2184 = vperm.slane %v2178, %v2183
        %v2186 = vunpack.c.l.s4 1983009808
        %v2187 = vunpack.c.0.s8 %v2186
        %v2188 = vperm.slane %v2180, %v2187
        %v2189 = vrot.slane %v1992, 4
        %v2190 = vsel %vm263, %v2189, %v1988
        %v2191 = vrot.slane %v1988, 4
        %v2192 = vsel %vm263, %v1992, %v2191
        %v2194 = vunpack.c.l.s4 1983009808
        %v2195 = vunpack.c.0.s8 %v2194
        %v2196 = vperm.slane %v2190, %v2195
        %v2198 = vunpack.c.l.s4 1983009808
        %v2199 = vunpack.c.0.s8 %v2198
        %v2200 = vperm.slane %v2192, %v2199
        %v2201 = vrot.slane %v1998, 4
        %v2202 = vsel %vm263, %v2201, %v1994
        %v2203 = vrot.slane %v1994, 4
        %v2204 = vsel %vm263, %v1998, %v2203
        %v2206 = vunpack.c.l.s4 1983009808
        %v2207 = vunpack.c.0.s8 %v2206
        %v2208 = vperm.slane %v2202, %v2207
        %v2210 = vunpack.c.l.s4 1983009808
        %v2211 = vunpack.c.0.s8 %v2210
        %v2212 = vperm.slane %v2204, %v2211
        %v2213 = vrot.slane %v2000, 4
        %v2214 = vsel %vm263, %v2213, %v1996
        %v2215 = vrot.slane %v1996, 4
        %v2216 = vsel %vm263, %v2000, %v2215
        %v2218 = vunpack.c.l.s4 1983009808
        %v2219 = vunpack.c.0.s8 %v2218
        %v2220 = vperm.slane %v2214, %v2219
        %v2222 = vunpack.c.l.s4 1983009808
        %v2223 = vunpack.c.0.s8 %v2222
        %v2224 = vperm.slane %v2216, %v2223
        %v2225 = vrot.slane %v2196, 4
        %v2226 = vsel %vm263, %v2225, %v2184
        %v2227 = vrot.slane %v2184, 4
        %v2228 = vsel %vm263, %v2196, %v2227
        %v2230 = vunpack.c.l.s4 1934713408
        %v2231 = vunpack.c.0.s8 %v2230
        %v2232 = vperm.slane %v2226, %v2231
        %v2234 = vunpack.c.l.s4 1934713408
        %v2235 = vunpack.c.0.s8 %v2234
        %v2236 = vperm.slane %v2228, %v2235
        %v2237 = vrot.slane %v2200, 4
        %v2238 = vsel %vm263, %v2237, %v2188
        %v2239 = vrot.slane %v2188, 4
        %v2240 = vsel %vm263, %v2200, %v2239
        %v2242 = vunpack.c.l.s4 1934713408
        %v2243 = vunpack.c.0.s8 %v2242
        %v2244 = vperm.slane %v2238, %v2243
        %v2246 = vunpack.c.l.s4 1934713408
        %v2247 = vunpack.c.0.s8 %v2246
        %v2248 = vperm.slane %v2240, %v2247
        %v2249 = vrot.slane %v2220, 4
        %v2250 = vsel %vm263, %v2249, %v2208
        %v2251 = vrot.slane %v2208, 4
        %v2252 = vsel %vm263, %v2220, %v2251
        %v2254 = vunpack.c.l.s4 1934713408
        %v2255 = vunpack.c.0.s8 %v2254
        %v2256 = vperm.slane %v2250, %v2255
        %v2258 = vunpack.c.l.s4 1934713408
        %v2259 = vunpack.c.0.s8 %v2258
        %v2260 = vperm.slane %v2252, %v2259
        %v2261 = vrot.slane %v2224, 4
        %v2262 = vsel %vm263, %v2261, %v2212
        %v2263 = vrot.slane %v2212, 4
        %v2264 = vsel %vm263, %v2224, %v2263
        %v2266 = vunpack.c.l.s4 1934713408
        %v2267 = vunpack.c.0.s8 %v2266
        %v2268 = vperm.slane %v2262, %v2267
        %v2270 = vunpack.c.l.s4 1934713408
        %v2271 = vunpack.c.0.s8 %v2270
        %v2272 = vperm.slane %v2264, %v2271
        %v2273 = vrot.slane %v2256, 4
        %v2274 = vsel %vm263, %v2273, %v2232
        %v2275 = vrot.slane %v2232, 4
        %v2276 = vsel %vm263, %v2256, %v2275
        %v2277 = vrot.slane %v2260, 4
        %v2278 = vsel %vm263, %v2277, %v2236
        %v2279 = vrot.slane %v2236, 4
        %v2280 = vsel %vm263, %v2260, %v2279
        %v2281 = vrot.slane %v2268, 4
        %v2282 = vsel %vm263, %v2281, %v2244
        %v2283 = vrot.slane %v2244, 4
        %v2284 = vsel %vm263, %v2268, %v2283
        %v2285 = vrot.slane %v2272, 4
        %v2286 = vsel %vm263, %v2285, %v2248
        %v2287 = vrot.slane %v2248, 4
        %v2288 = vsel %vm263, %v2272, %v2287
        %v2289 = vrot.slane %v2006, 4
        %v2290 = vsel %vm263, %v2289, %v2002
        %v2291 = vrot.slane %v2002, 4
        %v2292 = vsel %vm263, %v2006, %v2291
        %v2294 = vunpack.c.l.s4 1983009808
        %v2295 = vunpack.c.0.s8 %v2294
        %v2296 = vperm.slane %v2290, %v2295
        %v2298 = vunpack.c.l.s4 1983009808
        %v2299 = vunpack.c.0.s8 %v2298
        %v2300 = vperm.slane %v2292, %v2299
        %v2301 = vrot.slane %v2008, 4
        %v2302 = vsel %vm263, %v2301, %v2004
        %v2303 = vrot.slane %v2004, 4
        %v2304 = vsel %vm263, %v2008, %v2303
        %v2306 = vunpack.c.l.s4 1983009808
        %v2307 = vunpack.c.0.s8 %v2306
        %v2308 = vperm.slane %v2302, %v2307
        %v2310 = vunpack.c.l.s4 1983009808
        %v2311 = vunpack.c.0.s8 %v2310
        %v2312 = vperm.slane %v2304, %v2311
        %v2313 = vrot.slane %v2014, 4
        %v2314 = vsel %vm263, %v2313, %v2010
        %v2315 = vrot.slane %v2010, 4
        %v2316 = vsel %vm263, %v2014, %v2315
        %v2318 = vunpack.c.l.s4 1983009808
        %v2319 = vunpack.c.0.s8 %v2318
        %v2320 = vperm.slane %v2314, %v2319
        %v2322 = vunpack.c.l.s4 1983009808
        %v2323 = vunpack.c.0.s8 %v2322
        %v2324 = vperm.slane %v2316, %v2323
        %v2325 = vrot.slane %v2016, 4
        %v2326 = vsel %vm263, %v2325, %v2012
        %v2327 = vrot.slane %v2012, 4
        %v2328 = vsel %vm263, %v2016, %v2327
        %v2330 = vunpack.c.l.s4 1983009808
        %v2331 = vunpack.c.0.s8 %v2330
        %v2332 = vperm.slane %v2326, %v2331
        %v2334 = vunpack.c.l.s4 1983009808
        %v2335 = vunpack.c.0.s8 %v2334
        %v2336 = vperm.slane %v2328, %v2335
        %v2337 = vrot.slane %v2308, 4
        %v2338 = vsel %vm263, %v2337, %v2296
        %v2339 = vrot.slane %v2296, 4
        %v2340 = vsel %vm263, %v2308, %v2339
        %v2342 = vunpack.c.l.s4 1934713408
        %v2343 = vunpack.c.0.s8 %v2342
        %v2344 = vperm.slane %v2338, %v2343
        %v2346 = vunpack.c.l.s4 1934713408
        %v2347 = vunpack.c.0.s8 %v2346
        %v2348 = vperm.slane %v2340, %v2347
        %v2349 = vrot.slane %v2312, 4
        %v2350 = vsel %vm263, %v2349, %v2300
        %v2351 = vrot.slane %v2300, 4
        %v2352 = vsel %vm263, %v2312, %v2351
        %v2354 = vunpack.c.l.s4 1934713408
        %v2355 = vunpack.c.0.s8 %v2354
        %v2356 = vperm.slane %v2350, %v2355
        %v2358 = vunpack.c.l.s4 1934713408
        %v2359 = vunpack.c.0.s8 %v2358
        %v2360 = vperm.slane %v2352, %v2359
        %v2361 = vrot.slane %v2332, 4
        %v2362 = vsel %vm263, %v2361, %v2320
        %v2363 = vrot.slane %v2320, 4
        %v2364 = vsel %vm263, %v2332, %v2363
        %v2366 = vunpack.c.l.s4 1934713408
        %v2367 = vunpack.c.0.s8 %v2366
        %v2368 = vperm.slane %v2362, %v2367
        %v2370 = vunpack.c.l.s4 1934713408
        %v2371 = vunpack.c.0.s8 %v2370
        %v2372 = vperm.slane %v2364, %v2371
        %v2373 = vrot.slane %v2336, 4
        %v2374 = vsel %vm263, %v2373, %v2324
        %v2375 = vrot.slane %v2324, 4
        %v2376 = vsel %vm263, %v2336, %v2375
        %v2378 = vunpack.c.l.s4 1934713408
        %v2379 = vunpack.c.0.s8 %v2378
        %v2380 = vperm.slane %v2374, %v2379
        %v2382 = vunpack.c.l.s4 1934713408
        %v2383 = vunpack.c.0.s8 %v2382
        %v2384 = vperm.slane %v2376, %v2383
        %v2385 = vrot.slane %v2368, 4
        %v2386 = vsel %vm263, %v2385, %v2344
        %v2387 = vrot.slane %v2344, 4
        %v2388 = vsel %vm263, %v2368, %v2387
        %v2389 = vrot.slane %v2372, 4
        %v2390 = vsel %vm263, %v2389, %v2348
        %v2391 = vrot.slane %v2348, 4
        %v2392 = vsel %vm263, %v2372, %v2391
        %v2393 = vrot.slane %v2380, 4
        %v2394 = vsel %vm263, %v2393, %v2356
        %v2395 = vrot.slane %v2356, 4
        %v2396 = vsel %vm263, %v2380, %v2395
        %v2397 = vrot.slane %v2384, 4
        %v2398 = vsel %vm263, %v2397, %v2360
        %v2399 = vrot.slane %v2360, 4
        %v2400 = vsel %vm263, %v2384, %v2399
        %v2401 = vrot.slane %v2022, 4
        %v2402 = vsel %vm263, %v2401, %v2018
        %v2403 = vrot.slane %v2018, 4
        %v2404 = vsel %vm263, %v2022, %v2403
        %v2406 = vunpack.c.l.s4 1983009808
        %v2407 = vunpack.c.0.s8 %v2406
        %v2408 = vperm.slane %v2402, %v2407
        %v2410 = vunpack.c.l.s4 1983009808
        %v2411 = vunpack.c.0.s8 %v2410
        %v2412 = vperm.slane %v2404, %v2411
        %v2413 = vrot.slane %v2024, 4
        %v2414 = vsel %vm263, %v2413, %v2020
        %v2415 = vrot.slane %v2020, 4
        %v2416 = vsel %vm263, %v2024, %v2415
        %v2418 = vunpack.c.l.s4 1983009808
        %v2419 = vunpack.c.0.s8 %v2418
        %v2420 = vperm.slane %v2414, %v2419
        %v2422 = vunpack.c.l.s4 1983009808
        %v2423 = vunpack.c.0.s8 %v2422
        %v2424 = vperm.slane %v2416, %v2423
        %v2425 = vrot.slane %v2030, 4
        %v2426 = vsel %vm263, %v2425, %v2026
        %v2427 = vrot.slane %v2026, 4
        %v2428 = vsel %vm263, %v2030, %v2427
        %v2430 = vunpack.c.l.s4 1983009808
        %v2431 = vunpack.c.0.s8 %v2430
        %v2432 = vperm.slane %v2426, %v2431
        %v2434 = vunpack.c.l.s4 1983009808
        %v2435 = vunpack.c.0.s8 %v2434
        %v2436 = vperm.slane %v2428, %v2435
        %v2437 = vrot.slane %v2032, 4
        %v2438 = vsel %vm263, %v2437, %v2028
        %v2439 = vrot.slane %v2028, 4
        %v2440 = vsel %vm263, %v2032, %v2439
        %v2442 = vunpack.c.l.s4 1983009808
        %v2443 = vunpack.c.0.s8 %v2442
        %v2444 = vperm.slane %v2438, %v2443
        %v2446 = vunpack.c.l.s4 1983009808
        %v2447 = vunpack.c.0.s8 %v2446
        %v2448 = vperm.slane %v2440, %v2447
        %v2449 = vrot.slane %v2420, 4
        %v2450 = vsel %vm263, %v2449, %v2408
        %v2451 = vrot.slane %v2408, 4
        %v2452 = vsel %vm263, %v2420, %v2451
        %v2454 = vunpack.c.l.s4 1934713408
        %v2455 = vunpack.c.0.s8 %v2454
        %v2456 = vperm.slane %v2450, %v2455
        %v2458 = vunpack.c.l.s4 1934713408
        %v2459 = vunpack.c.0.s8 %v2458
        %v2460 = vperm.slane %v2452, %v2459
        %v2461 = vrot.slane %v2424, 4
        %v2462 = vsel %vm263, %v2461, %v2412
        %v2463 = vrot.slane %v2412, 4
        %v2464 = vsel %vm263, %v2424, %v2463
        %v2466 = vunpack.c.l.s4 1934713408
        %v2467 = vunpack.c.0.s8 %v2466
        %v2468 = vperm.slane %v2462, %v2467
        %v2470 = vunpack.c.l.s4 1934713408
        %v2471 = vunpack.c.0.s8 %v2470
        %v2472 = vperm.slane %v2464, %v2471
        %v2473 = vrot.slane %v2444, 4
        %v2474 = vsel %vm263, %v2473, %v2432
        %v2475 = vrot.slane %v2432, 4
        %v2476 = vsel %vm263, %v2444, %v2475
        %v2478 = vunpack.c.l.s4 1934713408
        %v2479 = vunpack.c.0.s8 %v2478
        %v2480 = vperm.slane %v2474, %v2479
        %v2482 = vunpack.c.l.s4 1934713408
        %v2483 = vunpack.c.0.s8 %v2482
        %v2484 = vperm.slane %v2476, %v2483
        %v2485 = vrot.slane %v2448, 4
        %v2486 = vsel %vm263, %v2485, %v2436
        %v2487 = vrot.slane %v2436, 4
        %v2488 = vsel %vm263, %v2448, %v2487
        %v2490 = vunpack.c.l.s4 1934713408
        %v2491 = vunpack.c.0.s8 %v2490
        %v2492 = vperm.slane %v2486, %v2491
        %v2494 = vunpack.c.l.s4 1934713408
        %v2495 = vunpack.c.0.s8 %v2494
        %v2496 = vperm.slane %v2488, %v2495
        %v2497 = vrot.slane %v2480, 4
        %v2498 = vsel %vm263, %v2497, %v2456
        %v2499 = vrot.slane %v2456, 4
        %v2500 = vsel %vm263, %v2480, %v2499
        %v2501 = vrot.slane %v2484, 4
        %v2502 = vsel %vm263, %v2501, %v2460
        %v2503 = vrot.slane %v2460, 4
        %v2504 = vsel %vm263, %v2484, %v2503
        %v2505 = vrot.slane %v2492, 4
        %v2506 = vsel %vm263, %v2505, %v2468
        %v2507 = vrot.slane %v2468, 4
        %v2508 = vsel %vm263, %v2492, %v2507
        %v2509 = vrot.slane %v2496, 4
        %v2510 = vsel %vm263, %v2509, %v2472
        %v2511 = vrot.slane %v2472, 4
        %v2512 = vsel %vm263, %v2496, %v2511
        %2513 = vxpose.xlu0.b32.start [1/16] %v2162, 128
        %2514 = vxpose.xlu0.b32.cont [2/16] 0.0, 128
        %2515 = vxpose.xlu0.b32.cont [3/16] 0.0, 128
        %2516 = vxpose.xlu0.b32.cont [4/16] 0.0, 128
        %2517 = vxpose.xlu0.b32.cont [5/16] 0.0, 128
        %2518 = vxpose.xlu0.b32.cont [6/16] 0.0, 128
        %2519 = vxpose.xlu0.b32.cont [7/16] 0.0, 128
        %2520 = vxpose.xlu0.b32.cont [8/16] 0.0, 128
        %2521 = vxpose.xlu0.b32.cont [9/16] 0.0, 128
        %2522 = vxpose.xlu0.b32.cont [10/16] 0.0, 128
        %2523 = vxpose.xlu0.b32.cont [11/16] 0.0, 128
        %2524 = vxpose.xlu0.b32.cont [12/16] 0.0, 128
        %2525 = vxpose.xlu0.b32.cont [13/16] 0.0, 128
        %2526 = vxpose.xlu0.b32.cont [14/16] 0.0, 128
        %2527 = vxpose.xlu0.b32.cont [15/16] 0.0, 128
        %2528 = vxpose.xlu0.b32.end [16/16] 0.0, 128
        %v2529 = vpop.trf.xlu0
        %v2530 = vpop.trf.xlu0
        %v2531 = vpop.trf.xlu0
        %v2532 = vpop.trf.xlu0
        %v2533 = vpop.trf.xlu0
        %v2534 = vpop.trf.xlu0
        %v2535 = vpop.trf.xlu0
        %v2536 = vpop.trf.xlu0
        %v2537 = vpop.trf.xlu0
        %v2538 = vpop.trf.xlu0
        %v2539 = vpop.trf.xlu0
        %v2540 = vpop.trf.xlu0
        %v2541 = vpop.trf.xlu0
        %v2542 = vpop.trf.xlu0
        %v2543 = vpop.trf.xlu0
        %v2544 = vpop.trf.xlu0
        %2545 = vxpose.xlu0.b32.start [1/16] %v2164, 128
        %2546 = vxpose.xlu0.b32.cont [2/16] 0.0, 128
        %2547 = vxpose.xlu0.b32.cont [3/16] 0.0, 128
        %2548 = vxpose.xlu0.b32.cont [4/16] 0.0, 128
        %2549 = vxpose.xlu0.b32.cont [5/16] 0.0, 128
        %2550 = vxpose.xlu0.b32.cont [6/16] 0.0, 128
        %2551 = vxpose.xlu0.b32.cont [7/16] 0.0, 128
        %2552 = vxpose.xlu0.b32.cont [8/16] 0.0, 128
        %2553 = vxpose.xlu0.b32.cont [9/16] 0.0, 128
        %2554 = vxpose.xlu0.b32.cont [10/16] 0.0, 128
        %2555 = vxpose.xlu0.b32.cont [11/16] 0.0, 128
        %2556 = vxpose.xlu0.b32.cont [12/16] 0.0, 128
        %2557 = vxpose.xlu0.b32.cont [13/16] 0.0, 128
        %2558 = vxpose.xlu0.b32.cont [14/16] 0.0, 128
        %2559 = vxpose.xlu0.b32.cont [15/16] 0.0, 128
        %2560 = vxpose.xlu0.b32.end [16/16] 0.0, 128
        %v2561 = vpop.trf.xlu0
        %v2562 = vpop.trf.xlu0
        %v2563 = vpop.trf.xlu0
        %v2564 = vpop.trf.xlu0
        %v2565 = vpop.trf.xlu0
        %v2566 = vpop.trf.xlu0
        %v2567 = vpop.trf.xlu0
        %v2568 = vpop.trf.xlu0
        %v2569 = vpop.trf.xlu0
        %v2570 = vpop.trf.xlu0
        %v2571 = vpop.trf.xlu0
        %v2572 = vpop.trf.xlu0
        %v2573 = vpop.trf.xlu0
        %v2574 = vpop.trf.xlu0
        %v2575 = vpop.trf.xlu0
        %v2576 = vpop.trf.xlu0
        %2577 = vxpose.xlu0.b32.start [1/16] %v2166, 128
        %2578 = vxpose.xlu0.b32.cont [2/16] 0.0, 128
        %2579 = vxpose.xlu0.b32.cont [3/16] 0.0, 128
        %2580 = vxpose.xlu0.b32.cont [4/16] 0.0, 128
        %2581 = vxpose.xlu0.b32.cont [5/16] 0.0, 128
        %2582 = vxpose.xlu0.b32.cont [6/16] 0.0, 128
        %2583 = vxpose.xlu0.b32.cont [7/16] 0.0, 128
        %2584 = vxpose.xlu0.b32.cont [8/16] 0.0, 128
        %2585 = vxpose.xlu0.b32.cont [9/16] 0.0, 128
        %2586 = vxpose.xlu0.b32.cont [10/16] 0.0, 128
        %2587 = vxpose.xlu0.b32.cont [11/16] 0.0, 128
        %2588 = vxpose.xlu0.b32.cont [12/16] 0.0, 128
        %2589 = vxpose.xlu0.b32.cont [13/16] 0.0, 128
        %2590 = vxpose.xlu0.b32.cont [14/16] 0.0, 128
        %2591 = vxpose.xlu0.b32.cont [15/16] 0.0, 128
        %2592 = vxpose.xlu0.b32.end [16/16] 0.0, 128
        %v2593 = vpop.trf.xlu0
        %v2594 = vpop.trf.xlu0
        %v2595 = vpop.trf.xlu0
        %v2596 = vpop.trf.xlu0
        %v2597 = vpop.trf.xlu0
        %v2598 = vpop.trf.xlu0
        %v2599 = vpop.trf.xlu0
        %v2600 = vpop.trf.xlu0
        %v2601 = vpop.trf.xlu0
        %v2602 = vpop.trf.xlu0
        %v2603 = vpop.trf.xlu0
        %v2604 = vpop.trf.xlu0
        %v2605 = vpop.trf.xlu0
        %v2606 = vpop.trf.xlu0
        %v2607 = vpop.trf.xlu0
        %v2608 = vpop.trf.xlu0
        %2609 = vxpose.xlu0.b32.start [1/16] %v2168, 128
        %2610 = vxpose.xlu0.b32.cont [2/16] 0.0, 128
        %2611 = vxpose.xlu0.b32.cont [3/16] 0.0, 128
        %2612 = vxpose.xlu0.b32.cont [4/16] 0.0, 128
        %2613 = vxpose.xlu0.b32.cont [5/16] 0.0, 128
        %2614 = vxpose.xlu0.b32.cont [6/16] 0.0, 128
        %2615 = vxpose.xlu0.b32.cont [7/16] 0.0, 128
        %2616 = vxpose.xlu0.b32.cont [8/16] 0.0, 128
        %2617 = vxpose.xlu0.b32.cont [9/16] 0.0, 128
        %2618 = vxpose.xlu0.b32.cont [10/16] 0.0, 128
        %2619 = vxpose.xlu0.b32.cont [11/16] 0.0, 128
        %2620 = vxpose.xlu0.b32.cont [12/16] 0.0, 128
        %2621 = vxpose.xlu0.b32.cont [13/16] 0.0, 128
        %2622 = vxpose.xlu0.b32.cont [14/16] 0.0, 128
        %2623 = vxpose.xlu0.b32.cont [15/16] 0.0, 128
        %2624 = vxpose.xlu0.b32.end [16/16] 0.0, 128
        %v2625 = vpop.trf.xlu0
        %v2626 = vpop.trf.xlu0
        %v2627 = vpop.trf.xlu0
        %v2628 = vpop.trf.xlu0
        %v2629 = vpop.trf.xlu0
        %v2630 = vpop.trf.xlu0
        %v2631 = vpop.trf.xlu0
        %v2632 = vpop.trf.xlu0
        %v2633 = vpop.trf.xlu0
        %v2634 = vpop.trf.xlu0
        %v2635 = vpop.trf.xlu0
        %v2636 = vpop.trf.xlu0
        %v2637 = vpop.trf.xlu0
        %v2638 = vpop.trf.xlu0
        %v2639 = vpop.trf.xlu0
        %v2640 = vpop.trf.xlu0
        %2641 = vxpose.xlu0.b32.start [1/16] %v2170, 128
        %2642 = vxpose.xlu0.b32.cont [2/16] 0.0, 128
        %2643 = vxpose.xlu0.b32.cont [3/16] 0.0, 128
        %2644 = vxpose.xlu0.b32.cont [4/16] 0.0, 128
        %2645 = vxpose.xlu0.b32.cont [5/16] 0.0, 128
        %2646 = vxpose.xlu0.b32.cont [6/16] 0.0, 128
        %2647 = vxpose.xlu0.b32.cont [7/16] 0.0, 128
        %2648 = vxpose.xlu0.b32.cont [8/16] 0.0, 128
        %2649 = vxpose.xlu0.b32.cont [9/16] 0.0, 128
        %2650 = vxpose.xlu0.b32.cont [10/16] 0.0, 128
        %2651 = vxpose.xlu0.b32.cont [11/16] 0.0, 128
        %2652 = vxpose.xlu0.b32.cont [12/16] 0.0, 128
        %2653 = vxpose.xlu0.b32.cont [13/16] 0.0, 128
        %2654 = vxpose.xlu0.b32.cont [14/16] 0.0, 128
        %2655 = vxpose.xlu0.b32.cont [15/16] 0.0, 128
        %2656 = vxpose.xlu0.b32.end [16/16] 0.0, 128
        %v2657 = vpop.trf.xlu0
        %v2658 = vpop.trf.xlu0
        %v2659 = vpop.trf.xlu0
        %v2660 = vpop.trf.xlu0
        %v2661 = vpop.trf.xlu0
        %v2662 = vpop.trf.xlu0
        %v2663 = vpop.trf.xlu0
        %v2664 = vpop.trf.xlu0
        %v2665 = vpop.trf.xlu0
        %v2666 = vpop.trf.xlu0
        %v2667 = vpop.trf.xlu0
        %v2668 = vpop.trf.xlu0
        %v2669 = vpop.trf.xlu0
        %v2670 = vpop.trf.xlu0
        %v2671 = vpop.trf.xlu0
        %v2672 = vpop.trf.xlu0
        %2673 = vxpose.xlu0.b32.start [1/16] %v2172, 128
        %2674 = vxpose.xlu0.b32.cont [2/16] 0.0, 128
        %2675 = vxpose.xlu0.b32.cont [3/16] 0.0, 128
        %2676 = vxpose.xlu0.b32.cont [4/16] 0.0, 128
        %2677 = vxpose.xlu0.b32.cont [5/16] 0.0, 128
        %2678 = vxpose.xlu0.b32.cont [6/16] 0.0, 128
        %2679 = vxpose.xlu0.b32.cont [7/16] 0.0, 128
        %2680 = vxpose.xlu0.b32.cont [8/16] 0.0, 128
        %2681 = vxpose.xlu0.b32.cont [9/16] 0.0, 128
        %2682 = vxpose.xlu0.b32.cont [10/16] 0.0, 128
        %2683 = vxpose.xlu0.b32.cont [11/16] 0.0, 128
        %2684 = vxpose.xlu0.b32.cont [12/16] 0.0, 128
        %2685 = vxpose.xlu0.b32.cont [13/16] 0.0, 128
        %2686 = vxpose.xlu0.b32.cont [14/16] 0.0, 128
        %2687 = vxpose.xlu0.b32.cont [15/16] 0.0, 128
        %2688 = vxpose.xlu0.b32.end [16/16] 0.0, 128
        %v2689 = vpop.trf.xlu0
        %v2690 = vpop.trf.xlu0
        %v2691 = vpop.trf.xlu0
        %v2692 = vpop.trf.xlu0
        %v2693 = vpop.trf.xlu0
        %v2694 = vpop.trf.xlu0
        %v2695 = vpop.trf.xlu0
        %v2696 = vpop.trf.xlu0
        %v2697 = vpop.trf.xlu0
        %v2698 = vpop.trf.xlu0
        %v2699 = vpop.trf.xlu0
        %v2700 = vpop.trf.xlu0
        %v2701 = vpop.trf.xlu0
        %v2702 = vpop.trf.xlu0
        %v2703 = vpop.trf.xlu0
        %v2704 = vpop.trf.xlu0
        %2705 = vxpose.xlu0.b32.start [1/16] %v2174, 128
        %2706 = vxpose.xlu0.b32.cont [2/16] 0.0, 128
        %2707 = vxpose.xlu0.b32.cont [3/16] 0.0, 128
        %2708 = vxpose.xlu0.b32.cont [4/16] 0.0, 128
        %2709 = vxpose.xlu0.b32.cont [5/16] 0.0, 128
        %2710 = vxpose.xlu0.b32.cont [6/16] 0.0, 128
        %2711 = vxpose.xlu0.b32.cont [7/16] 0.0, 128
        %2712 = vxpose.xlu0.b32.cont [8/16] 0.0, 128
        %2713 = vxpose.xlu0.b32.cont [9/16] 0.0, 128
        %2714 = vxpose.xlu0.b32.cont [10/16] 0.0, 128
        %2715 = vxpose.xlu0.b32.cont [11/16] 0.0, 128
        %2716 = vxpose.xlu0.b32.cont [12/16] 0.0, 128
        %2717 = vxpose.xlu0.b32.cont [13/16] 0.0, 128
        %2718 = vxpose.xlu0.b32.cont [14/16] 0.0, 128
        %2719 = vxpose.xlu0.b32.cont [15/16] 0.0, 128
        %2720 = vxpose.xlu0.b32.end [16/16] 0.0, 128
        %v2721 = vpop.trf.xlu0
        %v2722 = vpop.trf.xlu0
        %v2723 = vpop.trf.xlu0
        %v2724 = vpop.trf.xlu0
        %v2725 = vpop.trf.xlu0
        %v2726 = vpop.trf.xlu0
        %v2727 = vpop.trf.xlu0
        %v2728 = vpop.trf.xlu0
        %v2729 = vpop.trf.xlu0
        %v2730 = vpop.trf.xlu0
        %v2731 = vpop.trf.xlu0
        %v2732 = vpop.trf.xlu0
        %v2733 = vpop.trf.xlu0
        %v2734 = vpop.trf.xlu0
        %v2735 = vpop.trf.xlu0
        %v2736 = vpop.trf.xlu0
        %2737 = vxpose.xlu0.b32.start [1/16] %v2176, 128
        %2738 = vxpose.xlu0.b32.cont [2/16] 0.0, 128
        %2739 = vxpose.xlu0.b32.cont [3/16] 0.0, 128
        %2740 = vxpose.xlu0.b32.cont [4/16] 0.0, 128
        %2741 = vxpose.xlu0.b32.cont [5/16] 0.0, 128
        %2742 = vxpose.xlu0.b32.cont [6/16] 0.0, 128
        %2743 = vxpose.xlu0.b32.cont [7/16] 0.0, 128
        %2744 = vxpose.xlu0.b32.cont [8/16] 0.0, 128
        %2745 = vxpose.xlu0.b32.cont [9/16] 0.0, 128
        %2746 = vxpose.xlu0.b32.cont [10/16] 0.0, 128
        %2747 = vxpose.xlu0.b32.cont [11/16] 0.0, 128
        %2748 = vxpose.xlu0.b32.cont [12/16] 0.0, 128
        %2749 = vxpose.xlu0.b32.cont [13/16] 0.0, 128
        %2750 = vxpose.xlu0.b32.cont [14/16] 0.0, 128
        %2751 = vxpose.xlu0.b32.cont [15/16] 0.0, 128
        %2752 = vxpose.xlu0.b32.end [16/16] 0.0, 128
        %v2753 = vpop.trf.xlu0
        %v2754 = vpop.trf.xlu0
        %v2755 = vpop.trf.xlu0
        %v2756 = vpop.trf.xlu0
        %v2757 = vpop.trf.xlu0
        %v2758 = vpop.trf.xlu0
        %v2759 = vpop.trf.xlu0
        %v2760 = vpop.trf.xlu0
        %v2761 = vpop.trf.xlu0
        %v2762 = vpop.trf.xlu0
        %v2763 = vpop.trf.xlu0
        %v2764 = vpop.trf.xlu0
        %v2765 = vpop.trf.xlu0
        %v2766 = vpop.trf.xlu0
        %v2767 = vpop.trf.xlu0
        %v2768 = vpop.trf.xlu0
        %2769 = vxpose.xlu0.b32.start [1/16] %v2274, 128
        %2770 = vxpose.xlu0.b32.cont [2/16] 0.0, 128
        %2771 = vxpose.xlu0.b32.cont [3/16] 0.0, 128
        %2772 = vxpose.xlu0.b32.cont [4/16] 0.0, 128
        %2773 = vxpose.xlu0.b32.cont [5/16] 0.0, 128
        %2774 = vxpose.xlu0.b32.cont [6/16] 0.0, 128
        %2775 = vxpose.xlu0.b32.cont [7/16] 0.0, 128
        %2776 = vxpose.xlu0.b32.cont [8/16] 0.0, 128
        %2777 = vxpose.xlu0.b32.cont [9/16] 0.0, 128
        %2778 = vxpose.xlu0.b32.cont [10/16] 0.0, 128
        %2779 = vxpose.xlu0.b32.cont [11/16] 0.0, 128
        %2780 = vxpose.xlu0.b32.cont [12/16] 0.0, 128
        %2781 = vxpose.xlu0.b32.cont [13/16] 0.0, 128
        %2782 = vxpose.xlu0.b32.cont [14/16] 0.0, 128
        %2783 = vxpose.xlu0.b32.cont [15/16] 0.0, 128
        %2784 = vxpose.xlu0.b32.end [16/16] 0.0, 128
        %v2785 = vpop.trf.xlu0
        %v2786 = vpop.trf.xlu0
        %v2787 = vpop.trf.xlu0
        %v2788 = vpop.trf.xlu0
        %v2789 = vpop.trf.xlu0
        %v2790 = vpop.trf.xlu0
        %v2791 = vpop.trf.xlu0
        %v2792 = vpop.trf.xlu0
        %v2793 = vpop.trf.xlu0
        %v2794 = vpop.trf.xlu0
        %v2795 = vpop.trf.xlu0
        %v2796 = vpop.trf.xlu0
        %v2797 = vpop.trf.xlu0
        %v2798 = vpop.trf.xlu0
        %v2799 = vpop.trf.xlu0
        %v2800 = vpop.trf.xlu0
        %2801 = vxpose.xlu0.b32.start [1/16] %v2276, 128
        %2802 = vxpose.xlu0.b32.cont [2/16] 0.0, 128
        %2803 = vxpose.xlu0.b32.cont [3/16] 0.0, 128
        %2804 = vxpose.xlu0.b32.cont [4/16] 0.0, 128
        %2805 = vxpose.xlu0.b32.cont [5/16] 0.0, 128
        %2806 = vxpose.xlu0.b32.cont [6/16] 0.0, 128
        %2807 = vxpose.xlu0.b32.cont [7/16] 0.0, 128
        %2808 = vxpose.xlu0.b32.cont [8/16] 0.0, 128
        %2809 = vxpose.xlu0.b32.cont [9/16] 0.0, 128
        %2810 = vxpose.xlu0.b32.cont [10/16] 0.0, 128
        %2811 = vxpose.xlu0.b32.cont [11/16] 0.0, 128
        %2812 = vxpose.xlu0.b32.cont [12/16] 0.0, 128
        %2813 = vxpose.xlu0.b32.cont [13/16] 0.0, 128
        %2814 = vxpose.xlu0.b32.cont [14/16] 0.0, 128
        %2815 = vxpose.xlu0.b32.cont [15/16] 0.0, 128
        %2816 = vxpose.xlu0.b32.end [16/16] 0.0, 128
        %v2817 = vpop.trf.xlu0
        %v2818 = vpop.trf.xlu0
        %v2819 = vpop.trf.xlu0
        %v2820 = vpop.trf.xlu0
        %v2821 = vpop.trf.xlu0
        %v2822 = vpop.trf.xlu0
        %v2823 = vpop.trf.xlu0
        %v2824 = vpop.trf.xlu0
        %v2825 = vpop.trf.xlu0
        %v2826 = vpop.trf.xlu0
        %v2827 = vpop.trf.xlu0
        %v2828 = vpop.trf.xlu0
        %v2829 = vpop.trf.xlu0
        %v2830 = vpop.trf.xlu0
        %v2831 = vpop.trf.xlu0
        %v2832 = vpop.trf.xlu0
        %2833 = vxpose.xlu0.b32.start [1/16] %v2278, 128
        %2834 = vxpose.xlu0.b32.cont [2/16] 0.0, 128
        %2835 = vxpose.xlu0.b32.cont [3/16] 0.0, 128
        %2836 = vxpose.xlu0.b32.cont [4/16] 0.0, 128
        %2837 = vxpose.xlu0.b32.cont [5/16] 0.0, 128
        %2838 = vxpose.xlu0.b32.cont [6/16] 0.0, 128
        %2839 = vxpose.xlu0.b32.cont [7/16] 0.0, 128
        %2840 = vxpose.xlu0.b32.cont [8/16] 0.0, 128
        %2841 = vxpose.xlu0.b32.cont [9/16] 0.0, 128
        %2842 = vxpose.xlu0.b32.cont [10/16] 0.0, 128
        %2843 = vxpose.xlu0.b32.cont [11/16] 0.0, 128
        %2844 = vxpose.xlu0.b32.cont [12/16] 0.0, 128
        %2845 = vxpose.xlu0.b32.cont [13/16] 0.0, 128
        %2846 = vxpose.xlu0.b32.cont [14/16] 0.0, 128
        %2847 = vxpose.xlu0.b32.cont [15/16] 0.0, 128
        %2848 = vxpose.xlu0.b32.end [16/16] 0.0, 128
        %v2849 = vpop.trf.xlu0
        %v2850 = vpop.trf.xlu0
        %v2851 = vpop.trf.xlu0
        %v2852 = vpop.trf.xlu0
        %v2853 = vpop.trf.xlu0
        %v2854 = vpop.trf.xlu0
        %v2855 = vpop.trf.xlu0
        %v2856 = vpop.trf.xlu0
        %v2857 = vpop.trf.xlu0
        %v2858 = vpop.trf.xlu0
        %v2859 = vpop.trf.xlu0
        %v2860 = vpop.trf.xlu0
        %v2861 = vpop.trf.xlu0
        %v2862 = vpop.trf.xlu0
        %v2863 = vpop.trf.xlu0
        %v2864 = vpop.trf.xlu0
        %2865 = vxpose.xlu0.b32.start [1/16] %v2280, 128
        %2866 = vxpose.xlu0.b32.cont [2/16] 0.0, 128
        %2867 = vxpose.xlu0.b32.cont [3/16] 0.0, 128
        %2868 = vxpose.xlu0.b32.cont [4/16] 0.0, 128
        %2869 = vxpose.xlu0.b32.cont [5/16] 0.0, 128
        %2870 = vxpose.xlu0.b32.cont [6/16] 0.0, 128
        %2871 = vxpose.xlu0.b32.cont [7/16] 0.0, 128
        %2872 = vxpose.xlu0.b32.cont [8/16] 0.0, 128
        %2873 = vxpose.xlu0.b32.cont [9/16] 0.0, 128
        %2874 = vxpose.xlu0.b32.cont [10/16] 0.0, 128
        %2875 = vxpose.xlu0.b32.cont [11/16] 0.0, 128
        %2876 = vxpose.xlu0.b32.cont [12/16] 0.0, 128
        %2877 = vxpose.xlu0.b32.cont [13/16] 0.0, 128
        %2878 = vxpose.xlu0.b32.cont [14/16] 0.0, 128
        %2879 = vxpose.xlu0.b32.cont [15/16] 0.0, 128
        %2880 = vxpose.xlu0.b32.end [16/16] 0.0, 128
        %v2881 = vpop.trf.xlu0
        %v2882 = vpop.trf.xlu0
        %v2883 = vpop.trf.xlu0
        %v2884 = vpop.trf.xlu0
        %v2885 = vpop.trf.xlu0
        %v2886 = vpop.trf.xlu0
        %v2887 = vpop.trf.xlu0
        %v2888 = vpop.trf.xlu0
        %v2889 = vpop.trf.xlu0
        %v2890 = vpop.trf.xlu0
        %v2891 = vpop.trf.xlu0
        %v2892 = vpop.trf.xlu0
        %v2893 = vpop.trf.xlu0
        %v2894 = vpop.trf.xlu0
        %v2895 = vpop.trf.xlu0
        %v2896 = vpop.trf.xlu0
        %2897 = vxpose.xlu0.b32.start [1/16] %v2282, 128
        %2898 = vxpose.xlu0.b32.cont [2/16] 0.0, 128
        %2899 = vxpose.xlu0.b32.cont [3/16] 0.0, 128
        %2900 = vxpose.xlu0.b32.cont [4/16] 0.0, 128
        %2901 = vxpose.xlu0.b32.cont [5/16] 0.0, 128
        %2902 = vxpose.xlu0.b32.cont [6/16] 0.0, 128
        %2903 = vxpose.xlu0.b32.cont [7/16] 0.0, 128
        %2904 = vxpose.xlu0.b32.cont [8/16] 0.0, 128
        %2905 = vxpose.xlu0.b32.cont [9/16] 0.0, 128
        %2906 = vxpose.xlu0.b32.cont [10/16] 0.0, 128
        %2907 = vxpose.xlu0.b32.cont [11/16] 0.0, 128
        %2908 = vxpose.xlu0.b32.cont [12/16] 0.0, 128
        %2909 = vxpose.xlu0.b32.cont [13/16] 0.0, 128
        %2910 = vxpose.xlu0.b32.cont [14/16] 0.0, 128
        %2911 = vxpose.xlu0.b32.cont [15/16] 0.0, 128
        %2912 = vxpose.xlu0.b32.end [16/16] 0.0, 128
        %v2913 = vpop.trf.xlu0
        %v2914 = vpop.trf.xlu0
        %v2915 = vpop.trf.xlu0
        %v2916 = vpop.trf.xlu0
        %v2917 = vpop.trf.xlu0
        %v2918 = vpop.trf.xlu0
        %v2919 = vpop.trf.xlu0
        %v2920 = vpop.trf.xlu0
        %v2921 = vpop.trf.xlu0
        %v2922 = vpop.trf.xlu0
        %v2923 = vpop.trf.xlu0
        %v2924 = vpop.trf.xlu0
        %v2925 = vpop.trf.xlu0
        %v2926 = vpop.trf.xlu0
        %v2927 = vpop.trf.xlu0
        %v2928 = vpop.trf.xlu0
        %2929 = vxpose.xlu0.b32.start [1/16] %v2284, 128
        %2930 = vxpose.xlu0.b32.cont [2/16] 0.0, 128
        %2931 = vxpose.xlu0.b32.cont [3/16] 0.0, 128
        %2932 = vxpose.xlu0.b32.cont [4/16] 0.0, 128
        %2933 = vxpose.xlu0.b32.cont [5/16] 0.0, 128
        %2934 = vxpose.xlu0.b32.cont [6/16] 0.0, 128
        %2935 = vxpose.xlu0.b32.cont [7/16] 0.0, 128
        %2936 = vxpose.xlu0.b32.cont [8/16] 0.0, 128
        %2937 = vxpose.xlu0.b32.cont [9/16] 0.0, 128
        %2938 = vxpose.xlu0.b32.cont [10/16] 0.0, 128
        %2939 = vxpose.xlu0.b32.cont [11/16] 0.0, 128
        %2940 = vxpose.xlu0.b32.cont [12/16] 0.0, 128
        %2941 = vxpose.xlu0.b32.cont [13/16] 0.0, 128
        %2942 = vxpose.xlu0.b32.cont [14/16] 0.0, 128
        %2943 = vxpose.xlu0.b32.cont [15/16] 0.0, 128
        %2944 = vxpose.xlu0.b32.end [16/16] 0.0, 128
        %v2945 = vpop.trf.xlu0
        %v2946 = vpop.trf.xlu0
        %v2947 = vpop.trf.xlu0
        %v2948 = vpop.trf.xlu0
        %v2949 = vpop.trf.xlu0
        %v2950 = vpop.trf.xlu0
        %v2951 = vpop.trf.xlu0
        %v2952 = vpop.trf.xlu0
        %v2953 = vpop.trf.xlu0
        %v2954 = vpop.trf.xlu0
        %v2955 = vpop.trf.xlu0
        %v2956 = vpop.trf.xlu0
        %v2957 = vpop.trf.xlu0
        %v2958 = vpop.trf.xlu0
        %v2959 = vpop.trf.xlu0
        %v2960 = vpop.trf.xlu0
        %2961 = vxpose.xlu0.b32.start [1/16] %v2286, 128
        %2962 = vxpose.xlu0.b32.cont [2/16] 0.0, 128
        %2963 = vxpose.xlu0.b32.cont [3/16] 0.0, 128
        %2964 = vxpose.xlu0.b32.cont [4/16] 0.0, 128
        %2965 = vxpose.xlu0.b32.cont [5/16] 0.0, 128
        %2966 = vxpose.xlu0.b32.cont [6/16] 0.0, 128
        %2967 = vxpose.xlu0.b32.cont [7/16] 0.0, 128
        %2968 = vxpose.xlu0.b32.cont [8/16] 0.0, 128
        %2969 = vxpose.xlu0.b32.cont [9/16] 0.0, 128
        %2970 = vxpose.xlu0.b32.cont [10/16] 0.0, 128
        %2971 = vxpose.xlu0.b32.cont [11/16] 0.0, 128
        %2972 = vxpose.xlu0.b32.cont [12/16] 0.0, 128
        %2973 = vxpose.xlu0.b32.cont [13/16] 0.0, 128
        %2974 = vxpose.xlu0.b32.cont [14/16] 0.0, 128
        %2975 = vxpose.xlu0.b32.cont [15/16] 0.0, 128
        %2976 = vxpose.xlu0.b32.end [16/16] 0.0, 128
        %v2977 = vpop.trf.xlu0
        %v2978 = vpop.trf.xlu0
        %v2979 = vpop.trf.xlu0
        %v2980 = vpop.trf.xlu0
        %v2981 = vpop.trf.xlu0
        %v2982 = vpop.trf.xlu0
        %v2983 = vpop.trf.xlu0
        %v2984 = vpop.trf.xlu0
        %v2985 = vpop.trf.xlu0
        %v2986 = vpop.trf.xlu0
        %v2987 = vpop.trf.xlu0
        %v2988 = vpop.trf.xlu0
        %v2989 = vpop.trf.xlu0
        %v2990 = vpop.trf.xlu0
        %v2991 = vpop.trf.xlu0
        %v2992 = vpop.trf.xlu0
        %2993 = vxpose.xlu0.b32.start [1/16] %v2288, 128
        %2994 = vxpose.xlu0.b32.cont [2/16] 0.0, 128
        %2995 = vxpose.xlu0.b32.cont [3/16] 0.0, 128
        %2996 = vxpose.xlu0.b32.cont [4/16] 0.0, 128
        %2997 = vxpose.xlu0.b32.cont [5/16] 0.0, 128
        %2998 = vxpose.xlu0.b32.cont [6/16] 0.0, 128
        %2999 = vxpose.xlu0.b32.cont [7/16] 0.0, 128
        %3000 = vxpose.xlu0.b32.cont [8/16] 0.0, 128
        %3001 = vxpose.xlu0.b32.cont [9/16] 0.0, 128
        %3002 = vxpose.xlu0.b32.cont [10/16] 0.0, 128
        %3003 = vxpose.xlu0.b32.cont [11/16] 0.0, 128
        %3004 = vxpose.xlu0.b32.cont [12/16] 0.0, 128
        %3005 = vxpose.xlu0.b32.cont [13/16] 0.0, 128
        %3006 = vxpose.xlu0.b32.cont [14/16] 0.0, 128
        %3007 = vxpose.xlu0.b32.cont [15/16] 0.0, 128
        %3008 = vxpose.xlu0.b32.end [16/16] 0.0, 128
        %v3009 = vpop.trf.xlu0
        %v3010 = vpop.trf.xlu0
        %v3011 = vpop.trf.xlu0
        %v3012 = vpop.trf.xlu0
        %v3013 = vpop.trf.xlu0
        %v3014 = vpop.trf.xlu0
        %v3015 = vpop.trf.xlu0
        %v3016 = vpop.trf.xlu0
        %v3017 = vpop.trf.xlu0
        %v3018 = vpop.trf.xlu0
        %v3019 = vpop.trf.xlu0
        %v3020 = vpop.trf.xlu0
        %v3021 = vpop.trf.xlu0
        %v3022 = vpop.trf.xlu0
        %v3023 = vpop.trf.xlu0
        %v3024 = vpop.trf.xlu0
        %3025 = vxpose.xlu0.b32.start [1/16] %v2386, 128
        %3026 = vxpose.xlu0.b32.cont [2/16] 0.0, 128
        %3027 = vxpose.xlu0.b32.cont [3/16] 0.0, 128
        %3028 = vxpose.xlu0.b32.cont [4/16] 0.0, 128
        %3029 = vxpose.xlu0.b32.cont [5/16] 0.0, 128
        %3030 = vxpose.xlu0.b32.cont [6/16] 0.0, 128
        %3031 = vxpose.xlu0.b32.cont [7/16] 0.0, 128
        %3032 = vxpose.xlu0.b32.cont [8/16] 0.0, 128
        %3033 = vxpose.xlu0.b32.cont [9/16] 0.0, 128
        %3034 = vxpose.xlu0.b32.cont [10/16] 0.0, 128
        %3035 = vxpose.xlu0.b32.cont [11/16] 0.0, 128
        %3036 = vxpose.xlu0.b32.cont [12/16] 0.0, 128
        %3037 = vxpose.xlu0.b32.cont [13/16] 0.0, 128
        %3038 = vxpose.xlu0.b32.cont [14/16] 0.0, 128
        %3039 = vxpose.xlu0.b32.cont [15/16] 0.0, 128
        %3040 = vxpose.xlu0.b32.end [16/16] 0.0, 128
        %v3041 = vpop.trf.xlu0
        %v3042 = vpop.trf.xlu0
        %v3043 = vpop.trf.xlu0
        %v3044 = vpop.trf.xlu0
        %v3045 = vpop.trf.xlu0
        %v3046 = vpop.trf.xlu0
        %v3047 = vpop.trf.xlu0
        %v3048 = vpop.trf.xlu0
        %v3049 = vpop.trf.xlu0
        %v3050 = vpop.trf.xlu0
        %v3051 = vpop.trf.xlu0
        %v3052 = vpop.trf.xlu0
        %v3053 = vpop.trf.xlu0
        %v3054 = vpop.trf.xlu0
        %v3055 = vpop.trf.xlu0
        %v3056 = vpop.trf.xlu0
        %3057 = vxpose.xlu0.b32.start [1/16] %v2388, 128
        %3058 = vxpose.xlu0.b32.cont [2/16] 0.0, 128
        %3059 = vxpose.xlu0.b32.cont [3/16] 0.0, 128
        %3060 = vxpose.xlu0.b32.cont [4/16] 0.0, 128
        %3061 = vxpose.xlu0.b32.cont [5/16] 0.0, 128
        %3062 = vxpose.xlu0.b32.cont [6/16] 0.0, 128
        %3063 = vxpose.xlu0.b32.cont [7/16] 0.0, 128
        %3064 = vxpose.xlu0.b32.cont [8/16] 0.0, 128
        %3065 = vxpose.xlu0.b32.cont [9/16] 0.0, 128
        %3066 = vxpose.xlu0.b32.cont [10/16] 0.0, 128
        %3067 = vxpose.xlu0.b32.cont [11/16] 0.0, 128
        %3068 = vxpose.xlu0.b32.cont [12/16] 0.0, 128
        %3069 = vxpose.xlu0.b32.cont [13/16] 0.0, 128
        %3070 = vxpose.xlu0.b32.cont [14/16] 0.0, 128
        %3071 = vxpose.xlu0.b32.cont [15/16] 0.0, 128
        %3072 = vxpose.xlu0.b32.end [16/16] 0.0, 128
        %v3073 = vpop.trf.xlu0
        %v3074 = vpop.trf.xlu0
        %v3075 = vpop.trf.xlu0
        %v3076 = vpop.trf.xlu0
        %v3077 = vpop.trf.xlu0
        %v3078 = vpop.trf.xlu0
        %v3079 = vpop.trf.xlu0
        %v3080 = vpop.trf.xlu0
        %v3081 = vpop.trf.xlu0
        %v3082 = vpop.trf.xlu0
        %v3083 = vpop.trf.xlu0
        %v3084 = vpop.trf.xlu0
        %v3085 = vpop.trf.xlu0
        %v3086 = vpop.trf.xlu0
        %v3087 = vpop.trf.xlu0
        %v3088 = vpop.trf.xlu0
        %3089 = vxpose.xlu0.b32.start [1/16] %v2390, 128
        %3090 = vxpose.xlu0.b32.cont [2/16] 0.0, 128
        %3091 = vxpose.xlu0.b32.cont [3/16] 0.0, 128
        %3092 = vxpose.xlu0.b32.cont [4/16] 0.0, 128
        %3093 = vxpose.xlu0.b32.cont [5/16] 0.0, 128
        %3094 = vxpose.xlu0.b32.cont [6/16] 0.0, 128
        %3095 = vxpose.xlu0.b32.cont [7/16] 0.0, 128
        %3096 = vxpose.xlu0.b32.cont [8/16] 0.0, 128
        %3097 = vxpose.xlu0.b32.cont [9/16] 0.0, 128
        %3098 = vxpose.xlu0.b32.cont [10/16] 0.0, 128
        %3099 = vxpose.xlu0.b32.cont [11/16] 0.0, 128
        %3100 = vxpose.xlu0.b32.cont [12/16] 0.0, 128
        %3101 = vxpose.xlu0.b32.cont [13/16] 0.0, 128
        %3102 = vxpose.xlu0.b32.cont [14/16] 0.0, 128
        %3103 = vxpose.xlu0.b32.cont [15/16] 0.0, 128
        %3104 = vxpose.xlu0.b32.end [16/16] 0.0, 128
        %v3105 = vpop.trf.xlu0
        %v3106 = vpop.trf.xlu0
        %v3107 = vpop.trf.xlu0
        %v3108 = vpop.trf.xlu0
        %v3109 = vpop.trf.xlu0
        %v3110 = vpop.trf.xlu0
        %v3111 = vpop.trf.xlu0
        %v3112 = vpop.trf.xlu0
        %v3113 = vpop.trf.xlu0
        %v3114 = vpop.trf.xlu0
        %v3115 = vpop.trf.xlu0
        %v3116 = vpop.trf.xlu0
        %v3117 = vpop.trf.xlu0
        %v3118 = vpop.trf.xlu0
        %v3119 = vpop.trf.xlu0
        %v3120 = vpop.trf.xlu0
        %3121 = vxpose.xlu0.b32.start [1/16] %v2392, 128
        %3122 = vxpose.xlu0.b32.cont [2/16] 0.0, 128
        %3123 = vxpose.xlu0.b32.cont [3/16] 0.0, 128
        %3124 = vxpose.xlu0.b32.cont [4/16] 0.0, 128
        %3125 = vxpose.xlu0.b32.cont [5/16] 0.0, 128
        %3126 = vxpose.xlu0.b32.cont [6/16] 0.0, 128
        %3127 = vxpose.xlu0.b32.cont [7/16] 0.0, 128
        %3128 = vxpose.xlu0.b32.cont [8/16] 0.0, 128
        %3129 = vxpose.xlu0.b32.cont [9/16] 0.0, 128
        %3130 = vxpose.xlu0.b32.cont [10/16] 0.0, 128
        %3131 = vxpose.xlu0.b32.cont [11/16] 0.0, 128
        %3132 = vxpose.xlu0.b32.cont [12/16] 0.0, 128
        %3133 = vxpose.xlu0.b32.cont [13/16] 0.0, 128
        %3134 = vxpose.xlu0.b32.cont [14/16] 0.0, 128
        %3135 = vxpose.xlu0.b32.cont [15/16] 0.0, 128
        %3136 = vxpose.xlu0.b32.end [16/16] 0.0, 128
        %v3137 = vpop.trf.xlu0
        %v3138 = vpop.trf.xlu0
        %v3139 = vpop.trf.xlu0
        %v3140 = vpop.trf.xlu0
        %v3141 = vpop.trf.xlu0
        %v3142 = vpop.trf.xlu0
        %v3143 = vpop.trf.xlu0
        %v3144 = vpop.trf.xlu0
        %v3145 = vpop.trf.xlu0
        %v3146 = vpop.trf.xlu0
        %v3147 = vpop.trf.xlu0
        %v3148 = vpop.trf.xlu0
        %v3149 = vpop.trf.xlu0
        %v3150 = vpop.trf.xlu0
        %v3151 = vpop.trf.xlu0
        %v3152 = vpop.trf.xlu0
        %3153 = vxpose.xlu0.b32.start [1/16] %v2394, 128
        %3154 = vxpose.xlu0.b32.cont [2/16] 0.0, 128
        %3155 = vxpose.xlu0.b32.cont [3/16] 0.0, 128
        %3156 = vxpose.xlu0.b32.cont [4/16] 0.0, 128
        %3157 = vxpose.xlu0.b32.cont [5/16] 0.0, 128
        %3158 = vxpose.xlu0.b32.cont [6/16] 0.0, 128
        %3159 = vxpose.xlu0.b32.cont [7/16] 0.0, 128
        %3160 = vxpose.xlu0.b32.cont [8/16] 0.0, 128
        %3161 = vxpose.xlu0.b32.cont [9/16] 0.0, 128
        %3162 = vxpose.xlu0.b32.cont [10/16] 0.0, 128
        %3163 = vxpose.xlu0.b32.cont [11/16] 0.0, 128
        %3164 = vxpose.xlu0.b32.cont [12/16] 0.0, 128
        %3165 = vxpose.xlu0.b32.cont [13/16] 0.0, 128
        %3166 = vxpose.xlu0.b32.cont [14/16] 0.0, 128
        %3167 = vxpose.xlu0.b32.cont [15/16] 0.0, 128
        %3168 = vxpose.xlu0.b32.end [16/16] 0.0, 128
        %v3169 = vpop.trf.xlu0
        %v3170 = vpop.trf.xlu0
        %v3171 = vpop.trf.xlu0
        %v3172 = vpop.trf.xlu0
        %v3173 = vpop.trf.xlu0
        %v3174 = vpop.trf.xlu0
        %v3175 = vpop.trf.xlu0
        %v3176 = vpop.trf.xlu0
        %v3177 = vpop.trf.xlu0
        %v3178 = vpop.trf.xlu0
        %v3179 = vpop.trf.xlu0
        %v3180 = vpop.trf.xlu0
        %v3181 = vpop.trf.xlu0
        %v3182 = vpop.trf.xlu0
        %v3183 = vpop.trf.xlu0
        %v3184 = vpop.trf.xlu0
        %3185 = vxpose.xlu0.b32.start [1/16] %v2396, 128
        %3186 = vxpose.xlu0.b32.cont [2/16] 0.0, 128
        %3187 = vxpose.xlu0.b32.cont [3/16] 0.0, 128
        %3188 = vxpose.xlu0.b32.cont [4/16] 0.0, 128
        %3189 = vxpose.xlu0.b32.cont [5/16] 0.0, 128
        %3190 = vxpose.xlu0.b32.cont [6/16] 0.0, 128
        %3191 = vxpose.xlu0.b32.cont [7/16] 0.0, 128
        %3192 = vxpose.xlu0.b32.cont [8/16] 0.0, 128
        %3193 = vxpose.xlu0.b32.cont [9/16] 0.0, 128
        %3194 = vxpose.xlu0.b32.cont [10/16] 0.0, 128
        %3195 = vxpose.xlu0.b32.cont [11/16] 0.0, 128
        %3196 = vxpose.xlu0.b32.cont [12/16] 0.0, 128
        %3197 = vxpose.xlu0.b32.cont [13/16] 0.0, 128
        %3198 = vxpose.xlu0.b32.cont [14/16] 0.0, 128
        %3199 = vxpose.xlu0.b32.cont [15/16] 0.0, 128
        %3200 = vxpose.xlu0.b32.end [16/16] 0.0, 128
        %v3201 = vpop.trf.xlu0
        %v3202 = vpop.trf.xlu0
        %v3203 = vpop.trf.xlu0
        %v3204 = vpop.trf.xlu0
        %v3205 = vpop.trf.xlu0
        %v3206 = vpop.trf.xlu0
        %v3207 = vpop.trf.xlu0
        %v3208 = vpop.trf.xlu0
        %v3209 = vpop.trf.xlu0
        %v3210 = vpop.trf.xlu0
        %v3211 = vpop.trf.xlu0
        %v3212 = vpop.trf.xlu0
        %v3213 = vpop.trf.xlu0
        %v3214 = vpop.trf.xlu0
        %v3215 = vpop.trf.xlu0
        %v3216 = vpop.trf.xlu0
        %3217 = vxpose.xlu0.b32.start [1/16] %v2398, 128
        %3218 = vxpose.xlu0.b32.cont [2/16] 0.0, 128
        %3219 = vxpose.xlu0.b32.cont [3/16] 0.0, 128
        %3220 = vxpose.xlu0.b32.cont [4/16] 0.0, 128
        %3221 = vxpose.xlu0.b32.cont [5/16] 0.0, 128
        %3222 = vxpose.xlu0.b32.cont [6/16] 0.0, 128
        %3223 = vxpose.xlu0.b32.cont [7/16] 0.0, 128
        %3224 = vxpose.xlu0.b32.cont [8/16] 0.0, 128
        %3225 = vxpose.xlu0.b32.cont [9/16] 0.0, 128
        %3226 = vxpose.xlu0.b32.cont [10/16] 0.0, 128
        %3227 = vxpose.xlu0.b32.cont [11/16] 0.0, 128
        %3228 = vxpose.xlu0.b32.cont [12/16] 0.0, 128
        %3229 = vxpose.xlu0.b32.cont [13/16] 0.0, 128
        %3230 = vxpose.xlu0.b32.cont [14/16] 0.0, 128
        %3231 = vxpose.xlu0.b32.cont [15/16] 0.0, 128
        %3232 = vxpose.xlu0.b32.end [16/16] 0.0, 128
        %v3233 = vpop.trf.xlu0
        %v3234 = vpop.trf.xlu0
        %v3235 = vpop.trf.xlu0
        %v3236 = vpop.trf.xlu0
        %v3237 = vpop.trf.xlu0
        %v3238 = vpop.trf.xlu0
        %v3239 = vpop.trf.xlu0
        %v3240 = vpop.trf.xlu0
        %v3241 = vpop.trf.xlu0
        %v3242 = vpop.trf.xlu0
        %v3243 = vpop.trf.xlu0
        %v3244 = vpop.trf.xlu0
        %v3245 = vpop.trf.xlu0
        %v3246 = vpop.trf.xlu0
        %v3247 = vpop.trf.xlu0
        %v3248 = vpop.trf.xlu0
        %3249 = vxpose.xlu0.b32.start [1/16] %v2400, 128
        %3250 = vxpose.xlu0.b32.cont [2/16] 0.0, 128
        %3251 = vxpose.xlu0.b32.cont [3/16] 0.0, 128
        %3252 = vxpose.xlu0.b32.cont [4/16] 0.0, 128
        %3253 = vxpose.xlu0.b32.cont [5/16] 0.0, 128
        %3254 = vxpose.xlu0.b32.cont [6/16] 0.0, 128
        %3255 = vxpose.xlu0.b32.cont [7/16] 0.0, 128
        %3256 = vxpose.xlu0.b32.cont [8/16] 0.0, 128
        %3257 = vxpose.xlu0.b32.cont [9/16] 0.0, 128
        %3258 = vxpose.xlu0.b32.cont [10/16] 0.0, 128
        %3259 = vxpose.xlu0.b32.cont [11/16] 0.0, 128
        %3260 = vxpose.xlu0.b32.cont [12/16] 0.0, 128
        %3261 = vxpose.xlu0.b32.cont [13/16] 0.0, 128
        %3262 = vxpose.xlu0.b32.cont [14/16] 0.0, 128
        %3263 = vxpose.xlu0.b32.cont [15/16] 0.0, 128
        %3264 = vxpose.xlu0.b32.end [16/16] 0.0, 128
        %v3265 = vpop.trf.xlu0
        %v3266 = vpop.trf.xlu0
        %v3267 = vpop.trf.xlu0
        %v3268 = vpop.trf.xlu0
        %v3269 = vpop.trf.xlu0
        %v3270 = vpop.trf.xlu0
        %v3271 = vpop.trf.xlu0
        %v3272 = vpop.trf.xlu0
        %v3273 = vpop.trf.xlu0
        %v3274 = vpop.trf.xlu0
        %v3275 = vpop.trf.xlu0
        %v3276 = vpop.trf.xlu0
        %v3277 = vpop.trf.xlu0
        %v3278 = vpop.trf.xlu0
        %v3279 = vpop.trf.xlu0
        %v3280 = vpop.trf.xlu0
        %3281 = vxpose.xlu0.b32.start [1/16] %v2498, 128
        %3282 = vxpose.xlu0.b32.cont [2/16] 0.0, 128
        %3283 = vxpose.xlu0.b32.cont [3/16] 0.0, 128
        %3284 = vxpose.xlu0.b32.cont [4/16] 0.0, 128
        %3285 = vxpose.xlu0.b32.cont [5/16] 0.0, 128
        %3286 = vxpose.xlu0.b32.cont [6/16] 0.0, 128
        %3287 = vxpose.xlu0.b32.cont [7/16] 0.0, 128
        %3288 = vxpose.xlu0.b32.cont [8/16] 0.0, 128
        %3289 = vxpose.xlu0.b32.cont [9/16] 0.0, 128
        %3290 = vxpose.xlu0.b32.cont [10/16] 0.0, 128
        %3291 = vxpose.xlu0.b32.cont [11/16] 0.0, 128
        %3292 = vxpose.xlu0.b32.cont [12/16] 0.0, 128
        %3293 = vxpose.xlu0.b32.cont [13/16] 0.0, 128
        %3294 = vxpose.xlu0.b32.cont [14/16] 0.0, 128
        %3295 = vxpose.xlu0.b32.cont [15/16] 0.0, 128
        %3296 = vxpose.xlu0.b32.end [16/16] 0.0, 128
        %v3297 = vpop.trf.xlu0
        %v3298 = vpop.trf.xlu0
        %v3299 = vpop.trf.xlu0
        %v3300 = vpop.trf.xlu0
        %v3301 = vpop.trf.xlu0
        %v3302 = vpop.trf.xlu0
        %v3303 = vpop.trf.xlu0
        %v3304 = vpop.trf.xlu0
        %v3305 = vpop.trf.xlu0
        %v3306 = vpop.trf.xlu0
        %v3307 = vpop.trf.xlu0
        %v3308 = vpop.trf.xlu0
        %v3309 = vpop.trf.xlu0
        %v3310 = vpop.trf.xlu0
        %v3311 = vpop.trf.xlu0
        %v3312 = vpop.trf.xlu0
        %3313 = vxpose.xlu0.b32.start [1/16] %v2500, 128
        %3314 = vxpose.xlu0.b32.cont [2/16] 0.0, 128
        %3315 = vxpose.xlu0.b32.cont [3/16] 0.0, 128
        %3316 = vxpose.xlu0.b32.cont [4/16] 0.0, 128
        %3317 = vxpose.xlu0.b32.cont [5/16] 0.0, 128
        %3318 = vxpose.xlu0.b32.cont [6/16] 0.0, 128
        %3319 = vxpose.xlu0.b32.cont [7/16] 0.0, 128
        %3320 = vxpose.xlu0.b32.cont [8/16] 0.0, 128
        %3321 = vxpose.xlu0.b32.cont [9/16] 0.0, 128
        %3322 = vxpose.xlu0.b32.cont [10/16] 0.0, 128
        %3323 = vxpose.xlu0.b32.cont [11/16] 0.0, 128
        %3324 = vxpose.xlu0.b32.cont [12/16] 0.0, 128
        %3325 = vxpose.xlu0.b32.cont [13/16] 0.0, 128
        %3326 = vxpose.xlu0.b32.cont [14/16] 0.0, 128
        %3327 = vxpose.xlu0.b32.cont [15/16] 0.0, 128
        %3328 = vxpose.xlu0.b32.end [16/16] 0.0, 128
        %v3329 = vpop.trf.xlu0
        %v3330 = vpop.trf.xlu0
        %v3331 = vpop.trf.xlu0
        %v3332 = vpop.trf.xlu0
        %v3333 = vpop.trf.xlu0
        %v3334 = vpop.trf.xlu0
        %v3335 = vpop.trf.xlu0
        %v3336 = vpop.trf.xlu0
        %v3337 = vpop.trf.xlu0
        %v3338 = vpop.trf.xlu0
        %v3339 = vpop.trf.xlu0
        %v3340 = vpop.trf.xlu0
        %v3341 = vpop.trf.xlu0
        %v3342 = vpop.trf.xlu0
        %v3343 = vpop.trf.xlu0
        %v3344 = vpop.trf.xlu0
        %3345 = vxpose.xlu0.b32.start [1/16] %v2502, 128
        %3346 = vxpose.xlu0.b32.cont [2/16] 0.0, 128
        %3347 = vxpose.xlu0.b32.cont [3/16] 0.0, 128
        %3348 = vxpose.xlu0.b32.cont [4/16] 0.0, 128
        %3349 = vxpose.xlu0.b32.cont [5/16] 0.0, 128
        %3350 = vxpose.xlu0.b32.cont [6/16] 0.0, 128
        %3351 = vxpose.xlu0.b32.cont [7/16] 0.0, 128
        %3352 = vxpose.xlu0.b32.cont [8/16] 0.0, 128
        %3353 = vxpose.xlu0.b32.cont [9/16] 0.0, 128
        %3354 = vxpose.xlu0.b32.cont [10/16] 0.0, 128
        %3355 = vxpose.xlu0.b32.cont [11/16] 0.0, 128
        %3356 = vxpose.xlu0.b32.cont [12/16] 0.0, 128
        %3357 = vxpose.xlu0.b32.cont [13/16] 0.0, 128
        %3358 = vxpose.xlu0.b32.cont [14/16] 0.0, 128
        %3359 = vxpose.xlu0.b32.cont [15/16] 0.0, 128
        %3360 = vxpose.xlu0.b32.end [16/16] 0.0, 128
        %v3361 = vpop.trf.xlu0
        %v3362 = vpop.trf.xlu0
        %v3363 = vpop.trf.xlu0
        %v3364 = vpop.trf.xlu0
        %v3365 = vpop.trf.xlu0
        %v3366 = vpop.trf.xlu0
        %v3367 = vpop.trf.xlu0
        %v3368 = vpop.trf.xlu0
        %v3369 = vpop.trf.xlu0
        %v3370 = vpop.trf.xlu0
        %v3371 = vpop.trf.xlu0
        %v3372 = vpop.trf.xlu0
        %v3373 = vpop.trf.xlu0
        %v3374 = vpop.trf.xlu0
        %v3375 = vpop.trf.xlu0
        %v3376 = vpop.trf.xlu0
        %3377 = vxpose.xlu0.b32.start [1/16] %v2504, 128
        %3378 = vxpose.xlu0.b32.cont [2/16] 0.0, 128
        %3379 = vxpose.xlu0.b32.cont [3/16] 0.0, 128
        %3380 = vxpose.xlu0.b32.cont [4/16] 0.0, 128
        %3381 = vxpose.xlu0.b32.cont [5/16] 0.0, 128
        %3382 = vxpose.xlu0.b32.cont [6/16] 0.0, 128
        %3383 = vxpose.xlu0.b32.cont [7/16] 0.0, 128
        %3384 = vxpose.xlu0.b32.cont [8/16] 0.0, 128
        %3385 = vxpose.xlu0.b32.cont [9/16] 0.0, 128
        %3386 = vxpose.xlu0.b32.cont [10/16] 0.0, 128
        %3387 = vxpose.xlu0.b32.cont [11/16] 0.0, 128
        %3388 = vxpose.xlu0.b32.cont [12/16] 0.0, 128
        %3389 = vxpose.xlu0.b32.cont [13/16] 0.0, 128
        %3390 = vxpose.xlu0.b32.cont [14/16] 0.0, 128
        %3391 = vxpose.xlu0.b32.cont [15/16] 0.0, 128
        %3392 = vxpose.xlu0.b32.end [16/16] 0.0, 128
        %v3393 = vpop.trf.xlu0
        %v3394 = vpop.trf.xlu0
        %v3395 = vpop.trf.xlu0
        %v3396 = vpop.trf.xlu0
        %v3397 = vpop.trf.xlu0
        %v3398 = vpop.trf.xlu0
        %v3399 = vpop.trf.xlu0
        %v3400 = vpop.trf.xlu0
        %v3401 = vpop.trf.xlu0
        %v3402 = vpop.trf.xlu0
        %v3403 = vpop.trf.xlu0
        %v3404 = vpop.trf.xlu0
        %v3405 = vpop.trf.xlu0
        %v3406 = vpop.trf.xlu0
        %v3407 = vpop.trf.xlu0
        %v3408 = vpop.trf.xlu0
        %3409 = vxpose.xlu0.b32.start [1/16] %v2506, 128
        %3410 = vxpose.xlu0.b32.cont [2/16] 0.0, 128
        %3411 = vxpose.xlu0.b32.cont [3/16] 0.0, 128
        %3412 = vxpose.xlu0.b32.cont [4/16] 0.0, 128
        %3413 = vxpose.xlu0.b32.cont [5/16] 0.0, 128
        %3414 = vxpose.xlu0.b32.cont [6/16] 0.0, 128
        %3415 = vxpose.xlu0.b32.cont [7/16] 0.0, 128
        %3416 = vxpose.xlu0.b32.cont [8/16] 0.0, 128
        %3417 = vxpose.xlu0.b32.cont [9/16] 0.0, 128
        %3418 = vxpose.xlu0.b32.cont [10/16] 0.0, 128
        %3419 = vxpose.xlu0.b32.cont [11/16] 0.0, 128
        %3420 = vxpose.xlu0.b32.cont [12/16] 0.0, 128
        %3421 = vxpose.xlu0.b32.cont [13/16] 0.0, 128
        %3422 = vxpose.xlu0.b32.cont [14/16] 0.0, 128
        %3423 = vxpose.xlu0.b32.cont [15/16] 0.0, 128
        %3424 = vxpose.xlu0.b32.end [16/16] 0.0, 128
        %v3425 = vpop.trf.xlu0
        %v3426 = vpop.trf.xlu0
        %v3427 = vpop.trf.xlu0
        %v3428 = vpop.trf.xlu0
        %v3429 = vpop.trf.xlu0
        %v3430 = vpop.trf.xlu0
        %v3431 = vpop.trf.xlu0
        %v3432 = vpop.trf.xlu0
        %v3433 = vpop.trf.xlu0
        %v3434 = vpop.trf.xlu0
        %v3435 = vpop.trf.xlu0
        %v3436 = vpop.trf.xlu0
        %v3437 = vpop.trf.xlu0
        %v3438 = vpop.trf.xlu0
        %v3439 = vpop.trf.xlu0
        %v3440 = vpop.trf.xlu0
        %3441 = vxpose.xlu0.b32.start [1/16] %v2508, 128
        %3442 = vxpose.xlu0.b32.cont [2/16] 0.0, 128
        %3443 = vxpose.xlu0.b32.cont [3/16] 0.0, 128
        %3444 = vxpose.xlu0.b32.cont [4/16] 0.0, 128
        %3445 = vxpose.xlu0.b32.cont [5/16] 0.0, 128
        %3446 = vxpose.xlu0.b32.cont [6/16] 0.0, 128
        %3447 = vxpose.xlu0.b32.cont [7/16] 0.0, 128
        %3448 = vxpose.xlu0.b32.cont [8/16] 0.0, 128
        %3449 = vxpose.xlu0.b32.cont [9/16] 0.0, 128
        %3450 = vxpose.xlu0.b32.cont [10/16] 0.0, 128
        %3451 = vxpose.xlu0.b32.cont [11/16] 0.0, 128
        %3452 = vxpose.xlu0.b32.cont [12/16] 0.0, 128
        %3453 = vxpose.xlu0.b32.cont [13/16] 0.0, 128
        %3454 = vxpose.xlu0.b32.cont [14/16] 0.0, 128
        %3455 = vxpose.xlu0.b32.cont [15/16] 0.0, 128
        %3456 = vxpose.xlu0.b32.end [16/16] 0.0, 128
        %v3457 = vpop.trf.xlu0
        %v3458 = vpop.trf.xlu0
        %v3459 = vpop.trf.xlu0
        %v3460 = vpop.trf.xlu0
        %v3461 = vpop.trf.xlu0
        %v3462 = vpop.trf.xlu0
        %v3463 = vpop.trf.xlu0
        %v3464 = vpop.trf.xlu0
        %v3465 = vpop.trf.xlu0
        %v3466 = vpop.trf.xlu0
        %v3467 = vpop.trf.xlu0
        %v3468 = vpop.trf.xlu0
        %v3469 = vpop.trf.xlu0
        %v3470 = vpop.trf.xlu0
        %v3471 = vpop.trf.xlu0
        %v3472 = vpop.trf.xlu0
        %3473 = vxpose.xlu0.b32.start [1/16] %v2510, 128
        %3474 = vxpose.xlu0.b32.cont [2/16] 0.0, 128
        %3475 = vxpose.xlu0.b32.cont [3/16] 0.0, 128
        %3476 = vxpose.xlu0.b32.cont [4/16] 0.0, 128
        %3477 = vxpose.xlu0.b32.cont [5/16] 0.0, 128
        %3478 = vxpose.xlu0.b32.cont [6/16] 0.0, 128
        %3479 = vxpose.xlu0.b32.cont [7/16] 0.0, 128
        %3480 = vxpose.xlu0.b32.cont [8/16] 0.0, 128
        %3481 = vxpose.xlu0.b32.cont [9/16] 0.0, 128
        %3482 = vxpose.xlu0.b32.cont [10/16] 0.0, 128
        %3483 = vxpose.xlu0.b32.cont [11/16] 0.0, 128
        %3484 = vxpose.xlu0.b32.cont [12/16] 0.0, 128
        %3485 = vxpose.xlu0.b32.cont [13/16] 0.0, 128
        %3486 = vxpose.xlu0.b32.cont [14/16] 0.0, 128
        %3487 = vxpose.xlu0.b32.cont [15/16] 0.0, 128
        %3488 = vxpose.xlu0.b32.end [16/16] 0.0, 128
        %v3489 = vpop.trf.xlu0
        %v3490 = vpop.trf.xlu0
        %v3491 = vpop.trf.xlu0
        %v3492 = vpop.trf.xlu0
        %v3493 = vpop.trf.xlu0
        %v3494 = vpop.trf.xlu0
        %v3495 = vpop.trf.xlu0
        %v3496 = vpop.trf.xlu0
        %v3497 = vpop.trf.xlu0
        %v3498 = vpop.trf.xlu0
        %v3499 = vpop.trf.xlu0
        %v3500 = vpop.trf.xlu0
        %v3501 = vpop.trf.xlu0
        %v3502 = vpop.trf.xlu0
        %v3503 = vpop.trf.xlu0
        %v3504 = vpop.trf.xlu0
        %3505 = vxpose.xlu0.b32.start [1/16] %v2512, 128
        %3506 = vxpose.xlu0.b32.cont [2/16] 0.0, 128
        %3507 = vxpose.xlu0.b32.cont [3/16] 0.0, 128
        %3508 = vxpose.xlu0.b32.cont [4/16] 0.0, 128
        %3509 = vxpose.xlu0.b32.cont [5/16] 0.0, 128
        %3510 = vxpose.xlu0.b32.cont [6/16] 0.0, 128
        %3511 = vxpose.xlu0.b32.cont [7/16] 0.0, 128
        %3512 = vxpose.xlu0.b32.cont [8/16] 0.0, 128
        %3513 = vxpose.xlu0.b32.cont [9/16] 0.0, 128
        %3514 = vxpose.xlu0.b32.cont [10/16] 0.0, 128
        %3515 = vxpose.xlu0.b32.cont [11/16] 0.0, 128
        %3516 = vxpose.xlu0.b32.cont [12/16] 0.0, 128
        %3517 = vxpose.xlu0.b32.cont [13/16] 0.0, 128
        %3518 = vxpose.xlu0.b32.cont [14/16] 0.0, 128
        %3519 = vxpose.xlu0.b32.cont [15/16] 0.0, 128
        %3520 = vxpose.xlu0.b32.end [16/16] 0.0, 128
        %v3521 = vpop.trf.xlu0
        %v3522 = vpop.trf.xlu0
        %v3523 = vpop.trf.xlu0
        %v3524 = vpop.trf.xlu0
        %v3525 = vpop.trf.xlu0
        %v3526 = vpop.trf.xlu0
        %v3527 = vpop.trf.xlu0
        %v3528 = vpop.trf.xlu0
        %v3529 = vpop.trf.xlu0
        %v3530 = vpop.trf.xlu0
        %v3531 = vpop.trf.xlu0
        %v3532 = vpop.trf.xlu0
        %v3533 = vpop.trf.xlu0
        %v3534 = vpop.trf.xlu0
        %v3535 = vpop.trf.xlu0
        %v3536 = vpop.trf.xlu0
        %v3537 = vrot.slane %v2593, 4
        %v3538 = vsel %vm263, %v3537, %v2529
        %v3540 = vunpack.c.l.s4 1983009808
        %v3541 = vunpack.c.0.s8 %v3540
        %v3542 = vperm.slane %v3538, %v3541
        %v3543 = vrot.slane %v2625, 4
        %v3544 = vsel %vm263, %v3543, %v2561
        %v3546 = vunpack.c.l.s4 1983009808
        %v3547 = vunpack.c.0.s8 %v3546
        %v3548 = vperm.slane %v3544, %v3547
        %v3549 = vrot.slane %v2721, 4
        %v3550 = vsel %vm263, %v3549, %v2657
        %v3552 = vunpack.c.l.s4 1983009808
        %v3553 = vunpack.c.0.s8 %v3552
        %v3554 = vperm.slane %v3550, %v3553
        %v3555 = vrot.slane %v2753, 4
        %v3556 = vsel %vm263, %v3555, %v2689
        %v3558 = vunpack.c.l.s4 1983009808
        %v3559 = vunpack.c.0.s8 %v3558
        %v3560 = vperm.slane %v3556, %v3559
        %v3561 = vrot.slane %v3548, 4
        %v3562 = vsel %vm263, %v3561, %v3542
        %v3564 = vunpack.c.l.s4 1934713408
        %v3565 = vunpack.c.0.s8 %v3564
        %v3566 = vperm.slane %v3562, %v3565
        %v3567 = vrot.slane %v3560, 4
        %v3568 = vsel %vm263, %v3567, %v3554
        %v3570 = vunpack.c.l.s4 1934713408
        %v3571 = vunpack.c.0.s8 %v3570
        %v3572 = vperm.slane %v3568, %v3571
        %v3573 = vrot.slane %v3572, 4
        %v3574 = vsel %vm263, %v3573, %v3566
        %v3575 = vrot.slane %v3566, 4
        %v3576 = vsel %vm263, %v3572, %v3575
        %v3577 = vrot.slane %v2849, 4
        %v3578 = vsel %vm263, %v3577, %v2785
        %v3580 = vunpack.c.l.s4 1983009808
        %v3581 = vunpack.c.0.s8 %v3580
        %v3582 = vperm.slane %v3578, %v3581
        %v3583 = vrot.slane %v2881, 4
        %v3584 = vsel %vm263, %v3583, %v2817
        %v3586 = vunpack.c.l.s4 1983009808
        %v3587 = vunpack.c.0.s8 %v3586
        %v3588 = vperm.slane %v3584, %v3587
        %v3589 = vrot.slane %v2977, 4
        %v3590 = vsel %vm263, %v3589, %v2913
        %v3592 = vunpack.c.l.s4 1983009808
        %v3593 = vunpack.c.0.s8 %v3592
        %v3594 = vperm.slane %v3590, %v3593
        %v3595 = vrot.slane %v3009, 4
        %v3596 = vsel %vm263, %v3595, %v2945
        %v3598 = vunpack.c.l.s4 1983009808
        %v3599 = vunpack.c.0.s8 %v3598
        %v3600 = vperm.slane %v3596, %v3599
        %v3601 = vrot.slane %v3588, 4
        %v3602 = vsel %vm263, %v3601, %v3582
        %v3604 = vunpack.c.l.s4 1934713408
        %v3605 = vunpack.c.0.s8 %v3604
        %v3606 = vperm.slane %v3602, %v3605
        %v3607 = vrot.slane %v3600, 4
        %v3608 = vsel %vm263, %v3607, %v3594
        %v3610 = vunpack.c.l.s4 1934713408
        %v3611 = vunpack.c.0.s8 %v3610
        %v3612 = vperm.slane %v3608, %v3611
        %v3613 = vrot.slane %v3612, 4
        %v3614 = vsel %vm263, %v3613, %v3606
        %v3615 = vrot.slane %v3606, 4
        %v3616 = vsel %vm263, %v3612, %v3615
        %v3617 = vrot.slane %v3105, 4
        %v3618 = vsel %vm263, %v3617, %v3041
        %v3620 = vunpack.c.l.s4 1983009808
        %v3621 = vunpack.c.0.s8 %v3620
        %v3622 = vperm.slane %v3618, %v3621
        %v3623 = vrot.slane %v3137, 4
        %v3624 = vsel %vm263, %v3623, %v3073
        %v3626 = vunpack.c.l.s4 1983009808
        %v3627 = vunpack.c.0.s8 %v3626
        %v3628 = vperm.slane %v3624, %v3627
        %v3629 = vrot.slane %v3233, 4
        %v3630 = vsel %vm263, %v3629, %v3169
        %v3632 = vunpack.c.l.s4 1983009808
        %v3633 = vunpack.c.0.s8 %v3632
        %v3634 = vperm.slane %v3630, %v3633
        %v3635 = vrot.slane %v3265, 4
        %v3636 = vsel %vm263, %v3635, %v3201
        %v3638 = vunpack.c.l.s4 1983009808
        %v3639 = vunpack.c.0.s8 %v3638
        %v3640 = vperm.slane %v3636, %v3639
        %v3641 = vrot.slane %v3628, 4
        %v3642 = vsel %vm263, %v3641, %v3622
        %v3644 = vunpack.c.l.s4 1934713408
        %v3645 = vunpack.c.0.s8 %v3644
        %v3646 = vperm.slane %v3642, %v3645
        %v3647 = vrot.slane %v3640, 4
        %v3648 = vsel %vm263, %v3647, %v3634
        %v3650 = vunpack.c.l.s4 1934713408
        %v3651 = vunpack.c.0.s8 %v3650
        %v3652 = vperm.slane %v3648, %v3651
        %v3653 = vrot.slane %v3652, 4
        %v3654 = vsel %vm263, %v3653, %v3646
        %v3655 = vrot.slane %v3646, 4
        %v3656 = vsel %vm263, %v3652, %v3655
        %v3657 = vrot.slane %v3361, 4
        %v3658 = vsel %vm263, %v3657, %v3297
        %v3660 = vunpack.c.l.s4 1983009808
        %v3661 = vunpack.c.0.s8 %v3660
        %v3662 = vperm.slane %v3658, %v3661
        %v3663 = vrot.slane %v3393, 4
        %v3664 = vsel %vm263, %v3663, %v3329
        %v3666 = vunpack.c.l.s4 1983009808
        %v3667 = vunpack.c.0.s8 %v3666
        %v3668 = vperm.slane %v3664, %v3667
        %v3669 = vrot.slane %v3489, 4
        %v3670 = vsel %vm263, %v3669, %v3425
        %v3672 = vunpack.c.l.s4 1983009808
        %v3673 = vunpack.c.0.s8 %v3672
        %v3674 = vperm.slane %v3670, %v3673
        %v3675 = vrot.slane %v3521, 4
        %v3676 = vsel %vm263, %v3675, %v3457
        %v3678 = vunpack.c.l.s4 1983009808
        %v3679 = vunpack.c.0.s8 %v3678
        %v3680 = vperm.slane %v3676, %v3679
        %v3681 = vrot.slane %v3668, 4
        %v3682 = vsel %vm263, %v3681, %v3662
        %v3684 = vunpack.c.l.s4 1934713408
        %v3685 = vunpack.c.0.s8 %v3684
        %v3686 = vperm.slane %v3682, %v3685
        %v3687 = vrot.slane %v3680, 4
        %v3688 = vsel %vm263, %v3687, %v3674
        %v3690 = vunpack.c.l.s4 1934713408
        %v3691 = vunpack.c.0.s8 %v3690
        %v3692 = vperm.slane %v3688, %v3691
        %v3693 = vrot.slane %v3692, 4
        %v3694 = vsel %vm263, %v3693, %v3686
        %v3695 = vrot.slane %v3686, 4
        %v3696 = vsel %vm263, %v3692, %v3695
        %s3697 = scalar_lea.vmem %s166, 64 [#allocation5]
        %3698 = vst.msk [vmem:[%s3697] sm:$0xff] %vm1895, %v3574
        %3699 = vst.msk [vmem:[%s3697 + $0x8] sm:$0xff] %vm1895, %v3614
        %3700 = vst.msk [vmem:[%s3697 + $0x10] sm:$0xff] %vm1895, %v3654
        %3701 = vst.msk [vmem:[%s3697 + $0x18] sm:$0xff] %vm1895, %v3694
        %s3702 = scalar_lea.vmem %s166, 96 [#allocation5]
        %3703 = vst.msk [vmem:[%s3702] sm:$0xff] %vm1895, %v3576
        %3704 = vst.msk [vmem:[%s3702 + $0x8] sm:$0xff] %vm1895, %v3616
        %3705 = vst.msk [vmem:[%s3702 + $0x10] sm:$0xff] %vm1895, %v3656
        %3706 = vst.msk [vmem:[%s3702 + $0x18] sm:$0xff] %vm1895, %v3696
        %s3707 = sand.u32 %s79, 1
        %s3708 = scalar_lea.sflag [#allocation4], %s3707
        %s3709 = sand.u32 %s79, 1
        %s3710 = smul.addr %s3709, 128
        %s3711 = scalar_lea.vmem [#allocation5], %s3710
        // Predicated region
        $region29: #{tpu_custom_call.1} parent=23 // pred_check
          %p3712 = pneg %p89
        $region30: #{tpu_custom_call.1} parent=23 // pred_check_branch
          %3714 = sbr.rel (%p3712) target = $region32
        $region31: #{tpu_custom_call.1} parent=23 // pred_region
          %s3715 = smul.u32 4, %s23
          %s3716 = smul.u32 4, %s24
          %3718 = vsyncadd %s3708, 0
          %s3719 = sadd.s32 %s25, %s3716
          %s3720 = smul.addr %s3715, 4
          %s3721 = sadd.s32 %s3719, %s3720
          %s3722 = smul.addr %s3721, 8
          %s3723 = scalar_lea.hbm %s1, %s3722
          %s3724 = sshll.u32 %s3711, 4
          %s3725 = int_to_ptr.vmem [resolvable:$true] %s3724
          %s3726 = sshll.u32 %s3723, 4
          %s3727 = int_to_ptr.hbm [resolvable:$true] %s3726
          %3732 = dma.vmem_to_hbm [thread:$0]  %s3725, 2048, %s3727, %s3708, 128, 128, 8
        $region32: #{tpu_custom_call.1} parent=23 // pred_fallthru
          _
      $region24: #{tpu_custom_call.1} parent=5 // pred_fallthru
        _
      %p3733 = scmp.le.s32.totalorder 2, %s13
      // Predicated region
      $region33: #{tpu_custom_call.1} parent=5 // pred_check
        %p3734 = pneg %p3733
      $region34: #{tpu_custom_call.1} parent=5 // pred_check_branch
        %3736 = sbr.rel (%p3734) target = $region36
      $region35: #{tpu_custom_call.1} parent=5 // pred_region
        %s3737 = ssub.s32 %s13, 2
        // Predicated region
        $region37: #{tpu_custom_call.1} parent=35 // pred_check
          %p3738 = pneg %p95
        $region38: #{tpu_custom_call.1} parent=35 // pred_check_branch
          %3740 = sbr.rel (%p3738) target = $region40
        $region39: #{tpu_custom_call.1} parent=35 // pred_region
          %s3741 = sand.u32 %s80, 1
          %s3742 = scalar_lea.sflag [#allocation4], %s3741
          %s3743 = sand.u32 %s80, 1
          %s3744 = smul.addr %s3743, 128
          %s3745 = scalar_lea.vmem [#allocation5], %s3744
          %3747 = dma.done %s3742, 2048
        $region40: #{tpu_custom_call.1} parent=35 // pred_fallthru
          _
      $region36: #{tpu_custom_call.1} parent=5 // pred_fallthru
        _
    $region6: #{tpu_custom_call.1} parent=1 // loop_footer
      %s17 = sadd.s32 1, %s13
    $region7: #{tpu_custom_call.1} parent=1 // loop_footer_branch
      %12 = sbr.rel target = $region3
    $region8: #{tpu_custom_call.1} parent=1 // loop_exit
      _
    %3748 = vsyncpa [#allocation3], 1
    %s3749 = scalar_lea.sflag [#allocation3], 1
    %3750 = vsyncpa %s3749, 1
    %3751 = vsyncpa [#allocation4], 1
    %s3752 = scalar_lea.sflag [#allocation4], 1
    %3753 = vsyncpa %s3752, 1

</llo_original>
